<compile_context>
chip_gen: v6e
topology: v6e:2x2x1
jax: 0.10.0
libtpu: 0.0.40
codegen_flags: <defaults>
</compile_context>

<pallas_src>
import math
from functools import partial

import jax
import jax.numpy as jnp
from jax import lax
from jax.experimental import pallas as pl
from jax.experimental.pallas import tpu as pltpu

# ---------------- configuration (mirrors cfg / aaf_cfg fields) --------------
BACKBONE_OUT_CHANNELS = 32      # cfg.MODEL.RESNETS.BACKBONE_OUT_CHANNELS
NUM_HEADS = 4                   # aaf_cfg.ALIGNMENT.NUM_HEADS
K_SHOT = 1                      # cfg.FEWSHOT.K_SHOT
AVERAGE_SUPPORT_FIRST = True    # aaf_cfg.ALIGNMENT.AVERAGE_SUPPORT_FIRST
HEAD_DIM = BACKBONE_OUT_CHANNELS // NUM_HEADS

LANE = 128


def _round_up(x, m):
    return (x + m - 1) // m * m


# ------------------------------ Pallas kernel -------------------------------
def _xqsa_attn_kernel(q_ref, s_ref, wq_ref, wkv_ref, wot_ref, o_ref, *,
                      num_supports, ls, ls_pad, num_heads):
    """One grid step = `bb` query batch elements attending to ALL supports.

    q_ref   : (bb, Lq_pad, C)     bf16 query tokens (zero-padded to 128 rows)
    s_ref   : (N*Ls_pad, C)       bf16 support tokens (each support padded to 128)
    wq_ref  : (C, C)              bf16 Wq
    wkv_ref : (C, 2C)             bf16 [Wk | Wv] packed along the last dim
    wot_ref : (C, C)              bf16 Wo^T  (so the output projection emits (C, Lq))
    o_ref   : (bb, N, C, Lq_pad)  aligned query features, channel-major
    """
    bb, lq_pad, C = q_ref.shape
    Dh = C // num_heads
    scale = 1.0 / math.sqrt(Dh)

    s = s_ref[...]                                   # (Nk, C) bf16
    wq = wq_ref[...]                                 # (C, C)  bf16
    wkv = wkv_ref[...]                               # (C, 2C) bf16
    wot = wot_ref[...]                               # (C, C)  bf16

    # Key-padding bias for one 128-wide support block: 0 on real keys,
    # -1e30 on padded keys (exp underflows to exactly 0).
    kidx = lax.broadcasted_iota(jnp.int32, (1, ls_pad), 1)
    kbias = jnp.where(kidx < ls, 0.0, -1e30).astype(jnp.float32)

    # ---- support-side work (independent of the query batch) ----------------
    # K|V for all supports in one fused MXU pass (2C output lanes).
    kv = jnp.dot(s, wkv, preferred_element_type=jnp.float32).astype(jnp.bfloat16)

    # Fold the output projection into V per head:
    #   vwot_h[c, k] = sum_d Wo[h*Dh + d, c] * V_h[k, d]
    # (both-last-dims contraction -> no explicit transpose anywhere; the result
    #  is already channel-major and lane-dense over the keys of all supports.)
    vwot = []
    for h in range(num_heads):
        v_h = kv[:, C + h * Dh: C + (h + 1) * Dh]                    # (Nk, Dh)
        wot_h = wot[:, h * Dh:(h + 1) * Dh]                          # (C, Dh)
        vwot.append(jnp.einsum('cd,kd->ck', wot_h, v_h,
                               preferred_element_type=jnp.float32
                               ).astype(jnp.bfloat16))               # (C, Nk)

    # ---- per query batch element --------------------------------------------
    for b in range(bb):                              # bb is 1 or B (tiny, static)
        q = q_ref[b]                                                  # (Lq_pad, C)
        qf = (jnp.dot(q, wq, preferred_element_type=jnp.float32)
              * scale).astype(jnp.bfloat16)                           # (Lq_pad, C)

        outs = [jnp.zeros((C, lq_pad), jnp.float32)
                for _ in range(num_supports)]
        for h in range(num_heads):
            q_h = qf[:, h * Dh:(h + 1) * Dh]                          # (Lq_pad, Dh)
            k_h = kv[:, h * Dh:(h + 1) * Dh]                          # (Nk, Dh)
            # Fused score matmul over ALL supports (N*128 output lanes).
            scores = jnp.einsum('qd,kd->qk', q_h, k_h,
                                preferred_element_type=jnp.float32)   # (Lq_pad, Nk)
            for n in range(num_supports):
                # 128-aligned lane slice of the fused scores.
                sn = scores[:, n * ls_pad:(n + 1) * ls_pad] + kbias
                m = jnp.max(sn, axis=-1, keepdims=True)
                p = jnp.exp(sn - m)
                # NOTE: approx reciprocal (EUP slot) — tiny relative error vs
                # exact division; fine for inference.
                inv = pl.reciprocal(jnp.sum(p, axis=-1, keepdims=True),
                                    approx=True)
                p = (p * inv).astype(jnp.bfloat16)                    # (Lq_pad, 128)
                # Attention + output projection in one matmul, emitted
                # channel-major (C, Lq_pad) -> no transpose.
                outs[n] = outs[n] + jnp.einsum(
                    'ck,qk->cq', vwot[h][:, n * ls_pad:(n + 1) * ls_pad], p,
                    preferred_element_type=jnp.float32)

        for n in range(num_supports):
            o_ref[b, n] = outs[n].astype(o_ref.dtype)                 # (C, Lq_pad)


def qsga_block_pallas(q_feat, s_feat, wq, wk, wv, wo, *, num_heads,
                      batch_block=1):
    """q_feat: (B, Lq, C), s_feat: (N, Ls, C) -> aligned (B, N, C, Lq).

    batch_block=1 -> grid=(B,) "parallel" (good for 2-TC v7x).
    batch_block=B -> single grid step, batch looped in-kernel (good for
                     single-TC v5e/v6e: no per-step pipeline overhead and the
                     support-side projections are computed once).
    """
    B, Lq, C = q_feat.shape
    N, Ls, _ = s_feat.shape
    assert C % num_heads == 0
    assert B % batch_block == 0

    lq_pad = _round_up(Lq, LANE)
    ls_pad = _round_up(Ls, LANE)

    # Pad tokens to 128-aligned sequence lengths and cast MXU operands to bf16.
    q_p = jnp.pad(q_feat, ((0, 0), (0, lq_pad - Lq), (0, 0))
                  ).astype(jnp.bfloat16)                              # (B, Lq_pad, C)
    s_p = jnp.pad(s_feat, ((0, 0), (0, ls_pad - Ls), (0, 0))
                  ).astype(jnp.bfloat16).reshape(N * ls_pad, C)       # (N*Ls_pad, C)

    wq_c = wq.astype(jnp.bfloat16)                                    # (C, C)
    wkv_c = jnp.concatenate([wk, wv], axis=-1).astype(jnp.bfloat16)   # (C, 2C)
    wot_c = wo.T.astype(jnp.bfloat16)                                 # (C, C) = Wo^T

    bb = batch_block
    kernel = partial(_xqsa_attn_kernel, num_supports=N, ls=Ls,
                     ls_pad=ls_pad, num_heads=num_heads)

    aligned = pl.pallas_call(
        kernel,
        out_shape=jax.ShapeDtypeStruct((B, N, C, lq_pad), q_feat.dtype),
        grid=(B // bb,),
        in_specs=[
            pl.BlockSpec((bb, lq_pad, C), lambda b: (b, 0, 0)),       # query tokens
            pl.BlockSpec((N * ls_pad, C), lambda b: (0, 0)),          # support tokens
            pl.BlockSpec((C, C), lambda b: (0, 0)),                   # Wq
            pl.BlockSpec((C, 2 * C), lambda b: (0, 0)),               # [Wk|Wv]
            pl.BlockSpec((C, C), lambda b: (0, 0)),                   # Wo^T
        ],
        out_specs=pl.BlockSpec((bb, N, C, lq_pad), lambda b: (b, 0, 0, 0)),
        compiler_params=pltpu.CompilerParams(
            dimension_semantics=("parallel",)),
    )(q_p, s_p, wq_c, wkv_c, wot_c)

    return aligned[:, :, :, :Lq]                                      # drop Lq padding


# ------------------------------ XQSA forward --------------------------------
def reshape_input_features(query_feats, support_feats):
    """Exactly mirrors XQSA.reshape_input_features (NCHW -> (batch, seq, C))."""
    q_shapes = [f.shape[-2:] for f in query_feats]
    s_shapes = [f.shape[-2:] for f in support_feats]
    q_feat = jnp.concatenate(
        [f.reshape(f.shape[0], f.shape[1], -1).transpose(0, 2, 1)
         for f in query_feats], axis=1)
    s_feat = jnp.concatenate(
        [f.reshape(f.shape[0], f.shape[1], -1).transpose(0, 2, 1)
         for f in support_feats], axis=1)
    return q_feat, q_shapes, s_feat, s_shapes


def xqsa_forward(query_feats, support_feats, params, *, batch_block=1):
    """Returns (query_p1, support_p1):
       query_p1   : list of (B, N_support, C, h, w) per query FPN level
       support_p1 : list of (N_support, B, C, h, w) per support level
    """
    q_feat, q_shapes, s_feat, _ = reshape_input_features(query_feats, support_feats)
    B, Lq, C = q_feat.shape
    N_support = s_feat.shape[0]

    # Kernel returns channel-major (B, N, C, Lq): no XLA transpose afterwards.
    aligned = qsga_block_pallas(q_feat, s_feat,
                                params["wq"], params["wk"],
                                params["wv"], params["wo"],
                                num_heads=NUM_HEADS,
                                batch_block=batch_block)              # (B, N, C, Lq)

    out_features_list = []
    offset = 0
    for h, w in q_shapes:
        chunk = aligned[:, :, :, offset:offset + h * w]
        if AVERAGE_SUPPORT_FIRST:
            out_features_list.append(chunk.reshape(B, N_support, C, h, w))
        else:
            # TODO(synk): verify K_SHOT averaging order against the reference
            #             (before vs. after alignment); this branch is untested.
            out_features_list.append(
                chunk.reshape(B, N_support // K_SHOT, K_SHOT, C, h, w).mean(axis=2))
        offset += h * w

    # Broadcast (no materialized repeat) of supports across the query batch.
    support_features_aligned = [
        jnp.broadcast_to(s[:, None], (s.shape[0], B) + s.shape[1:])
        for s in support_feats]                                       # (N, B, C, h, w)
    return out_features_list, support_features_aligned


# ---------------------- pure-JAX reference (f32) -----------------------------
def _attention_reference(q_feat, s_feat, wq, wk, wv, wo, num_heads):
    B, Lq, C = q_feat.shape
    N, Ls, _ = s_feat.shape
    Dh = C // num_heads
    Q = (q_feat @ wq).reshape(B, Lq, num_heads, Dh)
    K = (s_feat @ wk).reshape(N, Ls, num_heads, Dh)
    V = (s_feat @ wv).reshape(N, Ls, num_heads, Dh)
    scores = jnp.einsum('blhd,nkhd->bnhlk', Q, K) / math.sqrt(Dh)
    p = jax.nn.softmax(scores, axis=-1)                 # softmax per support
    ctx = jnp.einsum('bnhlk,nkhd->bnlhd', p, V).reshape(B, N, Lq, C)
    out = jnp.einsum('bnlc,ce->bnle', ctx, wo)          # (B, N, Lq, C)
    return out.transpose(0, 1, 3, 2)                    # (B, N, C, Lq)


# --------------------------------- main --------------------------------------
if __name__ == "__main__":
    key = jax.random.PRNGKey(0)
    kq1, kq2, ks1, ks2, kwq, kwk, kwv, kwo = jax.random.split(key, 8)

    B = 2               # query batch
    N_SUPPORT = 3       # number of support images (N_ways, K_SHOT=1)
    C = BACKBONE_OUT_CHANNELS

    # Two FPN levels, NCHW like PyTorch.
    query_feats = [
        jax.random.normal(kq1, (B, C, 8, 8), dtype=jnp.float32),
        jax.random.normal(kq2, (B, C, 4, 4), dtype=jnp.float32),
    ]
    support_feats = [
        jax.random.normal(ks1, (N_SUPPORT, C, 8, 8), dtype=jnp.float32),
        jax.random.normal(ks2, (N_SUPPORT, C, 4, 4), dtype=jnp.float32),
    ]

    # Deterministic parameter init for the QuerySupportBlock projections.
    std = 1.0 / math.sqrt(C)
    params = {
        "wq": jax.random.normal(kwq, (C, C), dtype=jnp.float32) * std,
        "wk": jax.random.normal(kwk, (C, C), dtype=jnp.float32) * std,
        "wv": jax.random.normal(kwv, (C, C), dtype=jnp.float32) * std,
        "wo": jax.random.normal(kwo, (C, C), dtype=jnp.float32) * std,
    }

    # Full forward (grid over batch: v7x-friendly default).
    query_p1, support_p1 = xqsa_forward(query_feats, support_feats, params)
    jax.block_until_ready(query_p1)
    jax.block_until_ready(support_p1)

    # Shape sanity implied by the PyTorch forward contract.
    assert query_p1[0].shape == (B, N_SUPPORT, C, 8, 8)
    assert query_p1[1].shape == (B, N_SUPPORT, C, 4, 4)
    assert support_p1[0].shape == (N_SUPPORT, B, C, 8, 8)
    assert support_p1[1].shape == (N_SUPPORT, B, C, 4, 4)

    # Numerical check vs. a pure-JAX f32 reference (tolerance covers bf16 MXU
    # operands + approx reciprocal) and cross-check of the single-grid-step
    # (batch-in-kernel) path used on single-TC chips.
    q_feat, _, s_feat, _ = reshape_input_features(query_feats, support_feats)
    out_grid = qsga_block_pallas(q_feat, s_feat, params["wq"], params["wk"],
                                 params["wv"], params["wo"],
                                 num_heads=NUM_HEADS, batch_block=1)
    out_fused = qsga_block_pallas(q_feat, s_feat, params["wq"], params["wk"],
                                  params["wv"], params["wo"],
                                  num_heads=NUM_HEADS, batch_block=B)
    ref = _attention_reference(q_feat, s_feat, params["wq"], params["wk"],
                               params["wv"], params["wo"], NUM_HEADS)
    jax.block_until_ready((out_grid, out_fused, ref))

    assert jnp.allclose(out_grid, out_fused, atol=1e-3, rtol=1e-3), \
        "batch_block paths disagree"
    assert jnp.allclose(out_grid, ref, atol=1e-1, rtol=1e-1), \
        "Pallas kernel disagrees with JAX reference"

    print("KERNEL_OK")
</pallas_src>

<mosaic_0001>
module attributes {stable_mosaic.version = 11 : i64} {
  func.func @_xqsa_attn_kernel(%arg0: i32, %arg1: memref<1x128x32xbf16, #tpu.memory_space<vmem>>, %arg2: memref<384x32xbf16, #tpu.memory_space<vmem>>, %arg3: memref<32x32xbf16, #tpu.memory_space<vmem>>, %arg4: memref<32x64xbf16, #tpu.memory_space<vmem>>, %arg5: memref<32x32xbf16, #tpu.memory_space<vmem>>, %arg6: memref<1x3x32x128xf32, #tpu.memory_space<vmem>>) attributes {dimension_semantics = [#tpu.dimension_semantics<parallel>], iteration_bounds = array<i64: 2>, scalar_prefetch = 0 : i64, scratch_operands = 0 : i64, tpu.core_type = #tpu.core_type<tc>, window_params = [{transform_indices = @transform_0, window_bounds = array<i64: 1, 128, 32>}, {pipeline_mode = #tpu.pipeline_mode<synchronous>, transform_indices = @transform_1, window_bounds = array<i64: 384, 32>}, {pipeline_mode = #tpu.pipeline_mode<synchronous>, transform_indices = @transform_2, window_bounds = array<i64: 32, 32>}, {pipeline_mode = #tpu.pipeline_mode<synchronous>, transform_indices = @transform_3, window_bounds = array<i64: 32, 64>}, {pipeline_mode = #tpu.pipeline_mode<synchronous>, transform_indices = @transform_4, window_bounds = array<i64: 32, 32>}, {transform_indices = @transform_5, window_bounds = array<i64: 1, 3, 32, 128>}]} {
    %c0 = arith.constant 0 : index
    %c0_0 = arith.constant 0 : index
    %0 = vector.load %arg2[%c0, %c0_0] : memref<384x32xbf16, #tpu.memory_space<vmem>>, vector<384x32xbf16>
    %c0_1 = arith.constant 0 : index
    %c0_2 = arith.constant 0 : index
    %1 = vector.load %arg3[%c0_1, %c0_2] : memref<32x32xbf16, #tpu.memory_space<vmem>>, vector<32x32xbf16>
    %c0_3 = arith.constant 0 : index
    %c0_4 = arith.constant 0 : index
    %2 = vector.load %arg4[%c0_3, %c0_4] : memref<32x64xbf16, #tpu.memory_space<vmem>>, vector<32x64xbf16>
    %c0_5 = arith.constant 0 : index
    %c0_6 = arith.constant 0 : index
    %3 = vector.load %arg5[%c0_5, %c0_6] : memref<32x32xbf16, #tpu.memory_space<vmem>>, vector<32x32xbf16>
    %4 = tpu.iota {dimensions = array<i32: 1>} : vector<1x128xi32>
    %c80_i32 = arith.constant 80 : i32
    %5 = vector.broadcast %c80_i32 : i32 to vector<1x128xi32>
    %6 = arith.cmpi slt, %4, %5 : vector<1x128xi32>
    %cst = arith.constant 0.000000e+00 : f32
    %cst_7 = arith.constant -1.000000e+30 : f32
    %7 = vector.broadcast %cst : f32 to vector<1x128xf32>
    %8 = vector.broadcast %cst_7 : f32 to vector<1x128xf32>
    %9 = arith.select %6, %7, %8 : vector<1x128xi1>, vector<1x128xf32>
    %cst_8 = arith.constant dense<0.000000e+00> : vector<384x64xf32>
    %10 = tpu.matmul %0, %2, %cst_8 {dimension_numbers = #tpu.dot_dimension_numbers<[1], [0], [0], [1], [0, 0, 1, 1], [], []>} : vector<384x32xbf16>, vector<32x64xbf16>, vector<384x64xf32> -> vector<384x64xf32>
    %11 = arith.truncf %10 : vector<384x64xf32> to vector<384x64xbf16>
    %12 = vector.extract_strided_slice %11 {offsets = [0, 32], sizes = [384, 8], strides = [1, 1]} : vector<384x64xbf16> to vector<384x8xbf16>
    %13 = vector.extract_strided_slice %3 {offsets = [0, 0], sizes = [32, 8], strides = [1, 1]} : vector<32x32xbf16> to vector<32x8xbf16>
    "tpu.trace_start"() <{level = 10 : i32, message = "cd,kd->ck"}> : () -> ()
    %cst_9 = arith.constant dense<0.000000e+00> : vector<32x384xf32>
    %14 = tpu.matmul %13, %12, %cst_9 {dimension_numbers = #tpu.dot_dimension_numbers<[1], [1], [0], [0], [0, 0, 1, 0], [], []>} : vector<32x8xbf16>, vector<384x8xbf16>, vector<32x384xf32> -> vector<32x384xf32>
    "tpu.trace_stop"() : () -> ()
    %15 = arith.truncf %14 : vector<32x384xf32> to vector<32x384xbf16>
    %16 = vector.extract_strided_slice %11 {offsets = [0, 40], sizes = [384, 8], strides = [1, 1]} : vector<384x64xbf16> to vector<384x8xbf16>
    %17 = vector.extract_strided_slice %3 {offsets = [0, 8], sizes = [32, 8], strides = [1, 1]} : vector<32x32xbf16> to vector<32x8xbf16>
    "tpu.trace_start"() <{level = 10 : i32, message = "cd,kd->ck"}> : () -> ()
    %cst_10 = arith.constant dense<0.000000e+00> : vector<32x384xf32>
    %18 = tpu.matmul %17, %16, %cst_10 {dimension_numbers = #tpu.dot_dimension_numbers<[1], [1], [0], [0], [0, 0, 1, 0], [], []>} : vector<32x8xbf16>, vector<384x8xbf16>, vector<32x384xf32> -> vector<32x384xf32>
    "tpu.trace_stop"() : () -> ()
    %19 = arith.truncf %18 : vector<32x384xf32> to vector<32x384xbf16>
    %20 = vector.extract_strided_slice %11 {offsets = [0, 48], sizes = [384, 8], strides = [1, 1]} : vector<384x64xbf16> to vector<384x8xbf16>
    %21 = vector.extract_strided_slice %3 {offsets = [0, 16], sizes = [32, 8], strides = [1, 1]} : vector<32x32xbf16> to vector<32x8xbf16>
    "tpu.trace_start"() <{level = 10 : i32, message = "cd,kd->ck"}> : () -> ()
    %cst_11 = arith.constant dense<0.000000e+00> : vector<32x384xf32>
    %22 = tpu.matmul %21, %20, %cst_11 {dimension_numbers = #tpu.dot_dimension_numbers<[1], [1], [0], [0], [0, 0, 1, 0], [], []>} : vector<32x8xbf16>, vector<384x8xbf16>, vector<32x384xf32> -> vector<32x384xf32>
    "tpu.trace_stop"() : () -> ()
    %23 = arith.truncf %22 : vector<32x384xf32> to vector<32x384xbf16>
    %24 = vector.extract_strided_slice %11 {offsets = [0, 56], sizes = [384, 8], strides = [1, 1]} : vector<384x64xbf16> to vector<384x8xbf16>
    %25 = vector.extract_strided_slice %3 {offsets = [0, 24], sizes = [32, 8], strides = [1, 1]} : vector<32x32xbf16> to vector<32x8xbf16>
    "tpu.trace_start"() <{level = 10 : i32, message = "cd,kd->ck"}> : () -> ()
    %cst_12 = arith.constant dense<0.000000e+00> : vector<32x384xf32>
    %26 = tpu.matmul %25, %24, %cst_12 {dimension_numbers = #tpu.dot_dimension_numbers<[1], [1], [0], [0], [0, 0, 1, 0], [], []>} : vector<32x8xbf16>, vector<384x8xbf16>, vector<32x384xf32> -> vector<32x384xf32>
    "tpu.trace_stop"() : () -> ()
    %27 = arith.truncf %26 : vector<32x384xf32> to vector<32x384xbf16>
    %c0_13 = arith.constant 0 : index
    %c0_14 = arith.constant 0 : index
    %c0_15 = arith.constant 0 : index
    %28 = vector.load %arg1[%c0_13, %c0_14, %c0_15] : memref<1x128x32xbf16, #tpu.memory_space<vmem>>, vector<1x128x32xbf16>
    %29 = vector.shape_cast %28 : vector<1x128x32xbf16> to vector<128x32xbf16>
    %cst_16 = arith.constant dense<0.000000e+00> : vector<128x32xf32>
    %30 = tpu.matmul %29, %1, %cst_16 {dimension_numbers = #tpu.dot_dimension_numbers<[1], [0], [0], [1], [0, 0, 1, 1], [], []>} : vector<128x32xbf16>, vector<32x32xbf16>, vector<128x32xf32> -> vector<128x32xf32>
    %cst_17 = arith.constant 0.353553385 : f32
    %31 = vector.broadcast %cst_17 : f32 to vector<128x32xf32>
    %32 = arith.mulf %30, %31 : vector<128x32xf32>
    %33 = arith.truncf %32 : vector<128x32xf32> to vector<128x32xbf16>
    %cst_18 = arith.constant 0.000000e+00 : f32
    %34 = vector.broadcast %cst_18 : f32 to vector<32x128xf32>
    %cst_19 = arith.constant 0.000000e+00 : f32
    %35 = vector.broadcast %cst_19 : f32 to vector<32x128xf32>
    %cst_20 = arith.constant 0.000000e+00 : f32
    %36 = vector.broadcast %cst_20 : f32 to vector<32x128xf32>
    %37 = vector.extract_strided_slice %33 {offsets = [0, 0], sizes = [128, 8], strides = [1, 1]} : vector<128x32xbf16> to vector<128x8xbf16>
    %38 = vector.extract_strided_slice %11 {offsets = [0, 0], sizes = [384, 8], strides = [1, 1]} : vector<384x64xbf16> to vector<384x8xbf16>
    "tpu.trace_start"() <{level = 10 : i32, message = "qd,kd->qk"}> : () -> ()
    %cst_21 = arith.constant dense<0.000000e+00> : vector<128x384xf32>
    %39 = tpu.matmul %37, %38, %cst_21 {dimension_numbers = #tpu.dot_dimension_numbers<[1], [1], [0], [0], [0, 0, 1, 0], [], []>} : vector<128x8xbf16>, vector<384x8xbf16>, vector<128x384xf32> -> vector<128x384xf32>
    "tpu.trace_stop"() : () -> ()
    %40 = vector.extract_strided_slice %39 {offsets = [0, 0], sizes = [128, 128], strides = [1, 1]} : vector<128x384xf32> to vector<128x128xf32>
    %41 = vector.broadcast %9 : vector<1x128xf32> to vector<128x128xf32>
    %42 = arith.addf %40, %41 : vector<128x128xf32>
    %cst_22 = arith.constant dense<0xFF800000> : vector<128xf32>
    %43 = vector.multi_reduction <maximumf>, %42, %cst_22 [1] : vector<128x128xf32> to vector<128xf32>
    %44 = vector.shape_cast %43 : vector<128xf32> to vector<128x1xf32>
    %45 = vector.broadcast %44 : vector<128x1xf32> to vector<128x128xf32>
    %46 = arith.subf %42, %45 : vector<128x128xf32>
    %47 = math.exp %46 : vector<128x128xf32>
    %cst_23 = arith.constant dense<0.000000e+00> : vector<128xf32>
    %48 = vector.multi_reduction <add>, %47, %cst_23 [1] : vector<128x128xf32> to vector<128xf32>
    %49 = vector.shape_cast %48 : vector<128xf32> to vector<128x1xf32>
    %50 = tpu.reciprocal %49 {approx = true} : vector<128x1xf32> -> vector<128x1xf32>
    %51 = vector.broadcast %50 : vector<128x1xf32> to vector<128x128xf32>
    %52 = arith.mulf %47, %51 : vector<128x128xf32>
    %53 = arith.truncf %52 : vector<128x128xf32> to vector<128x128xbf16>
    %54 = vector.extract_strided_slice %15 {offsets = [0, 0], sizes = [32, 128], strides = [1, 1]} : vector<32x384xbf16> to vector<32x128xbf16>
    "tpu.trace_start"() <{level = 10 : i32, message = "ck,qk->cq"}> : () -> ()
    %cst_24 = arith.constant dense<0.000000e+00> : vector<32x128xf32>
    %55 = tpu.matmul %54, %53, %cst_24 {dimension_numbers = #tpu.dot_dimension_numbers<[1], [1], [0], [0], [0, 0, 1, 0], [], []>} : vector<32x128xbf16>, vector<128x128xbf16>, vector<32x128xf32> -> vector<32x128xf32>
    "tpu.trace_stop"() : () -> ()
    %56 = arith.addf %34, %55 : vector<32x128xf32>
    %57 = vector.extract_strided_slice %39 {offsets = [0, 128], sizes = [128, 128], strides = [1, 1]} : vector<128x384xf32> to vector<128x128xf32>
    %58 = vector.broadcast %9 : vector<1x128xf32> to vector<128x128xf32>
    %59 = arith.addf %57, %58 : vector<128x128xf32>
    %cst_25 = arith.constant dense<0xFF800000> : vector<128xf32>
    %60 = vector.multi_reduction <maximumf>, %59, %cst_25 [1] : vector<128x128xf32> to vector<128xf32>
    %61 = vector.shape_cast %60 : vector<128xf32> to vector<128x1xf32>
    %62 = vector.broadcast %61 : vector<128x1xf32> to vector<128x128xf32>
    %63 = arith.subf %59, %62 : vector<128x128xf32>
    %64 = math.exp %63 : vector<128x128xf32>
    %cst_26 = arith.constant dense<0.000000e+00> : vector<128xf32>
    %65 = vector.multi_reduction <add>, %64, %cst_26 [1] : vector<128x128xf32> to vector<128xf32>
    %66 = vector.shape_cast %65 : vector<128xf32> to vector<128x1xf32>
    %67 = tpu.reciprocal %66 {approx = true} : vector<128x1xf32> -> vector<128x1xf32>
    %68 = vector.broadcast %67 : vector<128x1xf32> to vector<128x128xf32>
    %69 = arith.mulf %64, %68 : vector<128x128xf32>
    %70 = arith.truncf %69 : vector<128x128xf32> to vector<128x128xbf16>
    %71 = vector.extract_strided_slice %15 {offsets = [0, 128], sizes = [32, 128], strides = [1, 1]} : vector<32x384xbf16> to vector<32x128xbf16>
    "tpu.trace_start"() <{level = 10 : i32, message = "ck,qk->cq"}> : () -> ()
    %cst_27 = arith.constant dense<0.000000e+00> : vector<32x128xf32>
    %72 = tpu.matmul %71, %70, %cst_27 {dimension_numbers = #tpu.dot_dimension_numbers<[1], [1], [0], [0], [0, 0, 1, 0], [], []>} : vector<32x128xbf16>, vector<128x128xbf16>, vector<32x128xf32> -> vector<32x128xf32>
    "tpu.trace_stop"() : () -> ()
    %73 = arith.addf %35, %72 : vector<32x128xf32>
    %74 = vector.extract_strided_slice %39 {offsets = [0, 256], sizes = [128, 128], strides = [1, 1]} : vector<128x384xf32> to vector<128x128xf32>
    %75 = vector.broadcast %9 : vector<1x128xf32> to vector<128x128xf32>
    %76 = arith.addf %74, %75 : vector<128x128xf32>
    %cst_28 = arith.constant dense<0xFF800000> : vector<128xf32>
    %77 = vector.multi_reduction <maximumf>, %76, %cst_28 [1] : vector<128x128xf32> to vector<128xf32>
    %78 = vector.shape_cast %77 : vector<128xf32> to vector<128x1xf32>
    %79 = vector.broadcast %78 : vector<128x1xf32> to vector<128x128xf32>
    %80 = arith.subf %76, %79 : vector<128x128xf32>
    %81 = math.exp %80 : vector<128x128xf32>
    %cst_29 = arith.constant dense<0.000000e+00> : vector<128xf32>
    %82 = vector.multi_reduction <add>, %81, %cst_29 [1] : vector<128x128xf32> to vector<128xf32>
    %83 = vector.shape_cast %82 : vector<128xf32> to vector<128x1xf32>
    %84 = tpu.reciprocal %83 {approx = true} : vector<128x1xf32> -> vector<128x1xf32>
    %85 = vector.broadcast %84 : vector<128x1xf32> to vector<128x128xf32>
    %86 = arith.mulf %81, %85 : vector<128x128xf32>
    %87 = arith.truncf %86 : vector<128x128xf32> to vector<128x128xbf16>
    %88 = vector.extract_strided_slice %15 {offsets = [0, 256], sizes = [32, 128], strides = [1, 1]} : vector<32x384xbf16> to vector<32x128xbf16>
    "tpu.trace_start"() <{level = 10 : i32, message = "ck,qk->cq"}> : () -> ()
    %cst_30 = arith.constant dense<0.000000e+00> : vector<32x128xf32>
    %89 = tpu.matmul %88, %87, %cst_30 {dimension_numbers = #tpu.dot_dimension_numbers<[1], [1], [0], [0], [0, 0, 1, 0], [], []>} : vector<32x128xbf16>, vector<128x128xbf16>, vector<32x128xf32> -> vector<32x128xf32>
    "tpu.trace_stop"() : () -> ()
    %90 = arith.addf %36, %89 : vector<32x128xf32>
    %91 = vector.extract_strided_slice %33 {offsets = [0, 8], sizes = [128, 8], strides = [1, 1]} : vector<128x32xbf16> to vector<128x8xbf16>
    %92 = vector.extract_strided_slice %11 {offsets = [0, 8], sizes = [384, 8], strides = [1, 1]} : vector<384x64xbf16> to vector<384x8xbf16>
    "tpu.trace_start"() <{level = 10 : i32, message = "qd,kd->qk"}> : () -> ()
    %cst_31 = arith.constant dense<0.000000e+00> : vector<128x384xf32>
    %93 = tpu.matmul %91, %92, %cst_31 {dimension_numbers = #tpu.dot_dimension_numbers<[1], [1], [0], [0], [0, 0, 1, 0], [], []>} : vector<128x8xbf16>, vector<384x8xbf16>, vector<128x384xf32> -> vector<128x384xf32>
    "tpu.trace_stop"() : () -> ()
    %94 = vector.extract_strided_slice %93 {offsets = [0, 0], sizes = [128, 128], strides = [1, 1]} : vector<128x384xf32> to vector<128x128xf32>
    %95 = vector.broadcast %9 : vector<1x128xf32> to vector<128x128xf32>
    %96 = arith.addf %94, %95 : vector<128x128xf32>
    %cst_32 = arith.constant dense<0xFF800000> : vector<128xf32>
    %97 = vector.multi_reduction <maximumf>, %96, %cst_32 [1] : vector<128x128xf32> to vector<128xf32>
    %98 = vector.shape_cast %97 : vector<128xf32> to vector<128x1xf32>
    %99 = vector.broadcast %98 : vector<128x1xf32> to vector<128x128xf32>
    %100 = arith.subf %96, %99 : vector<128x128xf32>
    %101 = math.exp %100 : vector<128x128xf32>
    %cst_33 = arith.constant dense<0.000000e+00> : vector<128xf32>
    %102 = vector.multi_reduction <add>, %101, %cst_33 [1] : vector<128x128xf32> to vector<128xf32>
    %103 = vector.shape_cast %102 : vector<128xf32> to vector<128x1xf32>
    %104 = tpu.reciprocal %103 {approx = true} : vector<128x1xf32> -> vector<128x1xf32>
    %105 = vector.broadcast %104 : vector<128x1xf32> to vector<128x128xf32>
    %106 = arith.mulf %101, %105 : vector<128x128xf32>
    %107 = arith.truncf %106 : vector<128x128xf32> to vector<128x128xbf16>
    %108 = vector.extract_strided_slice %19 {offsets = [0, 0], sizes = [32, 128], strides = [1, 1]} : vector<32x384xbf16> to vector<32x128xbf16>
    "tpu.trace_start"() <{level = 10 : i32, message = "ck,qk->cq"}> : () -> ()
    %cst_34 = arith.constant dense<0.000000e+00> : vector<32x128xf32>
    %109 = tpu.matmul %108, %107, %cst_34 {dimension_numbers = #tpu.dot_dimension_numbers<[1], [1], [0], [0], [0, 0, 1, 0], [], []>} : vector<32x128xbf16>, vector<128x128xbf16>, vector<32x128xf32> -> vector<32x128xf32>
    "tpu.trace_stop"() : () -> ()
    %110 = arith.addf %56, %109 : vector<32x128xf32>
    %111 = vector.extract_strided_slice %93 {offsets = [0, 128], sizes = [128, 128], strides = [1, 1]} : vector<128x384xf32> to vector<128x128xf32>
    %112 = vector.broadcast %9 : vector<1x128xf32> to vector<128x128xf32>
    %113 = arith.addf %111, %112 : vector<128x128xf32>
    %cst_35 = arith.constant dense<0xFF800000> : vector<128xf32>
    %114 = vector.multi_reduction <maximumf>, %113, %cst_35 [1] : vector<128x128xf32> to vector<128xf32>
    %115 = vector.shape_cast %114 : vector<128xf32> to vector<128x1xf32>
    %116 = vector.broadcast %115 : vector<128x1xf32> to vector<128x128xf32>
    %117 = arith.subf %113, %116 : vector<128x128xf32>
    %118 = math.exp %117 : vector<128x128xf32>
    %cst_36 = arith.constant dense<0.000000e+00> : vector<128xf32>
    %119 = vector.multi_reduction <add>, %118, %cst_36 [1] : vector<128x128xf32> to vector<128xf32>
    %120 = vector.shape_cast %119 : vector<128xf32> to vector<128x1xf32>
    %121 = tpu.reciprocal %120 {approx = true} : vector<128x1xf32> -> vector<128x1xf32>
    %122 = vector.broadcast %121 : vector<128x1xf32> to vector<128x128xf32>
    %123 = arith.mulf %118, %122 : vector<128x128xf32>
    %124 = arith.truncf %123 : vector<128x128xf32> to vector<128x128xbf16>
    %125 = vector.extract_strided_slice %19 {offsets = [0, 128], sizes = [32, 128], strides = [1, 1]} : vector<32x384xbf16> to vector<32x128xbf16>
    "tpu.trace_start"() <{level = 10 : i32, message = "ck,qk->cq"}> : () -> ()
    %cst_37 = arith.constant dense<0.000000e+00> : vector<32x128xf32>
    %126 = tpu.matmul %125, %124, %cst_37 {dimension_numbers = #tpu.dot_dimension_numbers<[1], [1], [0], [0], [0, 0, 1, 0], [], []>} : vector<32x128xbf16>, vector<128x128xbf16>, vector<32x128xf32> -> vector<32x128xf32>
    "tpu.trace_stop"() : () -> ()
    %127 = arith.addf %73, %126 : vector<32x128xf32>
    %128 = vector.extract_strided_slice %93 {offsets = [0, 256], sizes = [128, 128], strides = [1, 1]} : vector<128x384xf32> to vector<128x128xf32>
    %129 = vector.broadcast %9 : vector<1x128xf32> to vector<128x128xf32>
    %130 = arith.addf %128, %129 : vector<128x128xf32>
    %cst_38 = arith.constant dense<0xFF800000> : vector<128xf32>
    %131 = vector.multi_reduction <maximumf>, %130, %cst_38 [1] : vector<128x128xf32> to vector<128xf32>
    %132 = vector.shape_cast %131 : vector<128xf32> to vector<128x1xf32>
    %133 = vector.broadcast %132 : vector<128x1xf32> to vector<128x128xf32>
    %134 = arith.subf %130, %133 : vector<128x128xf32>
    %135 = math.exp %134 : vector<128x128xf32>
    %cst_39 = arith.constant dense<0.000000e+00> : vector<128xf32>
    %136 = vector.multi_reduction <add>, %135, %cst_39 [1] : vector<128x128xf32> to vector<128xf32>
    %137 = vector.shape_cast %136 : vector<128xf32> to vector<128x1xf32>
    %138 = tpu.reciprocal %137 {approx = true} : vector<128x1xf32> -> vector<128x1xf32>
    %139 = vector.broadcast %138 : vector<128x1xf32> to vector<128x128xf32>
    %140 = arith.mulf %135, %139 : vector<128x128xf32>
    %141 = arith.truncf %140 : vector<128x128xf32> to vector<128x128xbf16>
    %142 = vector.extract_strided_slice %19 {offsets = [0, 256], sizes = [32, 128], strides = [1, 1]} : vector<32x384xbf16> to vector<32x128xbf16>
    "tpu.trace_start"() <{level = 10 : i32, message = "ck,qk->cq"}> : () -> ()
    %cst_40 = arith.constant dense<0.000000e+00> : vector<32x128xf32>
    %143 = tpu.matmul %142, %141, %cst_40 {dimension_numbers = #tpu.dot_dimension_numbers<[1], [1], [0], [0], [0, 0, 1, 0], [], []>} : vector<32x128xbf16>, vector<128x128xbf16>, vector<32x128xf32> -> vector<32x128xf32>
    "tpu.trace_stop"() : () -> ()
    %144 = arith.addf %90, %143 : vector<32x128xf32>
    %145 = vector.extract_strided_slice %33 {offsets = [0, 16], sizes = [128, 8], strides = [1, 1]} : vector<128x32xbf16> to vector<128x8xbf16>
    %146 = vector.extract_strided_slice %11 {offsets = [0, 16], sizes = [384, 8], strides = [1, 1]} : vector<384x64xbf16> to vector<384x8xbf16>
    "tpu.trace_start"() <{level = 10 : i32, message = "qd,kd->qk"}> : () -> ()
    %cst_41 = arith.constant dense<0.000000e+00> : vector<128x384xf32>
    %147 = tpu.matmul %145, %146, %cst_41 {dimension_numbers = #tpu.dot_dimension_numbers<[1], [1], [0], [0], [0, 0, 1, 0], [], []>} : vector<128x8xbf16>, vector<384x8xbf16>, vector<128x384xf32> -> vector<128x384xf32>
    "tpu.trace_stop"() : () -> ()
    %148 = vector.extract_strided_slice %147 {offsets = [0, 0], sizes = [128, 128], strides = [1, 1]} : vector<128x384xf32> to vector<128x128xf32>
    %149 = vector.broadcast %9 : vector<1x128xf32> to vector<128x128xf32>
    %150 = arith.addf %148, %149 : vector<128x128xf32>
    %cst_42 = arith.constant dense<0xFF800000> : vector<128xf32>
    %151 = vector.multi_reduction <maximumf>, %150, %cst_42 [1] : vector<128x128xf32> to vector<128xf32>
    %152 = vector.shape_cast %151 : vector<128xf32> to vector<128x1xf32>
    %153 = vector.broadcast %152 : vector<128x1xf32> to vector<128x128xf32>
    %154 = arith.subf %150, %153 : vector<128x128xf32>
    %155 = math.exp %154 : vector<128x128xf32>
    %cst_43 = arith.constant dense<0.000000e+00> : vector<128xf32>
    %156 = vector.multi_reduction <add>, %155, %cst_43 [1] : vector<128x128xf32> to vector<128xf32>
    %157 = vector.shape_cast %156 : vector<128xf32> to vector<128x1xf32>
    %158 = tpu.reciprocal %157 {approx = true} : vector<128x1xf32> -> vector<128x1xf32>
    %159 = vector.broadcast %158 : vector<128x1xf32> to vector<128x128xf32>
    %160 = arith.mulf %155, %159 : vector<128x128xf32>
    %161 = arith.truncf %160 : vector<128x128xf32> to vector<128x128xbf16>
    %162 = vector.extract_strided_slice %23 {offsets = [0, 0], sizes = [32, 128], strides = [1, 1]} : vector<32x384xbf16> to vector<32x128xbf16>
    "tpu.trace_start"() <{level = 10 : i32, message = "ck,qk->cq"}> : () -> ()
    %cst_44 = arith.constant dense<0.000000e+00> : vector<32x128xf32>
    %163 = tpu.matmul %162, %161, %cst_44 {dimension_numbers = #tpu.dot_dimension_numbers<[1], [1], [0], [0], [0, 0, 1, 0], [], []>} : vector<32x128xbf16>, vector<128x128xbf16>, vector<32x128xf32> -> vector<32x128xf32>
    "tpu.trace_stop"() : () -> ()
    %164 = arith.addf %110, %163 : vector<32x128xf32>
    %165 = vector.extract_strided_slice %147 {offsets = [0, 128], sizes = [128, 128], strides = [1, 1]} : vector<128x384xf32> to vector<128x128xf32>
    %166 = vector.broadcast %9 : vector<1x128xf32> to vector<128x128xf32>
    %167 = arith.addf %165, %166 : vector<128x128xf32>
    %cst_45 = arith.constant dense<0xFF800000> : vector<128xf32>
    %168 = vector.multi_reduction <maximumf>, %167, %cst_45 [1] : vector<128x128xf32> to vector<128xf32>
    %169 = vector.shape_cast %168 : vector<128xf32> to vector<128x1xf32>
    %170 = vector.broadcast %169 : vector<128x1xf32> to vector<128x128xf32>
    %171 = arith.subf %167, %170 : vector<128x128xf32>
    %172 = math.exp %171 : vector<128x128xf32>
    %cst_46 = arith.constant dense<0.000000e+00> : vector<128xf32>
    %173 = vector.multi_reduction <add>, %172, %cst_46 [1] : vector<128x128xf32> to vector<128xf32>
    %174 = vector.shape_cast %173 : vector<128xf32> to vector<128x1xf32>
    %175 = tpu.reciprocal %174 {approx = true} : vector<128x1xf32> -> vector<128x1xf32>
    %176 = vector.broadcast %175 : vector<128x1xf32> to vector<128x128xf32>
    %177 = arith.mulf %172, %176 : vector<128x128xf32>
    %178 = arith.truncf %177 : vector<128x128xf32> to vector<128x128xbf16>
    %179 = vector.extract_strided_slice %23 {offsets = [0, 128], sizes = [32, 128], strides = [1, 1]} : vector<32x384xbf16> to vector<32x128xbf16>
    "tpu.trace_start"() <{level = 10 : i32, message = "ck,qk->cq"}> : () -> ()
    %cst_47 = arith.constant dense<0.000000e+00> : vector<32x128xf32>
    %180 = tpu.matmul %179, %178, %cst_47 {dimension_numbers = #tpu.dot_dimension_numbers<[1], [1], [0], [0], [0, 0, 1, 0], [], []>} : vector<32x128xbf16>, vector<128x128xbf16>, vector<32x128xf32> -> vector<32x128xf32>
    "tpu.trace_stop"() : () -> ()
    %181 = arith.addf %127, %180 : vector<32x128xf32>
    %182 = vector.extract_strided_slice %147 {offsets = [0, 256], sizes = [128, 128], strides = [1, 1]} : vector<128x384xf32> to vector<128x128xf32>
    %183 = vector.broadcast %9 : vector<1x128xf32> to vector<128x128xf32>
    %184 = arith.addf %182, %183 : vector<128x128xf32>
    %cst_48 = arith.constant dense<0xFF800000> : vector<128xf32>
    %185 = vector.multi_reduction <maximumf>, %184, %cst_48 [1] : vector<128x128xf32> to vector<128xf32>
    %186 = vector.shape_cast %185 : vector<128xf32> to vector<128x1xf32>
    %187 = vector.broadcast %186 : vector<128x1xf32> to vector<128x128xf32>
    %188 = arith.subf %184, %187 : vector<128x128xf32>
    %189 = math.exp %188 : vector<128x128xf32>
    %cst_49 = arith.constant dense<0.000000e+00> : vector<128xf32>
    %190 = vector.multi_reduction <add>, %189, %cst_49 [1] : vector<128x128xf32> to vector<128xf32>
    %191 = vector.shape_cast %190 : vector<128xf32> to vector<128x1xf32>
    %192 = tpu.reciprocal %191 {approx = true} : vector<128x1xf32> -> vector<128x1xf32>
    %193 = vector.broadcast %192 : vector<128x1xf32> to vector<128x128xf32>
    %194 = arith.mulf %189, %193 : vector<128x128xf32>
    %195 = arith.truncf %194 : vector<128x128xf32> to vector<128x128xbf16>
    %196 = vector.extract_strided_slice %23 {offsets = [0, 256], sizes = [32, 128], strides = [1, 1]} : vector<32x384xbf16> to vector<32x128xbf16>
    "tpu.trace_start"() <{level = 10 : i32, message = "ck,qk->cq"}> : () -> ()
    %cst_50 = arith.constant dense<0.000000e+00> : vector<32x128xf32>
    %197 = tpu.matmul %196, %195, %cst_50 {dimension_numbers = #tpu.dot_dimension_numbers<[1], [1], [0], [0], [0, 0, 1, 0], [], []>} : vector<32x128xbf16>, vector<128x128xbf16>, vector<32x128xf32> -> vector<32x128xf32>
    "tpu.trace_stop"() : () -> ()
    %198 = arith.addf %144, %197 : vector<32x128xf32>
    %199 = vector.extract_strided_slice %33 {offsets = [0, 24], sizes = [128, 8], strides = [1, 1]} : vector<128x32xbf16> to vector<128x8xbf16>
    %200 = vector.extract_strided_slice %11 {offsets = [0, 24], sizes = [384, 8], strides = [1, 1]} : vector<384x64xbf16> to vector<384x8xbf16>
    "tpu.trace_start"() <{level = 10 : i32, message = "qd,kd->qk"}> : () -> ()
    %cst_51 = arith.constant dense<0.000000e+00> : vector<128x384xf32>
    %201 = tpu.matmul %199, %200, %cst_51 {dimension_numbers = #tpu.dot_dimension_numbers<[1], [1], [0], [0], [0, 0, 1, 0], [], []>} : vector<128x8xbf16>, vector<384x8xbf16>, vector<128x384xf32> -> vector<128x384xf32>
    "tpu.trace_stop"() : () -> ()
    %202 = vector.extract_strided_slice %201 {offsets = [0, 0], sizes = [128, 128], strides = [1, 1]} : vector<128x384xf32> to vector<128x128xf32>
    %203 = vector.broadcast %9 : vector<1x128xf32> to vector<128x128xf32>
    %204 = arith.addf %202, %203 : vector<128x128xf32>
    %cst_52 = arith.constant dense<0xFF800000> : vector<128xf32>
    %205 = vector.multi_reduction <maximumf>, %204, %cst_52 [1] : vector<128x128xf32> to vector<128xf32>
    %206 = vector.shape_cast %205 : vector<128xf32> to vector<128x1xf32>
    %207 = vector.broadcast %206 : vector<128x1xf32> to vector<128x128xf32>
    %208 = arith.subf %204, %207 : vector<128x128xf32>
    %209 = math.exp %208 : vector<128x128xf32>
    %cst_53 = arith.constant dense<0.000000e+00> : vector<128xf32>
    %210 = vector.multi_reduction <add>, %209, %cst_53 [1] : vector<128x128xf32> to vector<128xf32>
    %211 = vector.shape_cast %210 : vector<128xf32> to vector<128x1xf32>
    %212 = tpu.reciprocal %211 {approx = true} : vector<128x1xf32> -> vector<128x1xf32>
    %213 = vector.broadcast %212 : vector<128x1xf32> to vector<128x128xf32>
    %214 = arith.mulf %209, %213 : vector<128x128xf32>
    %215 = arith.truncf %214 : vector<128x128xf32> to vector<128x128xbf16>
    %216 = vector.extract_strided_slice %27 {offsets = [0, 0], sizes = [32, 128], strides = [1, 1]} : vector<32x384xbf16> to vector<32x128xbf16>
    "tpu.trace_start"() <{level = 10 : i32, message = "ck,qk->cq"}> : () -> ()
    %cst_54 = arith.constant dense<0.000000e+00> : vector<32x128xf32>
    %217 = tpu.matmul %216, %215, %cst_54 {dimension_numbers = #tpu.dot_dimension_numbers<[1], [1], [0], [0], [0, 0, 1, 0], [], []>} : vector<32x128xbf16>, vector<128x128xbf16>, vector<32x128xf32> -> vector<32x128xf32>
    "tpu.trace_stop"() : () -> ()
    %218 = arith.addf %164, %217 : vector<32x128xf32>
    %219 = vector.extract_strided_slice %201 {offsets = [0, 128], sizes = [128, 128], strides = [1, 1]} : vector<128x384xf32> to vector<128x128xf32>
    %220 = vector.broadcast %9 : vector<1x128xf32> to vector<128x128xf32>
    %221 = arith.addf %219, %220 : vector<128x128xf32>
    %cst_55 = arith.constant dense<0xFF800000> : vector<128xf32>
    %222 = vector.multi_reduction <maximumf>, %221, %cst_55 [1] : vector<128x128xf32> to vector<128xf32>
    %223 = vector.shape_cast %222 : vector<128xf32> to vector<128x1xf32>
    %224 = vector.broadcast %223 : vector<128x1xf32> to vector<128x128xf32>
    %225 = arith.subf %221, %224 : vector<128x128xf32>
    %226 = math.exp %225 : vector<128x128xf32>
    %cst_56 = arith.constant dense<0.000000e+00> : vector<128xf32>
    %227 = vector.multi_reduction <add>, %226, %cst_56 [1] : vector<128x128xf32> to vector<128xf32>
    %228 = vector.shape_cast %227 : vector<128xf32> to vector<128x1xf32>
    %229 = tpu.reciprocal %228 {approx = true} : vector<128x1xf32> -> vector<128x1xf32>
    %230 = vector.broadcast %229 : vector<128x1xf32> to vector<128x128xf32>
    %231 = arith.mulf %226, %230 : vector<128x128xf32>
    %232 = arith.truncf %231 : vector<128x128xf32> to vector<128x128xbf16>
    %233 = vector.extract_strided_slice %27 {offsets = [0, 128], sizes = [32, 128], strides = [1, 1]} : vector<32x384xbf16> to vector<32x128xbf16>
    "tpu.trace_start"() <{level = 10 : i32, message = "ck,qk->cq"}> : () -> ()
    %cst_57 = arith.constant dense<0.000000e+00> : vector<32x128xf32>
    %234 = tpu.matmul %233, %232, %cst_57 {dimension_numbers = #tpu.dot_dimension_numbers<[1], [1], [0], [0], [0, 0, 1, 0], [], []>} : vector<32x128xbf16>, vector<128x128xbf16>, vector<32x128xf32> -> vector<32x128xf32>
    "tpu.trace_stop"() : () -> ()
    %235 = arith.addf %181, %234 : vector<32x128xf32>
    %236 = vector.extract_strided_slice %201 {offsets = [0, 256], sizes = [128, 128], strides = [1, 1]} : vector<128x384xf32> to vector<128x128xf32>
    %237 = vector.broadcast %9 : vector<1x128xf32> to vector<128x128xf32>
    %238 = arith.addf %236, %237 : vector<128x128xf32>
    %cst_58 = arith.constant dense<0xFF800000> : vector<128xf32>
    %239 = vector.multi_reduction <maximumf>, %238, %cst_58 [1] : vector<128x128xf32> to vector<128xf32>
    %240 = vector.shape_cast %239 : vector<128xf32> to vector<128x1xf32>
    %241 = vector.broadcast %240 : vector<128x1xf32> to vector<128x128xf32>
    %242 = arith.subf %238, %241 : vector<128x128xf32>
    %243 = math.exp %242 : vector<128x128xf32>
    %cst_59 = arith.constant dense<0.000000e+00> : vector<128xf32>
    %244 = vector.multi_reduction <add>, %243, %cst_59 [1] : vector<128x128xf32> to vector<128xf32>
    %245 = vector.shape_cast %244 : vector<128xf32> to vector<128x1xf32>
    %246 = tpu.reciprocal %245 {approx = true} : vector<128x1xf32> -> vector<128x1xf32>
    %247 = vector.broadcast %246 : vector<128x1xf32> to vector<128x128xf32>
    %248 = arith.mulf %243, %247 : vector<128x128xf32>
    %249 = arith.truncf %248 : vector<128x128xf32> to vector<128x128xbf16>
    %250 = vector.extract_strided_slice %27 {offsets = [0, 256], sizes = [32, 128], strides = [1, 1]} : vector<32x384xbf16> to vector<32x128xbf16>
    "tpu.trace_start"() <{level = 10 : i32, message = "ck,qk->cq"}> : () -> ()
    %cst_60 = arith.constant dense<0.000000e+00> : vector<32x128xf32>
    %251 = tpu.matmul %250, %249, %cst_60 {dimension_numbers = #tpu.dot_dimension_numbers<[1], [1], [0], [0], [0, 0, 1, 0], [], []>} : vector<32x128xbf16>, vector<128x128xbf16>, vector<32x128xf32> -> vector<32x128xf32>
    "tpu.trace_stop"() : () -> ()
    %252 = arith.addf %198, %251 : vector<32x128xf32>
    %c0_61 = arith.constant 0 : index
    %c0_62 = arith.constant 0 : index
    %c0_63 = arith.constant 0 : index
    %c0_64 = arith.constant 0 : index
    %253 = vector.load %arg6[%c0_61, %c0_62, %c0_63, %c0_64] : memref<1x3x32x128xf32, #tpu.memory_space<vmem>>, vector<1x1x32x128xf32>
    %254 = vector.shape_cast %253 : vector<1x1x32x128xf32> to vector<32x128xf32>
    %255 = vector.shape_cast %218 : vector<32x128xf32> to vector<1x1x32x128xf32>
    tpu.vector_store %arg6[%c0_61, %c0_62, %c0_63, %c0_64], %255 {strides = array<i32>} : memref<1x3x32x128xf32, #tpu.memory_space<vmem>>, vector<1x1x32x128xf32>,
    %c0_65 = arith.constant 0 : index
    %c1 = arith.constant 1 : index
    %c0_66 = arith.constant 0 : index
    %c0_67 = arith.constant 0 : index
    %256 = vector.load %arg6[%c0_65, %c1, %c0_66, %c0_67] : memref<1x3x32x128xf32, #tpu.memory_space<vmem>>, vector<1x1x32x128xf32>
    %257 = vector.shape_cast %256 : vector<1x1x32x128xf32> to vector<32x128xf32>
    %258 = vector.shape_cast %235 : vector<32x128xf32> to vector<1x1x32x128xf32>
    tpu.vector_store %arg6[%c0_65, %c1, %c0_66, %c0_67], %258 {strides = array<i32>} : memref<1x3x32x128xf32, #tpu.memory_space<vmem>>, vector<1x1x32x128xf32>,
    %c0_68 = arith.constant 0 : index
    %c2 = arith.constant 2 : index
    %c0_69 = arith.constant 0 : index
    %c0_70 = arith.constant 0 : index
    %259 = vector.load %arg6[%c0_68, %c2, %c0_69, %c0_70] : memref<1x3x32x128xf32, #tpu.memory_space<vmem>>, vector<1x1x32x128xf32>
    %260 = vector.shape_cast %259 : vector<1x1x32x128xf32> to vector<32x128xf32>
    %261 = vector.shape_cast %252 : vector<32x128xf32> to vector<1x1x32x128xf32>
    tpu.vector_store %arg6[%c0_68, %c2, %c0_69, %c0_70], %261 {strides = array<i32>} : memref<1x3x32x128xf32, #tpu.memory_space<vmem>>, vector<1x1x32x128xf32>,
    return
  }
  func.func @transform_0(%arg0: i32) -> (i32, i32, i32) {
    %c0_i32 = arith.constant 0 : i32
    %c0_i32_0 = arith.constant 0 : i32
    %c0_i32_1 = arith.constant 0 : i32
    return %arg0, %c0_i32, %c0_i32_0 : i32, i32, i32
  }
  func.func @transform_1(%arg0: i32) -> (i32, i32) {
    %c0_i32 = arith.constant 0 : i32
    %c0_i32_0 = arith.constant 0 : i32
    %c0_i32_1 = arith.constant 0 : i32
    return %c0_i32, %c0_i32_0 : i32, i32
  }
  func.func @transform_2(%arg0: i32) -> (i32, i32) {
    %c0_i32 = arith.constant 0 : i32
    %c0_i32_0 = arith.constant 0 : i32
    %c0_i32_1 = arith.constant 0 : i32
    return %c0_i32, %c0_i32_0 : i32, i32
  }
  func.func @transform_3(%arg0: i32) -> (i32, i32) {
    %c0_i32 = arith.constant 0 : i32
    %c0_i32_0 = arith.constant 0 : i32
    %c0_i32_1 = arith.constant 0 : i32
    return %c0_i32, %c0_i32_0 : i32, i32
  }
  func.func @transform_4(%arg0: i32) -> (i32, i32) {
    %c0_i32 = arith.constant 0 : i32
    %c0_i32_0 = arith.constant 0 : i32
    %c0_i32_1 = arith.constant 0 : i32
    return %c0_i32, %c0_i32_0 : i32, i32
  }
  func.func @transform_5(%arg0: i32) -> (i32, i32, i32, i32) {
    %c0_i32 = arith.constant 0 : i32
    %c0_i32_0 = arith.constant 0 : i32
    %c0_i32_1 = arith.constant 0 : i32
    %c0_i32_2 = arith.constant 0 : i32
    return %arg0, %c0_i32, %c0_i32_0, %c0_i32_1 : i32, i32, i32, i32
  }
}

</mosaic_0001>

<llo_original>
// kernel: tpu_custom_call.1
$region0: #{tpu_custom_call.1}
  #allocation0 [shape = 'u32[]', space=smem, size = 0x4, offset = 0x4, fixed_abs, tag = 'smem constant byte address 0x4 - core index']
  #allocation1 [shape = 'u32[144,128]{1,0:T(1,128)}', space=vmem, size = 0x12000, scoped, tag = 'internal scratch']
  %s0 = inlined_call_operand.vmem [shape: bf16[2,128,32], index: 0, kind: input, shape index: {}]
  %s1 = inlined_call_operand.vmem [shape: bf16[384,32], index: 1, kind: input, shape index: {}]
  %s2 = inlined_call_operand.vmem [shape: bf16[32,32], index: 2, kind: input, shape index: {}]
  %s3 = inlined_call_operand.vmem [shape: bf16[32,64], index: 3, kind: input, shape index: {}]
  %s4 = inlined_call_operand.vmem [shape: bf16[32,32], index: 4, kind: input, shape index: {}]
  %s5 = inlined_call_operand.hbm [shape: f32[2,3,32,128], index: 5, kind: output, shape index: {}]
  %s6 = sld [smem:[#allocation0]]
  $region53: #{tpu_custom_call.1} parent=0
    _
  %s8 = ssub.s32 1, %s6
  %s9 = scalar_select 0, %s8, %s6
  $region1: #{tpu_custom_call.1} parent=0
    #allocation2 [shape = 'u8[98304]{0}', space=vmem, size = 0x18000, scoped, tag = 'output window, operand 0']
    #allocation3 [shape = 's32[2]{0}', space=sflag, size = 0x8, scoped, tag = 'scoped memory for tpu_custom_call.1']
    %10 = vsyncpa [#allocation3], 0
    %s11 = scalar_lea.sflag [#allocation3], 1
    %12 = vsyncpa %s11, 0
    loop: start=0, step=1, limit=4
    $region2: #{tpu_custom_call.1} parent=1 // loop_pre_header
      _
    $region3: #{tpu_custom_call.1} parent=1 // loop_header
      %s14 = sphi 0, %s18
      %p15 = scmp.ge.s32.totalorder %s14, 4
      %s24 = sphi 0, %s26
      %s27 = sphi 0, %s24
      %s28 = sphi 0, %s27
      %s44 = sphi 0, %s28
      %s48 = sphi 0, %s48
      %s50 = sphi 0, %s48
      %s51 = sphi 0, %s50
      %s65 = sphi 0, %s51
      %s69 = sphi 0, %s69
      %s71 = sphi 0, %s69
      %s72 = sphi 0, %s71
      %s86 = sphi 0, %s72
      %s90 = sphi 0, %s90
      %s92 = sphi 0, %s90
      %s93 = sphi 0, %s92
      %s107 = sphi 0, %s93
      %s111 = sphi 0, %s111
      %s113 = sphi 0, %s111
      %s114 = sphi 0, %s113
      %s128 = sphi 0, %s114
      %s134 = sphi 0, %s136
      %s137 = sphi 0, %s134
      %s138 = sphi 0, %s137
      %s154 = sphi 0, %s138
    $region4: #{tpu_custom_call.1} parent=1 // loop_header_branch
      %17 = sbr.rel (%p15) target = $region8
    $region5: #{tpu_custom_call.1} parent=1 // loop_body
      %s19 = ssub.s32 %s14, 1
      %s20 = ssub.s32 %s14, 2
      %s21 = sadd.s32 %s14, 1
      %s22 = ssub.s32 %s14, %s21
      %p23 = scmp.eq.s32.totalorder %s22, 0
      %s25 = sadd.s32 %s24, 1
      %s26 = scalar_select %p23, %s24, %s25
      %p29 = pneg %p23
      %p30 = scmp.eq.s32.totalorder %s14, 1
      %p31 = por %p29, %p30
      %p32 = scmp.ne.s32.totalorder %s24, %s27
      %p33 = scmp.eq.s32.totalorder %s14, 0
      %p34 = por %p32, %p33
      %p35 = scmp.ne.s32.totalorder %s24, %s27
      %p36 = scmp.eq.s32.totalorder %s19, 1
      %p37 = por %p35, %p36
      %p38 = scmp.ne.s32.totalorder %s27, %s28
      %p39 = scmp.eq.s32.totalorder %s19, 0
      %p40 = por %p38, %p39
      %p41 = scmp.ne.s32.totalorder %s27, %s28
      %p42 = scmp.eq.s32.totalorder %s20, 1
      %p43 = por %p41, %p42
      %p45 = scmp.ne.s32.totalorder %s28, %s44
      %p46 = scmp.eq.s32.totalorder %s20, 0
      %p47 = por %p45, %p46
      %s49 = sadd.s32 %s48, 1
      %p52 = scmp.eq.s32.totalorder %s14, 1
      %p53 = scmp.ne.s32.totalorder %s48, %s50
      %p54 = scmp.eq.s32.totalorder %s14, 0
      %p55 = por %p53, %p54
      %p56 = scmp.ne.s32.totalorder %s48, %s50
      %p57 = scmp.eq.s32.totalorder %s19, 1
      %p58 = por %p56, %p57
      %p59 = scmp.ne.s32.totalorder %s50, %s51
      %p60 = scmp.eq.s32.totalorder %s19, 0
      %p61 = por %p59, %p60
      %p62 = scmp.ne.s32.totalorder %s50, %s51
      %p63 = scmp.eq.s32.totalorder %s20, 1
      %p64 = por %p62, %p63
      %p66 = scmp.ne.s32.totalorder %s51, %s65
      %p67 = scmp.eq.s32.totalorder %s20, 0
      %p68 = por %p66, %p67
      %s70 = sadd.s32 %s69, 1
      %p73 = scmp.eq.s32.totalorder %s14, 1
      %p74 = scmp.ne.s32.totalorder %s69, %s71
      %p75 = scmp.eq.s32.totalorder %s14, 0
      %p76 = por %p74, %p75
      %p77 = scmp.ne.s32.totalorder %s69, %s71
      %p78 = scmp.eq.s32.totalorder %s19, 1
      %p79 = por %p77, %p78
      %p80 = scmp.ne.s32.totalorder %s71, %s72
      %p81 = scmp.eq.s32.totalorder %s19, 0
      %p82 = por %p80, %p81
      %p83 = scmp.ne.s32.totalorder %s71, %s72
      %p84 = scmp.eq.s32.totalorder %s20, 1
      %p85 = por %p83, %p84
      %p87 = scmp.ne.s32.totalorder %s72, %s86
      %p88 = scmp.eq.s32.totalorder %s20, 0
      %p89 = por %p87, %p88
      %s91 = sadd.s32 %s90, 1
      %p94 = scmp.eq.s32.totalorder %s14, 1
      %p95 = scmp.ne.s32.totalorder %s90, %s92
      %p96 = scmp.eq.s32.totalorder %s14, 0
      %p97 = por %p95, %p96
      %p98 = scmp.ne.s32.totalorder %s90, %s92
      %p99 = scmp.eq.s32.totalorder %s19, 1
      %p100 = por %p98, %p99
      %p101 = scmp.ne.s32.totalorder %s92, %s93
      %p102 = scmp.eq.s32.totalorder %s19, 0
      %p103 = por %p101, %p102
      %p104 = scmp.ne.s32.totalorder %s92, %s93
      %p105 = scmp.eq.s32.totalorder %s20, 1
      %p106 = por %p104, %p105
      %p108 = scmp.ne.s32.totalorder %s93, %s107
      %p109 = scmp.eq.s32.totalorder %s20, 0
      %p110 = por %p108, %p109
      %s112 = sadd.s32 %s111, 1
      %p115 = scmp.eq.s32.totalorder %s14, 1
      %p116 = scmp.ne.s32.totalorder %s111, %s113
      %p117 = scmp.eq.s32.totalorder %s14, 0
      %p118 = por %p116, %p117
      %p119 = scmp.ne.s32.totalorder %s111, %s113
      %p120 = scmp.eq.s32.totalorder %s19, 1
      %p121 = por %p119, %p120
      %p122 = scmp.ne.s32.totalorder %s113, %s114
      %p123 = scmp.eq.s32.totalorder %s19, 0
      %p124 = por %p122, %p123
      %p125 = scmp.ne.s32.totalorder %s113, %s114
      %p126 = scmp.eq.s32.totalorder %s20, 1
      %p127 = por %p125, %p126
      %p129 = scmp.ne.s32.totalorder %s114, %s128
      %p130 = scmp.eq.s32.totalorder %s20, 0
      %p131 = por %p129, %p130
      %s132 = ssub.s32 %s14, %s21
      %p133 = scmp.eq.s32.totalorder %s132, 0
      %s135 = sadd.s32 %s134, 1
      %s136 = scalar_select %p133, %s134, %s135
      %p139 = pneg %p133
      %p140 = scmp.eq.s32.totalorder %s14, 1
      %p141 = por %p139, %p140
      %p142 = scmp.ne.s32.totalorder %s134, %s137
      %p143 = scmp.eq.s32.totalorder %s14, 0
      %p144 = por %p142, %p143
      %p145 = scmp.ne.s32.totalorder %s134, %s137
      %p146 = scmp.eq.s32.totalorder %s19, 1
      %p147 = por %p145, %p146
      %p148 = scmp.ne.s32.totalorder %s137, %s138
      %p149 = scmp.eq.s32.totalorder %s19, 0
      %p150 = por %p148, %p149
      %p151 = scmp.ne.s32.totalorder %s137, %s138
      %p152 = scmp.eq.s32.totalorder %s20, 1
      %p153 = por %p151, %p152
      %p155 = scmp.ne.s32.totalorder %s138, %s154
      %p156 = scmp.eq.s32.totalorder %s20, 0
      %p157 = por %p155, %p156
      %p158 = scmp.le.s32.totalorder 1, %s14
      %p159 = scmp.lt.s32.totalorder %s14, 3
      %p160 = pnand %p158, %p159
      %p161 = pneg %p160
      // Predicated region
      $region9: #{tpu_custom_call.1} parent=5 // pred_check
        _
      $region10: #{tpu_custom_call.1} parent=5 // pred_check_branch
        %163 = sbr.rel (%p160) target = $region12
      $region11: #{tpu_custom_call.1} parent=5 // pred_region
        %s164 = ssub.s32 %s14, 1
        // Predicated region
        $region13: #{tpu_custom_call.1} parent=11 // pred_check
          %p165 = pneg %p61
        $region14: #{tpu_custom_call.1} parent=11 // pred_check_branch
          %167 = sbr.rel (%p165) target = $region16
        $region15: #{tpu_custom_call.1} parent=11 // pred_region
          _
        $region16: #{tpu_custom_call.1} parent=11 // pred_fallthru
          _
        // Predicated region
        $region17: #{tpu_custom_call.1} parent=11 // pred_check
          %p168 = pneg %p82
        $region18: #{tpu_custom_call.1} parent=11 // pred_check_branch
          %170 = sbr.rel (%p168) target = $region20
        $region19: #{tpu_custom_call.1} parent=11 // pred_region
          _
        $region20: #{tpu_custom_call.1} parent=11 // pred_fallthru
          _
        // Predicated region
        $region21: #{tpu_custom_call.1} parent=11 // pred_check
          %p171 = pneg %p103
        $region22: #{tpu_custom_call.1} parent=11 // pred_check_branch
          %173 = sbr.rel (%p171) target = $region24
        $region23: #{tpu_custom_call.1} parent=11 // pred_region
          _
        $region24: #{tpu_custom_call.1} parent=11 // pred_fallthru
          _
        // Predicated region
        $region25: #{tpu_custom_call.1} parent=11 // pred_check
          %p174 = pneg %p124
        $region26: #{tpu_custom_call.1} parent=11 // pred_check_branch
          %176 = sbr.rel (%p174) target = $region28
        $region27: #{tpu_custom_call.1} parent=11 // pred_region
          _
        $region28: #{tpu_custom_call.1} parent=11 // pred_fallthru
          _
      $region12: #{tpu_custom_call.1} parent=5 // pred_fallthru
        _
      %p177 = scmp.lt.s32.totalorder %s14, 2
      // Predicated region
      $region29: #{tpu_custom_call.1} parent=5 // pred_check
        %p178 = pneg %p177
      $region30: #{tpu_custom_call.1} parent=5 // pred_check_branch
        %180 = sbr.rel (%p178) target = $region32
      $region31: #{tpu_custom_call.1} parent=5 // pred_region
        // Predicated region
        $region33: #{tpu_custom_call.1} parent=31 // pred_check
          %p181 = pneg %p34
        $region34: #{tpu_custom_call.1} parent=31 // pred_check_branch
          %183 = sbr.rel (%p181) target = $region36
        $region35: #{tpu_custom_call.1} parent=31 // pred_region
          %p184 = scmp.lt.s32.totalorder %s14, 1
          %s185 = scalar_select %p184, %s14, 1
          %s186 = smul.addr %s185, 16
          %s187 = smul.addr %s186, 4
          %s188 = scalar_lea.vmem %s0, %s187
        $region36: #{tpu_custom_call.1} parent=31 // pred_fallthru
          _
      $region32: #{tpu_custom_call.1} parent=5 // pred_fallthru
        _
      %p189 = scmp.le.s32.totalorder 1, %s14
      %p190 = scmp.lt.s32.totalorder %s14, 3
      %p191 = pnand %p189, %p190
      %p192 = pneg %p191
      // Predicated region
      $region37: #{tpu_custom_call.1} parent=5 // pred_check
        _
      $region38: #{tpu_custom_call.1} parent=5 // pred_check_branch
        %194 = sbr.rel (%p191) target = $region40
      $region39: #{tpu_custom_call.1} parent=5 // pred_region
        %s195 = ssub.s32 %s14, 1
        %p196 = scmp.lt.s32.totalorder %s19, 1
        %s197 = scalar_select %p196, %s19, 1
        %s198 = smul.addr %s197, 16
        %s199 = smul.addr %s198, 4
        %s200 = scalar_lea.vmem %s0, %s199
        %p201 = pneg %p40
        %p202 = pneg %p37
        %p203 = pneg %p61
        %p204 = pneg %p58
        %p205 = pneg %p82
        %p206 = pneg %p79
        %p207 = pneg %p103
        %p208 = pneg %p100
        %p209 = pneg %p124
        %p210 = pneg %p121
        %p211 = pneg %p150
        %p212 = pneg %p147
        %s213 = sand.u32 %s137, 1
        %s214 = scalar_lea.sflag [#allocation3], %s213
        %s215 = sand.u32 %s137, 1
        %s216 = smul.addr %s215, 96
        %s217 = scalar_lea.vmem [#allocation2], %s216
        %p218 = scmp.lt.s32.totalorder %s19, 1
        %s219 = scalar_select %p218, %s19, 1
        %s220 = smul.addr %s219, 16
        %s221 = smul.addr %s220, 4
        %s222 = scalar_lea.vmem %s0, %s221
        %v224 = vld [vmem:[%s1] sm:$0xf]
        %v225 = vld [vmem:[%s1 + $0x4] sm:$0xf]
        %v226 = vld [vmem:[%s1 + $0x8] sm:$0xf]
        %v227 = vld [vmem:[%s1 + $0xc] sm:$0xf]
        %v228 = vld [vmem:[%s1 + $0x10] sm:$0xf]
        %v229 = vld [vmem:[%s1 + $0x14] sm:$0xf]
        %v230 = vld [vmem:[%s1 + $0x18] sm:$0xf]
        %v231 = vld [vmem:[%s1 + $0x1c] sm:$0xf]
        %v232 = vld [vmem:[%s1 + $0x20] sm:$0xf]
        %v233 = vld [vmem:[%s1 + $0x24] sm:$0xf]
        %v234 = vld [vmem:[%s1 + $0x28] sm:$0xf]
        %v235 = vld [vmem:[%s1 + $0x2c] sm:$0xf]
        %v236 = vld [vmem:[%s1 + $0x30] sm:$0xf]
        %v237 = vld [vmem:[%s1 + $0x34] sm:$0xf]
        %v238 = vld [vmem:[%s1 + $0x38] sm:$0xf]
        %v239 = vld [vmem:[%s1 + $0x3c] sm:$0xf]
        %v240 = vld [vmem:[%s1 + $0x40] sm:$0xf]
        %v241 = vld [vmem:[%s1 + $0x44] sm:$0xf]
        %v242 = vld [vmem:[%s1 + $0x48] sm:$0xf]
        %v243 = vld [vmem:[%s1 + $0x4c] sm:$0xf]
        %v244 = vld [vmem:[%s1 + $0x50] sm:$0xf]
        %v245 = vld [vmem:[%s1 + $0x54] sm:$0xf]
        %v246 = vld [vmem:[%s1 + $0x58] sm:$0xf]
        %v247 = vld [vmem:[%s1 + $0x5c] sm:$0xf]
        %v248 = vld [vmem:[%s1 + $0x60] sm:$0xf]
        %v249 = vld [vmem:[%s1 + $0x64] sm:$0xf]
        %v250 = vld [vmem:[%s1 + $0x68] sm:$0xf]
        %v251 = vld [vmem:[%s1 + $0x6c] sm:$0xf]
        %v252 = vld [vmem:[%s1 + $0x70] sm:$0xf]
        %v253 = vld [vmem:[%s1 + $0x74] sm:$0xf]
        %v254 = vld [vmem:[%s1 + $0x78] sm:$0xf]
        %v255 = vld [vmem:[%s1 + $0x7c] sm:$0xf]
        %v256 = vld [vmem:[%s1 + $0x80] sm:$0xf]
        %v257 = vld [vmem:[%s1 + $0x84] sm:$0xf]
        %v258 = vld [vmem:[%s1 + $0x88] sm:$0xf]
        %v259 = vld [vmem:[%s1 + $0x8c] sm:$0xf]
        %v260 = vld [vmem:[%s1 + $0x90] sm:$0xf]
        %v261 = vld [vmem:[%s1 + $0x94] sm:$0xf]
        %v262 = vld [vmem:[%s1 + $0x98] sm:$0xf]
        %v263 = vld [vmem:[%s1 + $0x9c] sm:$0xf]
        %v264 = vld [vmem:[%s1 + $0xa0] sm:$0xf]
        %v265 = vld [vmem:[%s1 + $0xa4] sm:$0xf]
        %v266 = vld [vmem:[%s1 + $0xa8] sm:$0xf]
        %v267 = vld [vmem:[%s1 + $0xac] sm:$0xf]
        %v268 = vld [vmem:[%s1 + $0xb0] sm:$0xf]
        %v269 = vld [vmem:[%s1 + $0xb4] sm:$0xf]
        %v270 = vld [vmem:[%s1 + $0xb8] sm:$0xf]
        %v271 = vld [vmem:[%s1 + $0xbc] sm:$0xf]
        %v272 = vld [vmem:[%s2] sm:$0xf]
        %v273 = vld [vmem:[%s2 + $0x4] sm:$0xf]
        %v274 = vld [vmem:[%s2 + $0x8] sm:$0xf]
        %v275 = vld [vmem:[%s2 + $0xc] sm:$0xf]
        %v276 = vld [vmem:[%s3] sm:$0xf]
        %v277 = vld [vmem:[%s3 + $0x4] sm:$0xf]
        %v278 = vld [vmem:[%s3 + $0x8] sm:$0xf]
        %v279 = vld [vmem:[%s3 + $0xc] sm:$0xf]
        %v280 = vld [vmem:[%s4] sm:$0xf]
        %v281 = vld [vmem:[%s4 + $0x4] sm:$0xf]
        %v282 = vld [vmem:[%s4 + $0x8] sm:$0xf]
        %v283 = vld [vmem:[%s4 + $0xc] sm:$0xf]
        %v284 = vlaneseq
        %v285 = vand.u32 %v284, 127
        %vm286 = vcmp.lt.s32.totalorder %v285, 80
        %v287 = vsel %vm286, 0.0, -1e+30
        %v336 = vunpack.c.l.b16 %v224
        %v337 = vunpack.c.l.b16 %v225
        %v338 = vunpack.c.l.b16 %v226
        %v339 = vunpack.c.l.b16 %v227
        %v340 = vunpack.c.l.b16 %v228
        %v341 = vunpack.c.l.b16 %v229
        %v342 = vunpack.c.l.b16 %v230
        %v343 = vunpack.c.l.b16 %v231
        %v344 = vunpack.c.l.b16 %v232
        %v345 = vunpack.c.l.b16 %v233
        %v346 = vunpack.c.l.b16 %v234
        %v347 = vunpack.c.l.b16 %v235
        %v348 = vunpack.c.l.b16 %v236
        %v349 = vunpack.c.l.b16 %v237
        %v350 = vunpack.c.l.b16 %v238
        %v351 = vunpack.c.l.b16 %v239
        %v352 = vunpack.c.l.b16 %v240
        %v353 = vunpack.c.l.b16 %v241
        %v354 = vunpack.c.l.b16 %v242
        %v355 = vunpack.c.l.b16 %v243
        %v356 = vunpack.c.l.b16 %v244
        %v357 = vunpack.c.l.b16 %v245
        %v358 = vunpack.c.l.b16 %v246
        %v359 = vunpack.c.l.b16 %v247
        %v360 = vunpack.c.l.b16 %v248
        %v361 = vunpack.c.l.b16 %v249
        %v362 = vunpack.c.l.b16 %v250
        %v363 = vunpack.c.l.b16 %v251
        %v364 = vunpack.c.l.b16 %v252
        %v365 = vunpack.c.l.b16 %v253
        %v366 = vunpack.c.l.b16 %v254
        %v367 = vunpack.c.l.b16 %v255
        %v368 = vunpack.c.l.b16 %v256
        %v369 = vunpack.c.l.b16 %v257
        %v370 = vunpack.c.l.b16 %v258
        %v371 = vunpack.c.l.b16 %v259
        %v372 = vunpack.c.l.b16 %v260
        %v373 = vunpack.c.l.b16 %v261
        %v374 = vunpack.c.l.b16 %v262
        %v375 = vunpack.c.l.b16 %v263
        %v376 = vunpack.c.l.b16 %v264
        %v377 = vunpack.c.l.b16 %v265
        %v378 = vunpack.c.l.b16 %v266
        %v379 = vunpack.c.l.b16 %v267
        %v380 = vunpack.c.l.b16 %v268
        %v381 = vunpack.c.l.b16 %v269
        %v382 = vunpack.c.l.b16 %v270
        %v383 = vunpack.c.l.b16 %v271
        %v384 = vpack.c.b16 %v337, %v336
        %v385 = vpack.c.b16 %v339, %v338
        %v386 = vpack.c.b16 %v341, %v340
        %v387 = vpack.c.b16 %v343, %v342
        %v388 = vpack.c.b16 %v345, %v344
        %v389 = vpack.c.b16 %v347, %v346
        %v390 = vpack.c.b16 %v349, %v348
        %v391 = vpack.c.b16 %v351, %v350
        %v392 = vpack.c.b16 %v353, %v352
        %v393 = vpack.c.b16 %v355, %v354
        %v394 = vpack.c.b16 %v357, %v356
        %v395 = vpack.c.b16 %v359, %v358
        %v396 = vpack.c.b16 %v361, %v360
        %v397 = vpack.c.b16 %v363, %v362
        %v398 = vpack.c.b16 %v365, %v364
        %v399 = vpack.c.b16 %v367, %v366
        %v400 = vpack.c.b16 %v369, %v368
        %v401 = vpack.c.b16 %v371, %v370
        %v402 = vpack.c.b16 %v373, %v372
        %v403 = vpack.c.b16 %v375, %v374
        %v404 = vpack.c.b16 %v377, %v376
        %v405 = vpack.c.b16 %v379, %v378
        %v406 = vpack.c.b16 %v381, %v380
        %v407 = vpack.c.b16 %v383, %v382
        %v412 = vunpack.c.l.b16 %v276
        %v413 = vunpack.c.l.b16 %v277
        %v414 = vunpack.c.l.b16 %v278
        %v415 = vunpack.c.l.b16 %v279
        %v416 = vpack.c.b16 %v413, %v412
        %v417 = vpack.c.b16 %v415, %v414
        %vm420 = vcmask 261120
        %v422 = vsel %vm420, %v384, 0
        %v425 = vsel %vm420, %v385, 0
        %v428 = vsel %vm420, %v386, 0
        %v431 = vsel %vm420, %v387, 0
        %v434 = vsel %vm420, %v388, 0
        %v437 = vsel %vm420, %v389, 0
        %v440 = vsel %vm420, %v390, 0
        %v443 = vsel %vm420, %v391, 0
        %v446 = vsel %vm420, %v392, 0
        %v449 = vsel %vm420, %v393, 0
        %v452 = vsel %vm420, %v394, 0
        %v455 = vsel %vm420, %v395, 0
        %v458 = vsel %vm420, %v396, 0
        %v461 = vsel %vm420, %v397, 0
        %v464 = vsel %vm420, %v398, 0
        %v467 = vsel %vm420, %v399, 0
        %v470 = vsel %vm420, %v400, 0
        %v473 = vsel %vm420, %v401, 0
        %v476 = vsel %vm420, %v402, 0
        %v479 = vsel %vm420, %v403, 0
        %v482 = vsel %vm420, %v404, 0
        %v485 = vsel %vm420, %v405, 0
        %v488 = vsel %vm420, %v406, 0
        %v491 = vsel %vm420, %v407, 0
        %493 = vmatprep.subr.bf16.mxu0 0
        %494 = vmatpush1.bf16.msra.mxu0 0
        %495 = vmatprep.subr.bf16.mxu0 0
        %496 = vmatpush1.bf16.msra.mxu0 0
        %497 = vmatprep.subr.bf16.mxu0 0
        %498 = vmatpush1.bf16.msra.mxu0 0
        %499 = vmatprep.subr.bf16.mxu0 0
        %500 = vmatpush1.bf16.msra.mxu0 0
        %501 = vmatprep.subr.bf16.mxu0 0
        %502 = vmatpush1.bf16.msra.mxu0 0
        %503 = vmatprep.subr.bf16.mxu0 0
        %504 = vmatpush1.bf16.msra.mxu0 0
        %505 = vmatprep.subr.bf16.mxu0 0
        %506 = vmatpush1.bf16.msra.mxu0 %v417
        %507 = vmatprep.subr.bf16.mxu0 0
        %508 = vmatpush1.bf16.msra.mxu0 %v416
        %509 = vmatprep.subr.bf16.mxu0 0
        %510 = vmatpush2.bf16.msra.mxu0 0
        %511 = vmatprep.subr.bf16.mxu0 0
        %512 = vmatpush2.bf16.msra.mxu0 0
        %513 = vmatprep.subr.bf16.mxu0 0
        %514 = vmatpush2.bf16.msra.mxu0 0
        %515 = vmatprep.subr.bf16.mxu0 0
        %516 = vmatpush2.bf16.msra.mxu0 0
        %517 = vmatprep.subr.bf16.mxu0 0
        %518 = vmatpush2.bf16.msra.mxu0 0
        %519 = vmatprep.subr.bf16.mxu0 0
        %520 = vmatpush2.bf16.msra.mxu0 0
        %521 = vmatprep.subr.bf16.mxu0 0
        %522 = vmatpush2.bf16.msra.mxu0 0
        %523 = vmatprep.subr.bf16.mxu0 0
        %524 = vmatpush2.bf16.msra.mxu0 0
        %525 = vmatprep.mubr.bf16.mxu0 0
        %526 = vmatmul.mubr.bf16.gmra.mxu0 %v422
        %v527 = vpop.f32.mrf.mxu0
        %v528 = vadd.f32 0.0, %v527
        %v529 = vpop.f32.mrf.mxu0
        %v530 = vpop.f32.mrf.mxu0
        %v531 = vadd.f32 0.0, %v530
        %v532 = vpop.f32.mrf.mxu0
        %533 = vmatprep.mubr.bf16.mxu0 0
        %534 = vmatmul.mubr.bf16.gmra.mxu0 %v425
        %v535 = vpop.f32.mrf.mxu0
        %v536 = vadd.f32 0.0, %v535
        %v537 = vpop.f32.mrf.mxu0
        %v538 = vpop.f32.mrf.mxu0
        %v539 = vadd.f32 0.0, %v538
        %v540 = vpop.f32.mrf.mxu0
        %541 = vmatprep.mubr.bf16.mxu0 0
        %542 = vmatmul.mubr.bf16.gmra.mxu0 %v428
        %v543 = vpop.f32.mrf.mxu0
        %v544 = vadd.f32 0.0, %v543
        %v545 = vpop.f32.mrf.mxu0
        %v546 = vpop.f32.mrf.mxu0
        %v547 = vadd.f32 0.0, %v546
        %v548 = vpop.f32.mrf.mxu0
        %549 = vmatprep.mubr.bf16.mxu0 0
        %550 = vmatmul.mubr.bf16.gmra.mxu0 %v431
        %v551 = vpop.f32.mrf.mxu0
        %v552 = vadd.f32 0.0, %v551
        %v553 = vpop.f32.mrf.mxu0
        %v554 = vpop.f32.mrf.mxu0
        %v555 = vadd.f32 0.0, %v554
        %v556 = vpop.f32.mrf.mxu0
        %557 = vmatprep.mubr.bf16.mxu0 0
        %558 = vmatmul.mubr.bf16.gmra.mxu0 %v434
        %v559 = vpop.f32.mrf.mxu0
        %v560 = vadd.f32 0.0, %v559
        %v561 = vpop.f32.mrf.mxu0
        %v562 = vpop.f32.mrf.mxu0
        %v563 = vadd.f32 0.0, %v562
        %v564 = vpop.f32.mrf.mxu0
        %565 = vmatprep.mubr.bf16.mxu0 0
        %566 = vmatmul.mubr.bf16.gmra.mxu0 %v437
        %v567 = vpop.f32.mrf.mxu0
        %v568 = vadd.f32 0.0, %v567
        %v569 = vpop.f32.mrf.mxu0
        %v570 = vpop.f32.mrf.mxu0
        %v571 = vadd.f32 0.0, %v570
        %v572 = vpop.f32.mrf.mxu0
        %573 = vmatprep.mubr.bf16.mxu0 0
        %574 = vmatmul.mubr.bf16.gmra.mxu0 %v440
        %v575 = vpop.f32.mrf.mxu0
        %v576 = vadd.f32 0.0, %v575
        %v577 = vpop.f32.mrf.mxu0
        %v578 = vpop.f32.mrf.mxu0
        %v579 = vadd.f32 0.0, %v578
        %v580 = vpop.f32.mrf.mxu0
        %581 = vmatprep.mubr.bf16.mxu0 0
        %582 = vmatmul.mubr.bf16.gmra.mxu0 %v443
        %v583 = vpop.f32.mrf.mxu0
        %v584 = vadd.f32 0.0, %v583
        %v585 = vpop.f32.mrf.mxu0
        %v586 = vpop.f32.mrf.mxu0
        %v587 = vadd.f32 0.0, %v586
        %v588 = vpop.f32.mrf.mxu0
        %589 = vmatprep.mubr.bf16.mxu0 0
        %590 = vmatmul.mubr.bf16.gmra.mxu0 %v446
        %v591 = vpop.f32.mrf.mxu0
        %v592 = vadd.f32 0.0, %v591
        %v593 = vpop.f32.mrf.mxu0
        %v594 = vpop.f32.mrf.mxu0
        %v595 = vadd.f32 0.0, %v594
        %v596 = vpop.f32.mrf.mxu0
        %597 = vmatprep.mubr.bf16.mxu0 0
        %598 = vmatmul.mubr.bf16.gmra.mxu0 %v449
        %v599 = vpop.f32.mrf.mxu0
        %v600 = vadd.f32 0.0, %v599
        %v601 = vpop.f32.mrf.mxu0
        %v602 = vpop.f32.mrf.mxu0
        %v603 = vadd.f32 0.0, %v602
        %v604 = vpop.f32.mrf.mxu0
        %605 = vmatprep.mubr.bf16.mxu0 0
        %606 = vmatmul.mubr.bf16.gmra.mxu0 %v452
        %v607 = vpop.f32.mrf.mxu0
        %v608 = vadd.f32 0.0, %v607
        %v609 = vpop.f32.mrf.mxu0
        %v610 = vpop.f32.mrf.mxu0
        %v611 = vadd.f32 0.0, %v610
        %v612 = vpop.f32.mrf.mxu0
        %613 = vmatprep.mubr.bf16.mxu0 0
        %614 = vmatmul.mubr.bf16.gmra.mxu0 %v455
        %v615 = vpop.f32.mrf.mxu0
        %v616 = vadd.f32 0.0, %v615
        %v617 = vpop.f32.mrf.mxu0
        %v618 = vpop.f32.mrf.mxu0
        %v619 = vadd.f32 0.0, %v618
        %v620 = vpop.f32.mrf.mxu0
        %621 = vmatprep.mubr.bf16.mxu0 0
        %622 = vmatmul.mubr.bf16.gmra.mxu0 %v458
        %v623 = vpop.f32.mrf.mxu0
        %v624 = vadd.f32 0.0, %v623
        %v625 = vpop.f32.mrf.mxu0
        %v626 = vpop.f32.mrf.mxu0
        %v627 = vadd.f32 0.0, %v626
        %v628 = vpop.f32.mrf.mxu0
        %629 = vmatprep.mubr.bf16.mxu0 0
        %630 = vmatmul.mubr.bf16.gmra.mxu0 %v461
        %v631 = vpop.f32.mrf.mxu0
        %v632 = vadd.f32 0.0, %v631
        %v633 = vpop.f32.mrf.mxu0
        %v634 = vpop.f32.mrf.mxu0
        %v635 = vadd.f32 0.0, %v634
        %v636 = vpop.f32.mrf.mxu0
        %637 = vmatprep.mubr.bf16.mxu0 0
        %638 = vmatmul.mubr.bf16.gmra.mxu0 %v464
        %v639 = vpop.f32.mrf.mxu0
        %v640 = vadd.f32 0.0, %v639
        %v641 = vpop.f32.mrf.mxu0
        %v642 = vpop.f32.mrf.mxu0
        %v643 = vadd.f32 0.0, %v642
        %v644 = vpop.f32.mrf.mxu0
        %645 = vmatprep.mubr.bf16.mxu0 0
        %646 = vmatmul.mubr.bf16.gmra.mxu0 %v467
        %v647 = vpop.f32.mrf.mxu0
        %v648 = vadd.f32 0.0, %v647
        %v649 = vpop.f32.mrf.mxu0
        %v650 = vpop.f32.mrf.mxu0
        %v651 = vadd.f32 0.0, %v650
        %v652 = vpop.f32.mrf.mxu0
        %653 = vmatprep.mubr.bf16.mxu0 0
        %654 = vmatmul.mubr.bf16.gmra.mxu0 %v470
        %v655 = vpop.f32.mrf.mxu0
        %v656 = vadd.f32 0.0, %v655
        %v657 = vpop.f32.mrf.mxu0
        %v658 = vpop.f32.mrf.mxu0
        %v659 = vadd.f32 0.0, %v658
        %v660 = vpop.f32.mrf.mxu0
        %661 = vmatprep.mubr.bf16.mxu0 0
        %662 = vmatmul.mubr.bf16.gmra.mxu0 %v473
        %v663 = vpop.f32.mrf.mxu0
        %v664 = vadd.f32 0.0, %v663
        %v665 = vpop.f32.mrf.mxu0
        %v666 = vpop.f32.mrf.mxu0
        %v667 = vadd.f32 0.0, %v666
        %v668 = vpop.f32.mrf.mxu0
        %669 = vmatprep.mubr.bf16.mxu0 0
        %670 = vmatmul.mubr.bf16.gmra.mxu0 %v476
        %v671 = vpop.f32.mrf.mxu0
        %v672 = vadd.f32 0.0, %v671
        %v673 = vpop.f32.mrf.mxu0
        %v674 = vpop.f32.mrf.mxu0
        %v675 = vadd.f32 0.0, %v674
        %v676 = vpop.f32.mrf.mxu0
        %677 = vmatprep.mubr.bf16.mxu0 0
        %678 = vmatmul.mubr.bf16.gmra.mxu0 %v479
        %v679 = vpop.f32.mrf.mxu0
        %v680 = vadd.f32 0.0, %v679
        %v681 = vpop.f32.mrf.mxu0
        %v682 = vpop.f32.mrf.mxu0
        %v683 = vadd.f32 0.0, %v682
        %v684 = vpop.f32.mrf.mxu0
        %685 = vmatprep.mubr.bf16.mxu0 0
        %686 = vmatmul.mubr.bf16.gmra.mxu0 %v482
        %v687 = vpop.f32.mrf.mxu0
        %v688 = vadd.f32 0.0, %v687
        %v689 = vpop.f32.mrf.mxu0
        %v690 = vpop.f32.mrf.mxu0
        %v691 = vadd.f32 0.0, %v690
        %v692 = vpop.f32.mrf.mxu0
        %693 = vmatprep.mubr.bf16.mxu0 0
        %694 = vmatmul.mubr.bf16.gmra.mxu0 %v485
        %v695 = vpop.f32.mrf.mxu0
        %v696 = vadd.f32 0.0, %v695
        %v697 = vpop.f32.mrf.mxu0
        %v698 = vpop.f32.mrf.mxu0
        %v699 = vadd.f32 0.0, %v698
        %v700 = vpop.f32.mrf.mxu0
        %701 = vmatprep.mubr.bf16.mxu0 0
        %702 = vmatmul.mubr.bf16.gmra.mxu0 %v488
        %v703 = vpop.f32.mrf.mxu0
        %v704 = vadd.f32 0.0, %v703
        %v705 = vpop.f32.mrf.mxu0
        %v706 = vpop.f32.mrf.mxu0
        %v707 = vadd.f32 0.0, %v706
        %v708 = vpop.f32.mrf.mxu0
        %709 = vmatprep.mubr.bf16.mxu0 0
        %710 = vmatmul.mubr.bf16.gmra.mxu0 %v491
        %v711 = vpop.f32.mrf.mxu0
        %v712 = vadd.f32 0.0, %v711
        %v713 = vpop.f32.mrf.mxu0
        %v714 = vpop.f32.mrf.mxu0
        %v715 = vadd.f32 0.0, %v714
        %v716 = vpop.f32.mrf.mxu0
        %717 = vdwg.mxu0
        %v718 = vpack.c.bf16 %v531, %v528
        %v719 = vpack.c.bf16 %v539, %v536
        %v720 = vpack.c.bf16 %v547, %v544
        %v721 = vpack.c.bf16 %v555, %v552
        %v722 = vpack.c.bf16 %v563, %v560
        %v723 = vpack.c.bf16 %v571, %v568
        %v724 = vpack.c.bf16 %v579, %v576
        %v725 = vpack.c.bf16 %v587, %v584
        %v726 = vpack.c.bf16 %v595, %v592
        %v727 = vpack.c.bf16 %v603, %v600
        %v728 = vpack.c.bf16 %v611, %v608
        %v729 = vpack.c.bf16 %v619, %v616
        %v730 = vpack.c.bf16 %v627, %v624
        %v731 = vpack.c.bf16 %v635, %v632
        %v732 = vpack.c.bf16 %v643, %v640
        %v733 = vpack.c.bf16 %v651, %v648
        %v734 = vpack.c.bf16 %v659, %v656
        %v735 = vpack.c.bf16 %v667, %v664
        %v736 = vpack.c.bf16 %v675, %v672
        %v737 = vpack.c.bf16 %v683, %v680
        %v738 = vpack.c.bf16 %v691, %v688
        %v739 = vpack.c.bf16 %v699, %v696
        %v740 = vpack.c.bf16 %v707, %v704
        %v741 = vpack.c.bf16 %v715, %v712
        %v746 = vunpack.c.l.b16 %v280
        %v747 = vunpack.c.l.b16 %v281
        %v748 = vunpack.c.l.b16 %v282
        %v749 = vunpack.c.l.b16 %v283
        %v750 = vpack.c.b16 %v747, %v746
        %v751 = vpack.c.b16 %v749, %v748
        %776 = vrot.lane.b32.xlu0 %v718, 96
        %v777 = vpop.permute.xlu0 %776
        %778 = vrot.lane.b32.xlu0 %v719, 96
        %v779 = vpop.permute.xlu0 %778
        %780 = vrot.lane.b32.xlu0 %v720, 96
        %v781 = vpop.permute.xlu0 %780
        %782 = vrot.lane.b32.xlu0 %v721, 96
        %v783 = vpop.permute.xlu0 %782
        %784 = vrot.lane.b32.xlu0 %v722, 96
        %v785 = vpop.permute.xlu0 %784
        %786 = vrot.lane.b32.xlu0 %v723, 96
        %v787 = vpop.permute.xlu0 %786
        %788 = vrot.lane.b32.xlu0 %v724, 96
        %v789 = vpop.permute.xlu0 %788
        %790 = vrot.lane.b32.xlu0 %v725, 96
        %v791 = vpop.permute.xlu0 %790
        %792 = vrot.lane.b32.xlu0 %v726, 96
        %v793 = vpop.permute.xlu0 %792
        %794 = vrot.lane.b32.xlu0 %v727, 96
        %v795 = vpop.permute.xlu0 %794
        %796 = vrot.lane.b32.xlu0 %v728, 96
        %v797 = vpop.permute.xlu0 %796
        %798 = vrot.lane.b32.xlu0 %v729, 96
        %v799 = vpop.permute.xlu0 %798
        %800 = vrot.lane.b32.xlu0 %v730, 96
        %v801 = vpop.permute.xlu0 %800
        %802 = vrot.lane.b32.xlu0 %v731, 96
        %v803 = vpop.permute.xlu0 %802
        %804 = vrot.lane.b32.xlu0 %v732, 96
        %v805 = vpop.permute.xlu0 %804
        %806 = vrot.lane.b32.xlu0 %v733, 96
        %v807 = vpop.permute.xlu0 %806
        %808 = vrot.lane.b32.xlu0 %v734, 96
        %v809 = vpop.permute.xlu0 %808
        %810 = vrot.lane.b32.xlu0 %v735, 96
        %v811 = vpop.permute.xlu0 %810
        %812 = vrot.lane.b32.xlu0 %v736, 96
        %v813 = vpop.permute.xlu0 %812
        %814 = vrot.lane.b32.xlu0 %v737, 96
        %v815 = vpop.permute.xlu0 %814
        %816 = vrot.lane.b32.xlu0 %v738, 96
        %v817 = vpop.permute.xlu0 %816
        %818 = vrot.lane.b32.xlu0 %v739, 96
        %v819 = vpop.permute.xlu0 %818
        %820 = vrot.lane.b32.xlu0 %v740, 96
        %v821 = vpop.permute.xlu0 %820
        %822 = vrot.lane.b32.xlu0 %v741, 96
        %v823 = vpop.permute.xlu0 %822
        %vm824 = vcmask 64512
        %v826 = vsel %vm824, %v750, 0
        %v829 = vsel %vm824, %v751, 0
        %v832 = vsel %vm824, %v777, 0
        %v835 = vsel %vm824, %v779, 0
        %v838 = vsel %vm824, %v781, 0
        %v841 = vsel %vm824, %v783, 0
        %v844 = vsel %vm824, %v785, 0
        %v847 = vsel %vm824, %v787, 0
        %v850 = vsel %vm824, %v789, 0
        %v853 = vsel %vm824, %v791, 0
        %v856 = vsel %vm824, %v793, 0
        %v859 = vsel %vm824, %v795, 0
        %v862 = vsel %vm824, %v797, 0
        %v865 = vsel %vm824, %v799, 0
        %v868 = vsel %vm824, %v801, 0
        %v871 = vsel %vm824, %v803, 0
        %v874 = vsel %vm824, %v805, 0
        %v877 = vsel %vm824, %v807, 0
        %v880 = vsel %vm824, %v809, 0
        %v883 = vsel %vm824, %v811, 0
        %v886 = vsel %vm824, %v813, 0
        %v889 = vsel %vm824, %v815, 0
        %v892 = vsel %vm824, %v817, 0
        %v895 = vsel %vm824, %v819, 0
        %v898 = vsel %vm824, %v821, 0
        %v901 = vsel %vm824, %v823, 0
        %903 = vmatprep.subr.bf16.mxu0 0
        %904 = vmatpush1.bf16.xpose.msra.mxu0 %v853
        %905 = vmatprep.subr.bf16.mxu0 0
        %906 = vmatpush1.bf16.xpose.msra.mxu0 %v850
        %907 = vmatprep.subr.bf16.mxu0 0
        %908 = vmatpush1.bf16.xpose.msra.mxu0 %v847
        %909 = vmatprep.subr.bf16.mxu0 0
        %910 = vmatpush1.bf16.xpose.msra.mxu0 %v844
        %911 = vmatprep.subr.bf16.mxu0 0
        %912 = vmatpush1.bf16.xpose.msra.mxu0 %v841
        %913 = vmatprep.subr.bf16.mxu0 0
        %914 = vmatpush1.bf16.xpose.msra.mxu0 %v838
        %915 = vmatprep.subr.bf16.mxu0 0
        %916 = vmatpush1.bf16.xpose.msra.mxu0 %v835
        %917 = vmatprep.subr.bf16.mxu0 0
        %918 = vmatpush1.bf16.xpose.msra.mxu0 %v832
        %919 = vmatprep.subr.bf16.mxu0 0
        %920 = vmatpush2.bf16.xpose.msra.mxu0 %v877
        %921 = vmatprep.subr.bf16.mxu0 0
        %922 = vmatpush2.bf16.xpose.msra.mxu0 %v874
        %923 = vmatprep.subr.bf16.mxu0 0
        %924 = vmatpush2.bf16.xpose.msra.mxu0 %v871
        %925 = vmatprep.subr.bf16.mxu0 0
        %926 = vmatpush2.bf16.xpose.msra.mxu0 %v868
        %927 = vmatprep.subr.bf16.mxu0 0
        %928 = vmatpush2.bf16.xpose.msra.mxu0 %v865
        %929 = vmatprep.subr.bf16.mxu0 0
        %930 = vmatpush2.bf16.xpose.msra.mxu0 %v862
        %931 = vmatprep.subr.bf16.mxu0 0
        %932 = vmatpush2.bf16.xpose.msra.mxu0 %v859
        %933 = vmatprep.subr.bf16.mxu0 0
        %934 = vmatpush2.bf16.xpose.msra.mxu0 %v856
        %935 = vmatprep.mubr.bf16.mxu0 0
        %936 = vmatmul.mubr.bf16.gmra.mxu0 %v826
        %v937 = vpop.f32.mrf.mxu0
        %v938 = vadd.f32 0.0, %v937
        %v939 = vpop.f32.mrf.mxu0
        %v940 = vadd.f32 0.0, %v939
        %v941 = vpop.f32.mrf.mxu0
        %v942 = vadd.f32 0.0, %v941
        %v943 = vpop.f32.mrf.mxu0
        %v944 = vadd.f32 0.0, %v943
        %945 = vmatprep.mubr.bf16.mxu0 0
        %946 = vmatmul.mubr.bf16.gmra.mxu0 %v829
        %v947 = vpop.f32.mrf.mxu0
        %v948 = vadd.f32 0.0, %v947
        %v949 = vpop.f32.mrf.mxu0
        %v950 = vadd.f32 0.0, %v949
        %v951 = vpop.f32.mrf.mxu0
        %v952 = vadd.f32 0.0, %v951
        %v953 = vpop.f32.mrf.mxu0
        %v954 = vadd.f32 0.0, %v953
        %955 = vdwg.mxu0
        %956 = vmatprep.subr.bf16.mxu0 0
        %957 = vmatpush1.bf16.xpose.msra.mxu0 %v901
        %958 = vmatprep.subr.bf16.mxu0 0
        %959 = vmatpush1.bf16.xpose.msra.mxu0 %v898
        %960 = vmatprep.subr.bf16.mxu0 0
        %961 = vmatpush1.bf16.xpose.msra.mxu0 %v895
        %962 = vmatprep.subr.bf16.mxu0 0
        %963 = vmatpush1.bf16.xpose.msra.mxu0 %v892
        %964 = vmatprep.subr.bf16.mxu0 0
        %965 = vmatpush1.bf16.xpose.msra.mxu0 %v889
        %966 = vmatprep.subr.bf16.mxu0 0
        %967 = vmatpush1.bf16.xpose.msra.mxu0 %v886
        %968 = vmatprep.subr.bf16.mxu0 0
        %969 = vmatpush1.bf16.xpose.msra.mxu0 %v883
        %970 = vmatprep.subr.bf16.mxu0 0
        %971 = vmatpush1.bf16.xpose.msra.mxu0 %v880
        %972 = vmatprep.subr.bf16.mxu0 0
        %973 = vmatpush2.bf16.xpose.msra.mxu0 0
        %974 = vmatprep.subr.bf16.mxu0 0
        %975 = vmatpush2.bf16.xpose.msra.mxu0 0
        %976 = vmatprep.subr.bf16.mxu0 0
        %977 = vmatpush2.bf16.xpose.msra.mxu0 0
        %978 = vmatprep.subr.bf16.mxu0 0
        %979 = vmatpush2.bf16.xpose.msra.mxu0 0
        %980 = vmatprep.subr.bf16.mxu0 0
        %981 = vmatpush2.bf16.xpose.msra.mxu0 0
        %982 = vmatprep.subr.bf16.mxu0 0
        %983 = vmatpush2.bf16.xpose.msra.mxu0 0
        %984 = vmatprep.subr.bf16.mxu0 0
        %985 = vmatpush2.bf16.xpose.msra.mxu0 0
        %986 = vmatprep.subr.bf16.mxu0 0
        %987 = vmatpush2.bf16.xpose.msra.mxu0 0
        %988 = vmatprep.mubr.bf16.mxu0 0
        %989 = vmatmul.mubr.bf16.gmra.mxu0 %v826
        %v990 = vpop.f32.mrf.mxu0
        %v991 = vadd.f32 0.0, %v990
        %v992 = vpop.f32.mrf.mxu0
        %v993 = vpop.f32.mrf.mxu0
        %v994 = vadd.f32 0.0, %v993
        %v995 = vpop.f32.mrf.mxu0
        %996 = vmatprep.mubr.bf16.mxu0 0
        %997 = vmatmul.mubr.bf16.gmra.mxu0 %v829
        %v998 = vpop.f32.mrf.mxu0
        %v999 = vadd.f32 0.0, %v998
        %v1000 = vpop.f32.mrf.mxu0
        %v1001 = vpop.f32.mrf.mxu0
        %v1002 = vadd.f32 0.0, %v1001
        %v1003 = vpop.f32.mrf.mxu0
        %1004 = vdwg.mxu0
        %v1005 = vpack.c.bf16 %v942, %v938
        %v1006 = vpack.c.bf16 %v944, %v940
        %v1007 = vpack.c.bf16 %v994, %v991
        %v1008 = vpack.c.bf16 %v952, %v948
        %v1009 = vpack.c.bf16 %v954, %v950
        %v1010 = vpack.c.bf16 %v1002, %v999
        %1011 = vrot.lane.b32.xlu0 %v750, 120
        %v1012 = vpop.permute.xlu0 %1011
        %1013 = vrot.lane.b32.xlu0 %v751, 120
        %v1014 = vpop.permute.xlu0 %1013
        %1015 = vrot.lane.b32.xlu0 %v718, 88
        %v1016 = vpop.permute.xlu0 %1015
        %1017 = vrot.lane.b32.xlu0 %v719, 88
        %v1018 = vpop.permute.xlu0 %1017
        %1019 = vrot.lane.b32.xlu0 %v720, 88
        %v1020 = vpop.permute.xlu0 %1019
        %1021 = vrot.lane.b32.xlu0 %v721, 88
        %v1022 = vpop.permute.xlu0 %1021
        %1023 = vrot.lane.b32.xlu0 %v722, 88
        %v1024 = vpop.permute.xlu0 %1023
        %1025 = vrot.lane.b32.xlu0 %v723, 88
        %v1026 = vpop.permute.xlu0 %1025
        %1027 = vrot.lane.b32.xlu0 %v724, 88
        %v1028 = vpop.permute.xlu0 %1027
        %1029 = vrot.lane.b32.xlu0 %v725, 88
        %v1030 = vpop.permute.xlu0 %1029
        %1031 = vrot.lane.b32.xlu0 %v726, 88
        %v1032 = vpop.permute.xlu0 %1031
        %1033 = vrot.lane.b32.xlu0 %v727, 88
        %v1034 = vpop.permute.xlu0 %1033
        %1035 = vrot.lane.b32.xlu0 %v728, 88
        %v1036 = vpop.permute.xlu0 %1035
        %1037 = vrot.lane.b32.xlu0 %v729, 88
        %v1038 = vpop.permute.xlu0 %1037
        %1039 = vrot.lane.b32.xlu0 %v730, 88
        %v1040 = vpop.permute.xlu0 %1039
        %1041 = vrot.lane.b32.xlu0 %v731, 88
        %v1042 = vpop.permute.xlu0 %1041
        %1043 = vrot.lane.b32.xlu0 %v732, 88
        %v1044 = vpop.permute.xlu0 %1043
        %1045 = vrot.lane.b32.xlu0 %v733, 88
        %v1046 = vpop.permute.xlu0 %1045
        %1047 = vrot.lane.b32.xlu0 %v734, 88
        %v1048 = vpop.permute.xlu0 %1047
        %1049 = vrot.lane.b32.xlu0 %v735, 88
        %v1050 = vpop.permute.xlu0 %1049
        %1051 = vrot.lane.b32.xlu0 %v736, 88
        %v1052 = vpop.permute.xlu0 %1051
        %1053 = vrot.lane.b32.xlu0 %v737, 88
        %v1054 = vpop.permute.xlu0 %1053
        %1055 = vrot.lane.b32.xlu0 %v738, 88
        %v1056 = vpop.permute.xlu0 %1055
        %1057 = vrot.lane.b32.xlu0 %v739, 88
        %v1058 = vpop.permute.xlu0 %1057
        %1059 = vrot.lane.b32.xlu0 %v740, 88
        %v1060 = vpop.permute.xlu0 %1059
        %1061 = vrot.lane.b32.xlu0 %v741, 88
        %v1062 = vpop.permute.xlu0 %1061
        %v1064 = vsel %vm824, %v1012, 0
        %v1067 = vsel %vm824, %v1014, 0
        %v1070 = vsel %vm824, %v1016, 0
        %v1073 = vsel %vm824, %v1018, 0
        %v1076 = vsel %vm824, %v1020, 0
        %v1079 = vsel %vm824, %v1022, 0
        %v1082 = vsel %vm824, %v1024, 0
        %v1085 = vsel %vm824, %v1026, 0
        %v1088 = vsel %vm824, %v1028, 0
        %v1091 = vsel %vm824, %v1030, 0
        %v1094 = vsel %vm824, %v1032, 0
        %v1097 = vsel %vm824, %v1034, 0
        %v1100 = vsel %vm824, %v1036, 0
        %v1103 = vsel %vm824, %v1038, 0
        %v1106 = vsel %vm824, %v1040, 0
        %v1109 = vsel %vm824, %v1042, 0
        %v1112 = vsel %vm824, %v1044, 0
        %v1115 = vsel %vm824, %v1046, 0
        %v1118 = vsel %vm824, %v1048, 0
        %v1121 = vsel %vm824, %v1050, 0
        %v1124 = vsel %vm824, %v1052, 0
        %v1127 = vsel %vm824, %v1054, 0
        %v1130 = vsel %vm824, %v1056, 0
        %v1133 = vsel %vm824, %v1058, 0
        %v1136 = vsel %vm824, %v1060, 0
        %v1139 = vsel %vm824, %v1062, 0
        %1141 = vmatprep.subr.bf16.mxu0 0
        %1142 = vmatpush1.bf16.xpose.msra.mxu0 %v1091
        %1143 = vmatprep.subr.bf16.mxu0 0
        %1144 = vmatpush1.bf16.xpose.msra.mxu0 %v1088
        %1145 = vmatprep.subr.bf16.mxu0 0
        %1146 = vmatpush1.bf16.xpose.msra.mxu0 %v1085
        %1147 = vmatprep.subr.bf16.mxu0 0
        %1148 = vmatpush1.bf16.xpose.msra.mxu0 %v1082
        %1149 = vmatprep.subr.bf16.mxu0 0
        %1150 = vmatpush1.bf16.xpose.msra.mxu0 %v1079
        %1151 = vmatprep.subr.bf16.mxu0 0
        %1152 = vmatpush1.bf16.xpose.msra.mxu0 %v1076
        %1153 = vmatprep.subr.bf16.mxu0 0
        %1154 = vmatpush1.bf16.xpose.msra.mxu0 %v1073
        %1155 = vmatprep.subr.bf16.mxu0 0
        %1156 = vmatpush1.bf16.xpose.msra.mxu0 %v1070
        %1157 = vmatprep.subr.bf16.mxu0 0
        %1158 = vmatpush2.bf16.xpose.msra.mxu0 %v1115
        %1159 = vmatprep.subr.bf16.mxu0 0
        %1160 = vmatpush2.bf16.xpose.msra.mxu0 %v1112
        %1161 = vmatprep.subr.bf16.mxu0 0
        %1162 = vmatpush2.bf16.xpose.msra.mxu0 %v1109
        %1163 = vmatprep.subr.bf16.mxu0 0
        %1164 = vmatpush2.bf16.xpose.msra.mxu0 %v1106
        %1165 = vmatprep.subr.bf16.mxu0 0
        %1166 = vmatpush2.bf16.xpose.msra.mxu0 %v1103
        %1167 = vmatprep.subr.bf16.mxu0 0
        %1168 = vmatpush2.bf16.xpose.msra.mxu0 %v1100
        %1169 = vmatprep.subr.bf16.mxu0 0
        %1170 = vmatpush2.bf16.xpose.msra.mxu0 %v1097
        %1171 = vmatprep.subr.bf16.mxu0 0
        %1172 = vmatpush2.bf16.xpose.msra.mxu0 %v1094
        %1173 = vmatprep.mubr.bf16.mxu0 0
        %1174 = vmatmul.mubr.bf16.gmra.mxu0 %v1064
        %v1175 = vpop.f32.mrf.mxu0
        %v1176 = vadd.f32 0.0, %v1175
        %v1177 = vpop.f32.mrf.mxu0
        %v1178 = vadd.f32 0.0, %v1177
        %v1179 = vpop.f32.mrf.mxu0
        %v1180 = vadd.f32 0.0, %v1179
        %v1181 = vpop.f32.mrf.mxu0
        %v1182 = vadd.f32 0.0, %v1181
        %1183 = vmatprep.mubr.bf16.mxu0 0
        %1184 = vmatmul.mubr.bf16.gmra.mxu0 %v1067
        %v1185 = vpop.f32.mrf.mxu0
        %v1186 = vadd.f32 0.0, %v1185
        %v1187 = vpop.f32.mrf.mxu0
        %v1188 = vadd.f32 0.0, %v1187
        %v1189 = vpop.f32.mrf.mxu0
        %v1190 = vadd.f32 0.0, %v1189
        %v1191 = vpop.f32.mrf.mxu0
        %v1192 = vadd.f32 0.0, %v1191
        %1193 = vdwg.mxu0
        %1194 = vmatprep.subr.bf16.mxu0 0
        %1195 = vmatpush1.bf16.xpose.msra.mxu0 %v1139
        %1196 = vmatprep.subr.bf16.mxu0 0
        %1197 = vmatpush1.bf16.xpose.msra.mxu0 %v1136
        %1198 = vmatprep.subr.bf16.mxu0 0
        %1199 = vmatpush1.bf16.xpose.msra.mxu0 %v1133
        %1200 = vmatprep.subr.bf16.mxu0 0
        %1201 = vmatpush1.bf16.xpose.msra.mxu0 %v1130
        %1202 = vmatprep.subr.bf16.mxu0 0
        %1203 = vmatpush1.bf16.xpose.msra.mxu0 %v1127
        %1204 = vmatprep.subr.bf16.mxu0 0
        %1205 = vmatpush1.bf16.xpose.msra.mxu0 %v1124
        %1206 = vmatprep.subr.bf16.mxu0 0
        %1207 = vmatpush1.bf16.xpose.msra.mxu0 %v1121
        %1208 = vmatprep.subr.bf16.mxu0 0
        %1209 = vmatpush1.bf16.xpose.msra.mxu0 %v1118
        %1210 = vmatprep.subr.bf16.mxu0 0
        %1211 = vmatpush2.bf16.xpose.msra.mxu0 0
        %1212 = vmatprep.subr.bf16.mxu0 0
        %1213 = vmatpush2.bf16.xpose.msra.mxu0 0
        %1214 = vmatprep.subr.bf16.mxu0 0
        %1215 = vmatpush2.bf16.xpose.msra.mxu0 0
        %1216 = vmatprep.subr.bf16.mxu0 0
        %1217 = vmatpush2.bf16.xpose.msra.mxu0 0
        %1218 = vmatprep.subr.bf16.mxu0 0
        %1219 = vmatpush2.bf16.xpose.msra.mxu0 0
        %1220 = vmatprep.subr.bf16.mxu0 0
        %1221 = vmatpush2.bf16.xpose.msra.mxu0 0
        %1222 = vmatprep.subr.bf16.mxu0 0
        %1223 = vmatpush2.bf16.xpose.msra.mxu0 0
        %1224 = vmatprep.subr.bf16.mxu0 0
        %1225 = vmatpush2.bf16.xpose.msra.mxu0 0
        %1226 = vmatprep.mubr.bf16.mxu0 0
        %1227 = vmatmul.mubr.bf16.gmra.mxu0 %v1064
        %v1228 = vpop.f32.mrf.mxu0
        %v1229 = vadd.f32 0.0, %v1228
        %v1230 = vpop.f32.mrf.mxu0
        %v1231 = vpop.f32.mrf.mxu0
        %v1232 = vadd.f32 0.0, %v1231
        %v1233 = vpop.f32.mrf.mxu0
        %1234 = vmatprep.mubr.bf16.mxu0 0
        %1235 = vmatmul.mubr.bf16.gmra.mxu0 %v1067
        %v1236 = vpop.f32.mrf.mxu0
        %v1237 = vadd.f32 0.0, %v1236
        %v1238 = vpop.f32.mrf.mxu0
        %v1239 = vpop.f32.mrf.mxu0
        %v1240 = vadd.f32 0.0, %v1239
        %v1241 = vpop.f32.mrf.mxu0
        %1242 = vdwg.mxu0
        %v1243 = vpack.c.bf16 %v1180, %v1176
        %v1244 = vpack.c.bf16 %v1182, %v1178
        %v1245 = vpack.c.bf16 %v1232, %v1229
        %v1246 = vpack.c.bf16 %v1190, %v1186
        %v1247 = vpack.c.bf16 %v1192, %v1188
        %v1248 = vpack.c.bf16 %v1240, %v1237
        %1249 = vrot.lane.b32.xlu0 %v750, 112
        %v1250 = vpop.permute.xlu0 %1249
        %1251 = vrot.lane.b32.xlu0 %v751, 112
        %v1252 = vpop.permute.xlu0 %1251
        %1253 = vrot.lane.b32.xlu0 %v718, 80
        %v1254 = vpop.permute.xlu0 %1253
        %1255 = vrot.lane.b32.xlu0 %v719, 80
        %v1256 = vpop.permute.xlu0 %1255
        %1257 = vrot.lane.b32.xlu0 %v720, 80
        %v1258 = vpop.permute.xlu0 %1257
        %1259 = vrot.lane.b32.xlu0 %v721, 80
        %v1260 = vpop.permute.xlu0 %1259
        %1261 = vrot.lane.b32.xlu0 %v722, 80
        %v1262 = vpop.permute.xlu0 %1261
        %1263 = vrot.lane.b32.xlu0 %v723, 80
        %v1264 = vpop.permute.xlu0 %1263
        %1265 = vrot.lane.b32.xlu0 %v724, 80
        %v1266 = vpop.permute.xlu0 %1265
        %1267 = vrot.lane.b32.xlu0 %v725, 80
        %v1268 = vpop.permute.xlu0 %1267
        %1269 = vrot.lane.b32.xlu0 %v726, 80
        %v1270 = vpop.permute.xlu0 %1269
        %1271 = vrot.lane.b32.xlu0 %v727, 80
        %v1272 = vpop.permute.xlu0 %1271
        %1273 = vrot.lane.b32.xlu0 %v728, 80
        %v1274 = vpop.permute.xlu0 %1273
        %1275 = vrot.lane.b32.xlu0 %v729, 80
        %v1276 = vpop.permute.xlu0 %1275
        %1277 = vrot.lane.b32.xlu0 %v730, 80
        %v1278 = vpop.permute.xlu0 %1277
        %1279 = vrot.lane.b32.xlu0 %v731, 80
        %v1280 = vpop.permute.xlu0 %1279
        %1281 = vrot.lane.b32.xlu0 %v732, 80
        %v1282 = vpop.permute.xlu0 %1281
        %1283 = vrot.lane.b32.xlu0 %v733, 80
        %v1284 = vpop.permute.xlu0 %1283
        %1285 = vrot.lane.b32.xlu0 %v734, 80
        %v1286 = vpop.permute.xlu0 %1285
        %1287 = vrot.lane.b32.xlu0 %v735, 80
        %v1288 = vpop.permute.xlu0 %1287
        %1289 = vrot.lane.b32.xlu0 %v736, 80
        %v1290 = vpop.permute.xlu0 %1289
        %1291 = vrot.lane.b32.xlu0 %v737, 80
        %v1292 = vpop.permute.xlu0 %1291
        %1293 = vrot.lane.b32.xlu0 %v738, 80
        %v1294 = vpop.permute.xlu0 %1293
        %1295 = vrot.lane.b32.xlu0 %v739, 80
        %v1296 = vpop.permute.xlu0 %1295
        %1297 = vrot.lane.b32.xlu0 %v740, 80
        %v1298 = vpop.permute.xlu0 %1297
        %1299 = vrot.lane.b32.xlu0 %v741, 80
        %v1300 = vpop.permute.xlu0 %1299
        %v1302 = vsel %vm824, %v1250, 0
        %v1305 = vsel %vm824, %v1252, 0
        %v1308 = vsel %vm824, %v1254, 0
        %v1311 = vsel %vm824, %v1256, 0
        %v1314 = vsel %vm824, %v1258, 0
        %v1317 = vsel %vm824, %v1260, 0
        %v1320 = vsel %vm824, %v1262, 0
        %v1323 = vsel %vm824, %v1264, 0
        %v1326 = vsel %vm824, %v1266, 0
        %v1329 = vsel %vm824, %v1268, 0
        %v1332 = vsel %vm824, %v1270, 0
        %v1335 = vsel %vm824, %v1272, 0
        %v1338 = vsel %vm824, %v1274, 0
        %v1341 = vsel %vm824, %v1276, 0
        %v1344 = vsel %vm824, %v1278, 0
        %v1347 = vsel %vm824, %v1280, 0
        %v1350 = vsel %vm824, %v1282, 0
        %v1353 = vsel %vm824, %v1284, 0
        %v1356 = vsel %vm824, %v1286, 0
        %v1359 = vsel %vm824, %v1288, 0
        %v1362 = vsel %vm824, %v1290, 0
        %v1365 = vsel %vm824, %v1292, 0
        %v1368 = vsel %vm824, %v1294, 0
        %v1371 = vsel %vm824, %v1296, 0
        %v1374 = vsel %vm824, %v1298, 0
        %v1377 = vsel %vm824, %v1300, 0
        %1379 = vmatprep.subr.bf16.mxu0 0
        %1380 = vmatpush1.bf16.xpose.msra.mxu0 %v1329
        %1381 = vmatprep.subr.bf16.mxu0 0
        %1382 = vmatpush1.bf16.xpose.msra.mxu0 %v1326
        %1383 = vmatprep.subr.bf16.mxu0 0
        %1384 = vmatpush1.bf16.xpose.msra.mxu0 %v1323
        %1385 = vmatprep.subr.bf16.mxu0 0
        %1386 = vmatpush1.bf16.xpose.msra.mxu0 %v1320
        %1387 = vmatprep.subr.bf16.mxu0 0
        %1388 = vmatpush1.bf16.xpose.msra.mxu0 %v1317
        %1389 = vmatprep.subr.bf16.mxu0 0
        %1390 = vmatpush1.bf16.xpose.msra.mxu0 %v1314
        %1391 = vmatprep.subr.bf16.mxu0 0
        %1392 = vmatpush1.bf16.xpose.msra.mxu0 %v1311
        %1393 = vmatprep.subr.bf16.mxu0 0
        %1394 = vmatpush1.bf16.xpose.msra.mxu0 %v1308
        %1395 = vmatprep.subr.bf16.mxu0 0
        %1396 = vmatpush2.bf16.xpose.msra.mxu0 %v1353
        %1397 = vmatprep.subr.bf16.mxu0 0
        %1398 = vmatpush2.bf16.xpose.msra.mxu0 %v1350
        %1399 = vmatprep.subr.bf16.mxu0 0
        %1400 = vmatpush2.bf16.xpose.msra.mxu0 %v1347
        %1401 = vmatprep.subr.bf16.mxu0 0
        %1402 = vmatpush2.bf16.xpose.msra.mxu0 %v1344
        %1403 = vmatprep.subr.bf16.mxu0 0
        %1404 = vmatpush2.bf16.xpose.msra.mxu0 %v1341
        %1405 = vmatprep.subr.bf16.mxu0 0
        %1406 = vmatpush2.bf16.xpose.msra.mxu0 %v1338
        %1407 = vmatprep.subr.bf16.mxu0 0
        %1408 = vmatpush2.bf16.xpose.msra.mxu0 %v1335
        %1409 = vmatprep.subr.bf16.mxu0 0
        %1410 = vmatpush2.bf16.xpose.msra.mxu0 %v1332
        %1411 = vmatprep.mubr.bf16.mxu0 0
        %1412 = vmatmul.mubr.bf16.gmra.mxu0 %v1302
        %v1413 = vpop.f32.mrf.mxu0
        %v1414 = vadd.f32 0.0, %v1413
        %v1415 = vpop.f32.mrf.mxu0
        %v1416 = vadd.f32 0.0, %v1415
        %v1417 = vpop.f32.mrf.mxu0
        %v1418 = vadd.f32 0.0, %v1417
        %v1419 = vpop.f32.mrf.mxu0
        %v1420 = vadd.f32 0.0, %v1419
        %1421 = vmatprep.mubr.bf16.mxu0 0
        %1422 = vmatmul.mubr.bf16.gmra.mxu0 %v1305
        %v1423 = vpop.f32.mrf.mxu0
        %v1424 = vadd.f32 0.0, %v1423
        %v1425 = vpop.f32.mrf.mxu0
        %v1426 = vadd.f32 0.0, %v1425
        %v1427 = vpop.f32.mrf.mxu0
        %v1428 = vadd.f32 0.0, %v1427
        %v1429 = vpop.f32.mrf.mxu0
        %v1430 = vadd.f32 0.0, %v1429
        %1431 = vdwg.mxu0
        %1432 = vmatprep.subr.bf16.mxu0 0
        %1433 = vmatpush1.bf16.xpose.msra.mxu0 %v1377
        %1434 = vmatprep.subr.bf16.mxu0 0
        %1435 = vmatpush1.bf16.xpose.msra.mxu0 %v1374
        %1436 = vmatprep.subr.bf16.mxu0 0
        %1437 = vmatpush1.bf16.xpose.msra.mxu0 %v1371
        %1438 = vmatprep.subr.bf16.mxu0 0
        %1439 = vmatpush1.bf16.xpose.msra.mxu0 %v1368
        %1440 = vmatprep.subr.bf16.mxu0 0
        %1441 = vmatpush1.bf16.xpose.msra.mxu0 %v1365
        %1442 = vmatprep.subr.bf16.mxu0 0
        %1443 = vmatpush1.bf16.xpose.msra.mxu0 %v1362
        %1444 = vmatprep.subr.bf16.mxu0 0
        %1445 = vmatpush1.bf16.xpose.msra.mxu0 %v1359
        %1446 = vmatprep.subr.bf16.mxu0 0
        %1447 = vmatpush1.bf16.xpose.msra.mxu0 %v1356
        %1448 = vmatprep.subr.bf16.mxu0 0
        %1449 = vmatpush2.bf16.xpose.msra.mxu0 0
        %1450 = vmatprep.subr.bf16.mxu0 0
        %1451 = vmatpush2.bf16.xpose.msra.mxu0 0
        %1452 = vmatprep.subr.bf16.mxu0 0
        %1453 = vmatpush2.bf16.xpose.msra.mxu0 0
        %1454 = vmatprep.subr.bf16.mxu0 0
        %1455 = vmatpush2.bf16.xpose.msra.mxu0 0
        %1456 = vmatprep.subr.bf16.mxu0 0
        %1457 = vmatpush2.bf16.xpose.msra.mxu0 0
        %1458 = vmatprep.subr.bf16.mxu0 0
        %1459 = vmatpush2.bf16.xpose.msra.mxu0 0
        %1460 = vmatprep.subr.bf16.mxu0 0
        %1461 = vmatpush2.bf16.xpose.msra.mxu0 0
        %1462 = vmatprep.subr.bf16.mxu0 0
        %1463 = vmatpush2.bf16.xpose.msra.mxu0 0
        %1464 = vmatprep.mubr.bf16.mxu0 0
        %1465 = vmatmul.mubr.bf16.gmra.mxu0 %v1302
        %v1466 = vpop.f32.mrf.mxu0
        %v1467 = vadd.f32 0.0, %v1466
        %v1468 = vpop.f32.mrf.mxu0
        %v1469 = vpop.f32.mrf.mxu0
        %v1470 = vadd.f32 0.0, %v1469
        %v1471 = vpop.f32.mrf.mxu0
        %1472 = vmatprep.mubr.bf16.mxu0 0
        %1473 = vmatmul.mubr.bf16.gmra.mxu0 %v1305
        %v1474 = vpop.f32.mrf.mxu0
        %v1475 = vadd.f32 0.0, %v1474
        %v1476 = vpop.f32.mrf.mxu0
        %v1477 = vpop.f32.mrf.mxu0
        %v1478 = vadd.f32 0.0, %v1477
        %v1479 = vpop.f32.mrf.mxu0
        %1480 = vdwg.mxu0
        %v1481 = vpack.c.bf16 %v1418, %v1414
        %v1482 = vpack.c.bf16 %v1420, %v1416
        %v1483 = vpack.c.bf16 %v1470, %v1467
        %v1484 = vpack.c.bf16 %v1428, %v1424
        %v1485 = vpack.c.bf16 %v1430, %v1426
        %v1486 = vpack.c.bf16 %v1478, %v1475
        %1487 = vrot.lane.b32.xlu0 %v750, 104
        %v1488 = vpop.permute.xlu0 %1487
        %1489 = vrot.lane.b32.xlu0 %v751, 104
        %v1490 = vpop.permute.xlu0 %1489
        %1491 = vrot.lane.b32.xlu0 %v718, 72
        %v1492 = vpop.permute.xlu0 %1491
        %1493 = vrot.lane.b32.xlu0 %v719, 72
        %v1494 = vpop.permute.xlu0 %1493
        %1495 = vrot.lane.b32.xlu0 %v720, 72
        %v1496 = vpop.permute.xlu0 %1495
        %1497 = vrot.lane.b32.xlu0 %v721, 72
        %v1498 = vpop.permute.xlu0 %1497
        %1499 = vrot.lane.b32.xlu0 %v722, 72
        %v1500 = vpop.permute.xlu0 %1499
        %1501 = vrot.lane.b32.xlu0 %v723, 72
        %v1502 = vpop.permute.xlu0 %1501
        %1503 = vrot.lane.b32.xlu0 %v724, 72
        %v1504 = vpop.permute.xlu0 %1503
        %1505 = vrot.lane.b32.xlu0 %v725, 72
        %v1506 = vpop.permute.xlu0 %1505
        %1507 = vrot.lane.b32.xlu0 %v726, 72
        %v1508 = vpop.permute.xlu0 %1507
        %1509 = vrot.lane.b32.xlu0 %v727, 72
        %v1510 = vpop.permute.xlu0 %1509
        %1511 = vrot.lane.b32.xlu0 %v728, 72
        %v1512 = vpop.permute.xlu0 %1511
        %1513 = vrot.lane.b32.xlu0 %v729, 72
        %v1514 = vpop.permute.xlu0 %1513
        %1515 = vrot.lane.b32.xlu0 %v730, 72
        %v1516 = vpop.permute.xlu0 %1515
        %1517 = vrot.lane.b32.xlu0 %v731, 72
        %v1518 = vpop.permute.xlu0 %1517
        %1519 = vrot.lane.b32.xlu0 %v732, 72
        %v1520 = vpop.permute.xlu0 %1519
        %1521 = vrot.lane.b32.xlu0 %v733, 72
        %v1522 = vpop.permute.xlu0 %1521
        %1523 = vrot.lane.b32.xlu0 %v734, 72
        %v1524 = vpop.permute.xlu0 %1523
        %1525 = vrot.lane.b32.xlu0 %v735, 72
        %v1526 = vpop.permute.xlu0 %1525
        %1527 = vrot.lane.b32.xlu0 %v736, 72
        %v1528 = vpop.permute.xlu0 %1527
        %1529 = vrot.lane.b32.xlu0 %v737, 72
        %v1530 = vpop.permute.xlu0 %1529
        %1531 = vrot.lane.b32.xlu0 %v738, 72
        %v1532 = vpop.permute.xlu0 %1531
        %1533 = vrot.lane.b32.xlu0 %v739, 72
        %v1534 = vpop.permute.xlu0 %1533
        %1535 = vrot.lane.b32.xlu0 %v740, 72
        %v1536 = vpop.permute.xlu0 %1535
        %1537 = vrot.lane.b32.xlu0 %v741, 72
        %v1538 = vpop.permute.xlu0 %1537
        %v1540 = vsel %vm824, %v1488, 0
        %v1543 = vsel %vm824, %v1490, 0
        %v1546 = vsel %vm824, %v1492, 0
        %v1549 = vsel %vm824, %v1494, 0
        %v1552 = vsel %vm824, %v1496, 0
        %v1555 = vsel %vm824, %v1498, 0
        %v1558 = vsel %vm824, %v1500, 0
        %v1561 = vsel %vm824, %v1502, 0
        %v1564 = vsel %vm824, %v1504, 0
        %v1567 = vsel %vm824, %v1506, 0
        %v1570 = vsel %vm824, %v1508, 0
        %v1573 = vsel %vm824, %v1510, 0
        %v1576 = vsel %vm824, %v1512, 0
        %v1579 = vsel %vm824, %v1514, 0
        %v1582 = vsel %vm824, %v1516, 0
        %v1585 = vsel %vm824, %v1518, 0
        %v1588 = vsel %vm824, %v1520, 0
        %v1591 = vsel %vm824, %v1522, 0
        %v1594 = vsel %vm824, %v1524, 0
        %v1597 = vsel %vm824, %v1526, 0
        %v1600 = vsel %vm824, %v1528, 0
        %v1603 = vsel %vm824, %v1530, 0
        %v1606 = vsel %vm824, %v1532, 0
        %v1609 = vsel %vm824, %v1534, 0
        %v1612 = vsel %vm824, %v1536, 0
        %v1615 = vsel %vm824, %v1538, 0
        %1617 = vmatprep.subr.bf16.mxu0 0
        %1618 = vmatpush1.bf16.xpose.msra.mxu0 %v1567
        %1619 = vmatprep.subr.bf16.mxu0 0
        %1620 = vmatpush1.bf16.xpose.msra.mxu0 %v1564
        %1621 = vmatprep.subr.bf16.mxu0 0
        %1622 = vmatpush1.bf16.xpose.msra.mxu0 %v1561
        %1623 = vmatprep.subr.bf16.mxu0 0
        %1624 = vmatpush1.bf16.xpose.msra.mxu0 %v1558
        %1625 = vmatprep.subr.bf16.mxu0 0
        %1626 = vmatpush1.bf16.xpose.msra.mxu0 %v1555
        %1627 = vmatprep.subr.bf16.mxu0 0
        %1628 = vmatpush1.bf16.xpose.msra.mxu0 %v1552
        %1629 = vmatprep.subr.bf16.mxu0 0
        %1630 = vmatpush1.bf16.xpose.msra.mxu0 %v1549
        %1631 = vmatprep.subr.bf16.mxu0 0
        %1632 = vmatpush1.bf16.xpose.msra.mxu0 %v1546
        %1633 = vmatprep.subr.bf16.mxu0 0
        %1634 = vmatpush2.bf16.xpose.msra.mxu0 %v1591
        %1635 = vmatprep.subr.bf16.mxu0 0
        %1636 = vmatpush2.bf16.xpose.msra.mxu0 %v1588
        %1637 = vmatprep.subr.bf16.mxu0 0
        %1638 = vmatpush2.bf16.xpose.msra.mxu0 %v1585
        %1639 = vmatprep.subr.bf16.mxu0 0
        %1640 = vmatpush2.bf16.xpose.msra.mxu0 %v1582
        %1641 = vmatprep.subr.bf16.mxu0 0
        %1642 = vmatpush2.bf16.xpose.msra.mxu0 %v1579
        %1643 = vmatprep.subr.bf16.mxu0 0
        %1644 = vmatpush2.bf16.xpose.msra.mxu0 %v1576
        %1645 = vmatprep.subr.bf16.mxu0 0
        %1646 = vmatpush2.bf16.xpose.msra.mxu0 %v1573
        %1647 = vmatprep.subr.bf16.mxu0 0
        %1648 = vmatpush2.bf16.xpose.msra.mxu0 %v1570
        %1649 = vmatprep.mubr.bf16.mxu0 0
        %1650 = vmatmul.mubr.bf16.gmra.mxu0 %v1540
        %v1651 = vpop.f32.mrf.mxu0
        %v1652 = vadd.f32 0.0, %v1651
        %v1653 = vpop.f32.mrf.mxu0
        %v1654 = vadd.f32 0.0, %v1653
        %v1655 = vpop.f32.mrf.mxu0
        %v1656 = vadd.f32 0.0, %v1655
        %v1657 = vpop.f32.mrf.mxu0
        %v1658 = vadd.f32 0.0, %v1657
        %1659 = vmatprep.mubr.bf16.mxu0 0
        %1660 = vmatmul.mubr.bf16.gmra.mxu0 %v1543
        %v1661 = vpop.f32.mrf.mxu0
        %v1662 = vadd.f32 0.0, %v1661
        %v1663 = vpop.f32.mrf.mxu0
        %v1664 = vadd.f32 0.0, %v1663
        %v1665 = vpop.f32.mrf.mxu0
        %v1666 = vadd.f32 0.0, %v1665
        %v1667 = vpop.f32.mrf.mxu0
        %v1668 = vadd.f32 0.0, %v1667
        %1669 = vdwg.mxu0
        %1670 = vmatprep.subr.bf16.mxu0 0
        %1671 = vmatpush1.bf16.xpose.msra.mxu0 %v1615
        %1672 = vmatprep.subr.bf16.mxu0 0
        %1673 = vmatpush1.bf16.xpose.msra.mxu0 %v1612
        %1674 = vmatprep.subr.bf16.mxu0 0
        %1675 = vmatpush1.bf16.xpose.msra.mxu0 %v1609
        %1676 = vmatprep.subr.bf16.mxu0 0
        %1677 = vmatpush1.bf16.xpose.msra.mxu0 %v1606
        %1678 = vmatprep.subr.bf16.mxu0 0
        %1679 = vmatpush1.bf16.xpose.msra.mxu0 %v1603
        %1680 = vmatprep.subr.bf16.mxu0 0
        %1681 = vmatpush1.bf16.xpose.msra.mxu0 %v1600
        %1682 = vmatprep.subr.bf16.mxu0 0
        %1683 = vmatpush1.bf16.xpose.msra.mxu0 %v1597
        %1684 = vmatprep.subr.bf16.mxu0 0
        %1685 = vmatpush1.bf16.xpose.msra.mxu0 %v1594
        %1686 = vmatprep.subr.bf16.mxu0 0
        %1687 = vmatpush2.bf16.xpose.msra.mxu0 0
        %1688 = vmatprep.subr.bf16.mxu0 0
        %1689 = vmatpush2.bf16.xpose.msra.mxu0 0
        %1690 = vmatprep.subr.bf16.mxu0 0
        %1691 = vmatpush2.bf16.xpose.msra.mxu0 0
        %1692 = vmatprep.subr.bf16.mxu0 0
        %1693 = vmatpush2.bf16.xpose.msra.mxu0 0
        %1694 = vmatprep.subr.bf16.mxu0 0
        %1695 = vmatpush2.bf16.xpose.msra.mxu0 0
        %1696 = vmatprep.subr.bf16.mxu0 0
        %1697 = vmatpush2.bf16.xpose.msra.mxu0 0
        %1698 = vmatprep.subr.bf16.mxu0 0
        %1699 = vmatpush2.bf16.xpose.msra.mxu0 0
        %1700 = vmatprep.subr.bf16.mxu0 0
        %1701 = vmatpush2.bf16.xpose.msra.mxu0 0
        %1702 = vmatprep.mubr.bf16.mxu0 0
        %1703 = vmatmul.mubr.bf16.gmra.mxu0 %v1540
        %v1704 = vpop.f32.mrf.mxu0
        %v1705 = vadd.f32 0.0, %v1704
        %v1706 = vpop.f32.mrf.mxu0
        %v1707 = vpop.f32.mrf.mxu0
        %v1708 = vadd.f32 0.0, %v1707
        %v1709 = vpop.f32.mrf.mxu0
        %1710 = vmatprep.mubr.bf16.mxu0 0
        %1711 = vmatmul.mubr.bf16.gmra.mxu0 %v1543
        %v1712 = vpop.f32.mrf.mxu0
        %v1713 = vadd.f32 0.0, %v1712
        %v1714 = vpop.f32.mrf.mxu0
        %v1715 = vpop.f32.mrf.mxu0
        %v1716 = vadd.f32 0.0, %v1715
        %v1717 = vpop.f32.mrf.mxu0
        %1718 = vdwg.mxu0
        %v1719 = vpack.c.bf16 %v1656, %v1652
        %v1720 = vpack.c.bf16 %v1658, %v1654
        %v1721 = vpack.c.bf16 %v1708, %v1705
        %v1722 = vpack.c.bf16 %v1666, %v1662
        %v1723 = vpack.c.bf16 %v1668, %v1664
        %v1724 = vpack.c.bf16 %v1716, %v1713
        %v1725 = vld [vmem:[%s222] sm:$0xf]
        %v1726 = vld [vmem:[%s222 + $0x4] sm:$0xf]
        %v1727 = vld [vmem:[%s222 + $0x8] sm:$0xf]
        %v1728 = vld [vmem:[%s222 + $0xc] sm:$0xf]
        %v1729 = vld [vmem:[%s222 + $0x10] sm:$0xf]
        %v1730 = vld [vmem:[%s222 + $0x14] sm:$0xf]
        %v1731 = vld [vmem:[%s222 + $0x18] sm:$0xf]
        %v1732 = vld [vmem:[%s222 + $0x1c] sm:$0xf]
        %v1733 = vld [vmem:[%s222 + $0x20] sm:$0xf]
        %v1734 = vld [vmem:[%s222 + $0x24] sm:$0xf]
        %v1735 = vld [vmem:[%s222 + $0x28] sm:$0xf]
        %v1736 = vld [vmem:[%s222 + $0x2c] sm:$0xf]
        %v1737 = vld [vmem:[%s222 + $0x30] sm:$0xf]
        %v1738 = vld [vmem:[%s222 + $0x34] sm:$0xf]
        %v1739 = vld [vmem:[%s222 + $0x38] sm:$0xf]
        %v1740 = vld [vmem:[%s222 + $0x3c] sm:$0xf]
        %v1757 = vunpack.c.l.b16 %v1725
        %v1758 = vunpack.c.l.b16 %v1726
        %v1759 = vunpack.c.l.b16 %v1727
        %v1760 = vunpack.c.l.b16 %v1728
        %v1761 = vunpack.c.l.b16 %v1729
        %v1762 = vunpack.c.l.b16 %v1730
        %v1763 = vunpack.c.l.b16 %v1731
        %v1764 = vunpack.c.l.b16 %v1732
        %v1765 = vunpack.c.l.b16 %v1733
        %v1766 = vunpack.c.l.b16 %v1734
        %v1767 = vunpack.c.l.b16 %v1735
        %v1768 = vunpack.c.l.b16 %v1736
        %v1769 = vunpack.c.l.b16 %v1737
        %v1770 = vunpack.c.l.b16 %v1738
        %v1771 = vunpack.c.l.b16 %v1739
        %v1772 = vunpack.c.l.b16 %v1740
        %v1773 = vpack.c.b16 %v1758, %v1757
        %v1774 = vpack.c.b16 %v1760, %v1759
        %v1775 = vpack.c.b16 %v1762, %v1761
        %v1776 = vpack.c.b16 %v1764, %v1763
        %v1777 = vpack.c.b16 %v1766, %v1765
        %v1778 = vpack.c.b16 %v1768, %v1767
        %v1779 = vpack.c.b16 %v1770, %v1769
        %v1780 = vpack.c.b16 %v1772, %v1771
        %v1785 = vunpack.c.l.b16 %v272
        %v1786 = vunpack.c.l.b16 %v273
        %v1787 = vunpack.c.l.b16 %v274
        %v1788 = vunpack.c.l.b16 %v275
        %v1789 = vpack.c.b16 %v1786, %v1785
        %v1790 = vpack.c.b16 %v1788, %v1787
        %v1794 = vsel %vm420, %v1773, 0
        %v1797 = vsel %vm420, %v1774, 0
        %v1800 = vsel %vm420, %v1775, 0
        %v1803 = vsel %vm420, %v1776, 0
        %v1806 = vsel %vm420, %v1777, 0
        %v1809 = vsel %vm420, %v1778, 0
        %v1812 = vsel %vm420, %v1779, 0
        %v1815 = vsel %vm420, %v1780, 0
        %1817 = vmatprep.subr.bf16.mxu0 0
        %1818 = vmatpush1.bf16.msra.mxu0 0
        %1819 = vmatprep.subr.bf16.mxu0 0
        %1820 = vmatpush1.bf16.msra.mxu0 0
        %1821 = vmatprep.subr.bf16.mxu0 0
        %1822 = vmatpush1.bf16.msra.mxu0 0
        %1823 = vmatprep.subr.bf16.mxu0 0
        %1824 = vmatpush1.bf16.msra.mxu0 0
        %1825 = vmatprep.subr.bf16.mxu0 0
        %1826 = vmatpush1.bf16.msra.mxu0 0
        %1827 = vmatprep.subr.bf16.mxu0 0
        %1828 = vmatpush1.bf16.msra.mxu0 0
        %1829 = vmatprep.subr.bf16.mxu0 0
        %1830 = vmatpush1.bf16.msra.mxu0 %v1790
        %1831 = vmatprep.subr.bf16.mxu0 0
        %1832 = vmatpush1.bf16.msra.mxu0 %v1789
        %1833 = vmatprep.subr.bf16.mxu0 0
        %1834 = vmatpush2.bf16.msra.mxu0 0
        %1835 = vmatprep.subr.bf16.mxu0 0
        %1836 = vmatpush2.bf16.msra.mxu0 0
        %1837 = vmatprep.subr.bf16.mxu0 0
        %1838 = vmatpush2.bf16.msra.mxu0 0
        %1839 = vmatprep.subr.bf16.mxu0 0
        %1840 = vmatpush2.bf16.msra.mxu0 0
        %1841 = vmatprep.subr.bf16.mxu0 0
        %1842 = vmatpush2.bf16.msra.mxu0 0
        %1843 = vmatprep.subr.bf16.mxu0 0
        %1844 = vmatpush2.bf16.msra.mxu0 0
        %1845 = vmatprep.subr.bf16.mxu0 0
        %1846 = vmatpush2.bf16.msra.mxu0 0
        %1847 = vmatprep.subr.bf16.mxu0 0
        %1848 = vmatpush2.bf16.msra.mxu0 0
        %1849 = vmatprep.mubr.bf16.mxu0 0
        %1850 = vmatmul.mubr.bf16.gmra.mxu0 %v1794
        %v1851 = vpop.f32.mrf.mxu0
        %v1852 = vadd.f32 0.0, %v1851
        %v1853 = vpop.f32.mrf.mxu0
        %v1854 = vpop.f32.mrf.mxu0
        %v1855 = vadd.f32 0.0, %v1854
        %v1856 = vpop.f32.mrf.mxu0
        %1857 = vmatprep.mubr.bf16.mxu0 0
        %1858 = vmatmul.mubr.bf16.gmra.mxu0 %v1797
        %v1859 = vpop.f32.mrf.mxu0
        %v1860 = vadd.f32 0.0, %v1859
        %v1861 = vpop.f32.mrf.mxu0
        %v1862 = vpop.f32.mrf.mxu0
        %v1863 = vadd.f32 0.0, %v1862
        %v1864 = vpop.f32.mrf.mxu0
        %1865 = vmatprep.mubr.bf16.mxu0 0
        %1866 = vmatmul.mubr.bf16.gmra.mxu0 %v1800
        %v1867 = vpop.f32.mrf.mxu0
        %v1868 = vadd.f32 0.0, %v1867
        %v1869 = vpop.f32.mrf.mxu0
        %v1870 = vpop.f32.mrf.mxu0
        %v1871 = vadd.f32 0.0, %v1870
        %v1872 = vpop.f32.mrf.mxu0
        %1873 = vmatprep.mubr.bf16.mxu0 0
        %1874 = vmatmul.mubr.bf16.gmra.mxu0 %v1803
        %v1875 = vpop.f32.mrf.mxu0
        %v1876 = vadd.f32 0.0, %v1875
        %v1877 = vpop.f32.mrf.mxu0
        %v1878 = vpop.f32.mrf.mxu0
        %v1879 = vadd.f32 0.0, %v1878
        %v1880 = vpop.f32.mrf.mxu0
        %1881 = vmatprep.mubr.bf16.mxu0 0
        %1882 = vmatmul.mubr.bf16.gmra.mxu0 %v1806
        %v1883 = vpop.f32.mrf.mxu0
        %v1884 = vadd.f32 0.0, %v1883
        %v1885 = vpop.f32.mrf.mxu0
        %v1886 = vpop.f32.mrf.mxu0
        %v1887 = vadd.f32 0.0, %v1886
        %v1888 = vpop.f32.mrf.mxu0
        %1889 = vmatprep.mubr.bf16.mxu0 0
        %1890 = vmatmul.mubr.bf16.gmra.mxu0 %v1809
        %v1891 = vpop.f32.mrf.mxu0
        %v1892 = vadd.f32 0.0, %v1891
        %v1893 = vpop.f32.mrf.mxu0
        %v1894 = vpop.f32.mrf.mxu0
        %v1895 = vadd.f32 0.0, %v1894
        %v1896 = vpop.f32.mrf.mxu0
        %1897 = vmatprep.mubr.bf16.mxu0 0
        %1898 = vmatmul.mubr.bf16.gmra.mxu0 %v1812
        %v1899 = vpop.f32.mrf.mxu0
        %v1900 = vadd.f32 0.0, %v1899
        %v1901 = vpop.f32.mrf.mxu0
        %v1902 = vpop.f32.mrf.mxu0
        %v1903 = vadd.f32 0.0, %v1902
        %v1904 = vpop.f32.mrf.mxu0
        %1905 = vmatprep.mubr.bf16.mxu0 0
        %1906 = vmatmul.mubr.bf16.gmra.mxu0 %v1815
        %v1907 = vpop.f32.mrf.mxu0
        %v1908 = vadd.f32 0.0, %v1907
        %v1909 = vpop.f32.mrf.mxu0
        %v1910 = vpop.f32.mrf.mxu0
        %v1911 = vadd.f32 0.0, %v1910
        %v1912 = vpop.f32.mrf.mxu0
        %1913 = vdwg.mxu0
        %v1914 = vmul.f32 %v1852, 0.35355338
        %v1915 = vmul.f32 %v1855, 0.35355338
        %v1916 = vmul.f32 %v1860, 0.35355338
        %v1917 = vmul.f32 %v1863, 0.35355338
        %v1918 = vmul.f32 %v1868, 0.35355338
        %v1919 = vmul.f32 %v1871, 0.35355338
        %v1920 = vmul.f32 %v1876, 0.35355338
        %v1921 = vmul.f32 %v1879, 0.35355338
        %v1922 = vmul.f32 %v1884, 0.35355338
        %v1923 = vmul.f32 %v1887, 0.35355338
        %v1924 = vmul.f32 %v1892, 0.35355338
        %v1925 = vmul.f32 %v1895, 0.35355338
        %v1926 = vmul.f32 %v1900, 0.35355338
        %v1927 = vmul.f32 %v1903, 0.35355338
        %v1928 = vmul.f32 %v1908, 0.35355338
        %v1929 = vmul.f32 %v1911, 0.35355338
        %v1930 = vpack.c.bf16 %v1915, %v1914
        %v1931 = vpack.c.bf16 %v1917, %v1916
        %v1932 = vpack.c.bf16 %v1919, %v1918
        %v1933 = vpack.c.bf16 %v1921, %v1920
        %v1934 = vpack.c.bf16 %v1923, %v1922
        %v1935 = vpack.c.bf16 %v1925, %v1924
        %v1936 = vpack.c.bf16 %v1927, %v1926
        %v1937 = vpack.c.bf16 %v1929, %v1928
        %v1939 = vsel %vm824, %v1930, 0
        %v1942 = vsel %vm824, %v1931, 0
        %v1945 = vsel %vm824, %v1932, 0
        %v1948 = vsel %vm824, %v1933, 0
        %v1951 = vsel %vm824, %v1934, 0
        %v1954 = vsel %vm824, %v1935, 0
        %v1957 = vsel %vm824, %v1936, 0
        %v1960 = vsel %vm824, %v1937, 0
        %v1963 = vsel %vm824, %v718, 0
        %v1966 = vsel %vm824, %v719, 0
        %v1969 = vsel %vm824, %v720, 0
        %v1972 = vsel %vm824, %v721, 0
        %v1975 = vsel %vm824, %v722, 0
        %v1978 = vsel %vm824, %v723, 0
        %v1981 = vsel %vm824, %v724, 0
        %v1984 = vsel %vm824, %v725, 0
        %v1987 = vsel %vm824, %v726, 0
        %v1990 = vsel %vm824, %v727, 0
        %v1993 = vsel %vm824, %v728, 0
        %v1996 = vsel %vm824, %v729, 0
        %v1999 = vsel %vm824, %v730, 0
        %v2002 = vsel %vm824, %v731, 0
        %v2005 = vsel %vm824, %v732, 0
        %v2008 = vsel %vm824, %v733, 0
        %v2011 = vsel %vm824, %v734, 0
        %v2014 = vsel %vm824, %v735, 0
        %v2017 = vsel %vm824, %v736, 0
        %v2020 = vsel %vm824, %v737, 0
        %v2023 = vsel %vm824, %v738, 0
        %v2026 = vsel %vm824, %v739, 0
        %v2029 = vsel %vm824, %v740, 0
        %v2032 = vsel %vm824, %v741, 0
        %2034 = vmatprep.subr.bf16.mxu0 0
        %2035 = vmatpush1.bf16.xpose.msra.mxu0 %v1984
        %2036 = vmatprep.subr.bf16.mxu0 0
        %2037 = vmatpush1.bf16.xpose.msra.mxu0 %v1981
        %2038 = vmatprep.subr.bf16.mxu0 0
        %2039 = vmatpush1.bf16.xpose.msra.mxu0 %v1978
        %2040 = vmatprep.subr.bf16.mxu0 0
        %2041 = vmatpush1.bf16.xpose.msra.mxu0 %v1975
        %2042 = vmatprep.subr.bf16.mxu0 0
        %2043 = vmatpush1.bf16.xpose.msra.mxu0 %v1972
        %2044 = vmatprep.subr.bf16.mxu0 0
        %2045 = vmatpush1.bf16.xpose.msra.mxu0 %v1969
        %2046 = vmatprep.subr.bf16.mxu0 0
        %2047 = vmatpush1.bf16.xpose.msra.mxu0 %v1966
        %2048 = vmatprep.subr.bf16.mxu0 0
        %2049 = vmatpush1.bf16.xpose.msra.mxu0 %v1963
        %2050 = vmatprep.subr.bf16.mxu0 0
        %2051 = vmatpush2.bf16.xpose.msra.mxu0 %v2008
        %2052 = vmatprep.subr.bf16.mxu0 0
        %2053 = vmatpush2.bf16.xpose.msra.mxu0 %v2005
        %2054 = vmatprep.subr.bf16.mxu0 0
        %2055 = vmatpush2.bf16.xpose.msra.mxu0 %v2002
        %2056 = vmatprep.subr.bf16.mxu0 0
        %2057 = vmatpush2.bf16.xpose.msra.mxu0 %v1999
        %2058 = vmatprep.subr.bf16.mxu0 0
        %2059 = vmatpush2.bf16.xpose.msra.mxu0 %v1996
        %2060 = vmatprep.subr.bf16.mxu0 0
        %2061 = vmatpush2.bf16.xpose.msra.mxu0 %v1993
        %2062 = vmatprep.subr.bf16.mxu0 0
        %2063 = vmatpush2.bf16.xpose.msra.mxu0 %v1990
        %2064 = vmatprep.subr.bf16.mxu0 0
        %2065 = vmatpush2.bf16.xpose.msra.mxu0 %v1987
        %2066 = vmatprep.mubr.bf16.mxu0 0
        %2067 = vmatmul.mubr.bf16.gmra.mxu0 %v1939
        %v2068 = vpop.f32.mrf.mxu0
        %v2069 = vadd.f32 0.0, %v2068
        %v2070 = vpop.f32.mrf.mxu0
        %v2071 = vadd.f32 0.0, %v2070
        %v2072 = vpop.f32.mrf.mxu0
        %v2073 = vadd.f32 0.0, %v2072
        %v2074 = vpop.f32.mrf.mxu0
        %v2075 = vadd.f32 0.0, %v2074
        %2076 = vmatprep.mubr.bf16.mxu0 0
        %2077 = vmatmul.mubr.bf16.gmra.mxu0 %v1942
        %v2078 = vpop.f32.mrf.mxu0
        %v2079 = vadd.f32 0.0, %v2078
        %v2080 = vpop.f32.mrf.mxu0
        %v2081 = vadd.f32 0.0, %v2080
        %v2082 = vpop.f32.mrf.mxu0
        %v2083 = vadd.f32 0.0, %v2082
        %v2084 = vpop.f32.mrf.mxu0
        %v2085 = vadd.f32 0.0, %v2084
        %2086 = vmatprep.mubr.bf16.mxu0 0
        %2087 = vmatmul.mubr.bf16.gmra.mxu0 %v1945
        %v2088 = vpop.f32.mrf.mxu0
        %v2089 = vadd.f32 0.0, %v2088
        %v2090 = vpop.f32.mrf.mxu0
        %v2091 = vadd.f32 0.0, %v2090
        %v2092 = vpop.f32.mrf.mxu0
        %v2093 = vadd.f32 0.0, %v2092
        %v2094 = vpop.f32.mrf.mxu0
        %v2095 = vadd.f32 0.0, %v2094
        %2096 = vmatprep.mubr.bf16.mxu0 0
        %2097 = vmatmul.mubr.bf16.gmra.mxu0 %v1948
        %v2098 = vpop.f32.mrf.mxu0
        %v2099 = vadd.f32 0.0, %v2098
        %v2100 = vpop.f32.mrf.mxu0
        %v2101 = vadd.f32 0.0, %v2100
        %v2102 = vpop.f32.mrf.mxu0
        %v2103 = vadd.f32 0.0, %v2102
        %v2104 = vpop.f32.mrf.mxu0
        %v2105 = vadd.f32 0.0, %v2104
        %2106 = vmatprep.mubr.bf16.mxu0 0
        %2107 = vmatmul.mubr.bf16.gmra.mxu0 %v1951
        %v2108 = vpop.f32.mrf.mxu0
        %v2109 = vadd.f32 0.0, %v2108
        %v2110 = vpop.f32.mrf.mxu0
        %v2111 = vadd.f32 0.0, %v2110
        %v2112 = vpop.f32.mrf.mxu0
        %v2113 = vadd.f32 0.0, %v2112
        %v2114 = vpop.f32.mrf.mxu0
        %v2115 = vadd.f32 0.0, %v2114
        %2116 = vmatprep.mubr.bf16.mxu0 0
        %2117 = vmatmul.mubr.bf16.gmra.mxu0 %v1954
        %v2118 = vpop.f32.mrf.mxu0
        %v2119 = vadd.f32 0.0, %v2118
        %v2120 = vpop.f32.mrf.mxu0
        %v2121 = vadd.f32 0.0, %v2120
        %v2122 = vpop.f32.mrf.mxu0
        %v2123 = vadd.f32 0.0, %v2122
        %v2124 = vpop.f32.mrf.mxu0
        %v2125 = vadd.f32 0.0, %v2124
        %2126 = vmatprep.mubr.bf16.mxu0 0
        %2127 = vmatmul.mubr.bf16.gmra.mxu0 %v1957
        %v2128 = vpop.f32.mrf.mxu0
        %v2129 = vadd.f32 0.0, %v2128
        %v2130 = vpop.f32.mrf.mxu0
        %v2131 = vadd.f32 0.0, %v2130
        %v2132 = vpop.f32.mrf.mxu0
        %v2133 = vadd.f32 0.0, %v2132
        %v2134 = vpop.f32.mrf.mxu0
        %v2135 = vadd.f32 0.0, %v2134
        %2136 = vmatprep.mubr.bf16.mxu0 0
        %2137 = vmatmul.mubr.bf16.gmra.mxu0 %v1960
        %v2138 = vpop.f32.mrf.mxu0
        %v2139 = vadd.f32 0.0, %v2138
        %v2140 = vpop.f32.mrf.mxu0
        %v2141 = vadd.f32 0.0, %v2140
        %v2142 = vpop.f32.mrf.mxu0
        %v2143 = vadd.f32 0.0, %v2142
        %v2144 = vpop.f32.mrf.mxu0
        %v2145 = vadd.f32 0.0, %v2144
        %2146 = vdwg.mxu0
        %2147 = vmatprep.subr.bf16.mxu0 0
        %2148 = vmatpush1.bf16.xpose.msra.mxu0 %v2032
        %2149 = vmatprep.subr.bf16.mxu0 0
        %2150 = vmatpush1.bf16.xpose.msra.mxu0 %v2029
        %2151 = vmatprep.subr.bf16.mxu0 0
        %2152 = vmatpush1.bf16.xpose.msra.mxu0 %v2026
        %2153 = vmatprep.subr.bf16.mxu0 0
        %2154 = vmatpush1.bf16.xpose.msra.mxu0 %v2023
        %2155 = vmatprep.subr.bf16.mxu0 0
        %2156 = vmatpush1.bf16.xpose.msra.mxu0 %v2020
        %2157 = vmatprep.subr.bf16.mxu0 0
        %2158 = vmatpush1.bf16.xpose.msra.mxu0 %v2017
        %2159 = vmatprep.subr.bf16.mxu0 0
        %2160 = vmatpush1.bf16.xpose.msra.mxu0 %v2014
        %2161 = vmatprep.subr.bf16.mxu0 0
        %2162 = vmatpush1.bf16.xpose.msra.mxu0 %v2011
        %2163 = vmatprep.subr.bf16.mxu0 0
        %2164 = vmatpush2.bf16.xpose.msra.mxu0 0
        %2165 = vmatprep.subr.bf16.mxu0 0
        %2166 = vmatpush2.bf16.xpose.msra.mxu0 0
        %2167 = vmatprep.subr.bf16.mxu0 0
        %2168 = vmatpush2.bf16.xpose.msra.mxu0 0
        %2169 = vmatprep.subr.bf16.mxu0 0
        %2170 = vmatpush2.bf16.xpose.msra.mxu0 0
        %2171 = vmatprep.subr.bf16.mxu0 0
        %2172 = vmatpush2.bf16.xpose.msra.mxu0 0
        %2173 = vmatprep.subr.bf16.mxu0 0
        %2174 = vmatpush2.bf16.xpose.msra.mxu0 0
        %2175 = vmatprep.subr.bf16.mxu0 0
        %2176 = vmatpush2.bf16.xpose.msra.mxu0 0
        %2177 = vmatprep.subr.bf16.mxu0 0
        %2178 = vmatpush2.bf16.xpose.msra.mxu0 0
        %2179 = vmatprep.mubr.bf16.mxu0 0
        %2180 = vmatmul.mubr.bf16.gmra.mxu0 %v1939
        %v2181 = vpop.f32.mrf.mxu0
        %v2182 = vadd.f32 0.0, %v2181
        %v2183 = vpop.f32.mrf.mxu0
        %v2184 = vpop.f32.mrf.mxu0
        %v2185 = vadd.f32 0.0, %v2184
        %v2186 = vpop.f32.mrf.mxu0
        %2187 = vmatprep.mubr.bf16.mxu0 0
        %2188 = vmatmul.mubr.bf16.gmra.mxu0 %v1942
        %v2189 = vpop.f32.mrf.mxu0
        %v2190 = vadd.f32 0.0, %v2189
        %v2191 = vpop.f32.mrf.mxu0
        %v2192 = vpop.f32.mrf.mxu0
        %v2193 = vadd.f32 0.0, %v2192
        %v2194 = vpop.f32.mrf.mxu0
        %2195 = vmatprep.mubr.bf16.mxu0 0
        %2196 = vmatmul.mubr.bf16.gmra.mxu0 %v1945
        %v2197 = vpop.f32.mrf.mxu0
        %v2198 = vadd.f32 0.0, %v2197
        %v2199 = vpop.f32.mrf.mxu0
        %v2200 = vpop.f32.mrf.mxu0
        %v2201 = vadd.f32 0.0, %v2200
        %v2202 = vpop.f32.mrf.mxu0
        %2203 = vmatprep.mubr.bf16.mxu0 0
        %2204 = vmatmul.mubr.bf16.gmra.mxu0 %v1948
        %v2205 = vpop.f32.mrf.mxu0
        %v2206 = vadd.f32 0.0, %v2205
        %v2207 = vpop.f32.mrf.mxu0
        %v2208 = vpop.f32.mrf.mxu0
        %v2209 = vadd.f32 0.0, %v2208
        %v2210 = vpop.f32.mrf.mxu0
        %2211 = vmatprep.mubr.bf16.mxu0 0
        %2212 = vmatmul.mubr.bf16.gmra.mxu0 %v1951
        %v2213 = vpop.f32.mrf.mxu0
        %v2214 = vadd.f32 0.0, %v2213
        %v2215 = vpop.f32.mrf.mxu0
        %v2216 = vpop.f32.mrf.mxu0
        %v2217 = vadd.f32 0.0, %v2216
        %v2218 = vpop.f32.mrf.mxu0
        %2219 = vmatprep.mubr.bf16.mxu0 0
        %2220 = vmatmul.mubr.bf16.gmra.mxu0 %v1954
        %v2221 = vpop.f32.mrf.mxu0
        %v2222 = vadd.f32 0.0, %v2221
        %v2223 = vpop.f32.mrf.mxu0
        %v2224 = vpop.f32.mrf.mxu0
        %v2225 = vadd.f32 0.0, %v2224
        %v2226 = vpop.f32.mrf.mxu0
        %2227 = vmatprep.mubr.bf16.mxu0 0
        %2228 = vmatmul.mubr.bf16.gmra.mxu0 %v1957
        %v2229 = vpop.f32.mrf.mxu0
        %v2230 = vadd.f32 0.0, %v2229
        %v2231 = vpop.f32.mrf.mxu0
        %v2232 = vpop.f32.mrf.mxu0
        %v2233 = vadd.f32 0.0, %v2232
        %v2234 = vpop.f32.mrf.mxu0
        %2235 = vmatprep.mubr.bf16.mxu0 0
        %2236 = vmatmul.mubr.bf16.gmra.mxu0 %v1960
        %v2237 = vpop.f32.mrf.mxu0
        %v2238 = vadd.f32 0.0, %v2237
        %v2239 = vpop.f32.mrf.mxu0
        %v2240 = vpop.f32.mrf.mxu0
        %v2241 = vadd.f32 0.0, %v2240
        %v2242 = vpop.f32.mrf.mxu0
        %2243 = vdwg.mxu0
        %v2244 = vadd.f32 %v2069, %v287
        %v2245 = vadd.f32 %v2073, %v287
        %v2246 = vadd.f32 %v2079, %v287
        %v2247 = vadd.f32 %v2083, %v287
        %v2248 = vadd.f32 %v2089, %v287
        %v2249 = vadd.f32 %v2093, %v287
        %v2250 = vadd.f32 %v2099, %v287
        %v2251 = vadd.f32 %v2103, %v287
        %v2252 = vadd.f32 %v2109, %v287
        %v2253 = vadd.f32 %v2113, %v287
        %v2254 = vadd.f32 %v2119, %v287
        %v2255 = vadd.f32 %v2123, %v287
        %v2256 = vadd.f32 %v2129, %v287
        %v2257 = vadd.f32 %v2133, %v287
        %v2258 = vadd.f32 %v2139, %v287
        %v2259 = vadd.f32 %v2143, %v287
        %2260 = vmax.xlane.f32.xlu0 %v2244
        %v2261 = vpop.xlane.xlu0 %2260
        %2262 = vmax.xlane.f32.xlu0 %v2245
        %v2263 = vpop.xlane.xlu0 %2262
        %2264 = vmax.xlane.f32.xlu0 %v2246
        %v2265 = vpop.xlane.xlu0 %2264
        %2266 = vmax.xlane.f32.xlu0 %v2247
        %v2267 = vpop.xlane.xlu0 %2266
        %2268 = vmax.xlane.f32.xlu0 %v2248
        %v2269 = vpop.xlane.xlu0 %2268
        %2270 = vmax.xlane.f32.xlu0 %v2249
        %v2271 = vpop.xlane.xlu0 %2270
        %2272 = vmax.xlane.f32.xlu0 %v2250
        %v2273 = vpop.xlane.xlu0 %2272
        %2274 = vmax.xlane.f32.xlu0 %v2251
        %v2275 = vpop.xlane.xlu0 %2274
        %2276 = vmax.xlane.f32.xlu0 %v2252
        %v2277 = vpop.xlane.xlu0 %2276
        %2278 = vmax.xlane.f32.xlu0 %v2253
        %v2279 = vpop.xlane.xlu0 %2278
        %2280 = vmax.xlane.f32.xlu0 %v2254
        %v2281 = vpop.xlane.xlu0 %2280
        %2282 = vmax.xlane.f32.xlu0 %v2255
        %v2283 = vpop.xlane.xlu0 %2282
        %2284 = vmax.xlane.f32.xlu0 %v2256
        %v2285 = vpop.xlane.xlu0 %2284
        %2286 = vmax.xlane.f32.xlu0 %v2257
        %v2287 = vpop.xlane.xlu0 %2286
        %2288 = vmax.xlane.f32.xlu0 %v2258
        %v2289 = vpop.xlane.xlu0 %2288
        %2290 = vmax.xlane.f32.xlu0 %v2259
        %v2291 = vpop.xlane.xlu0 %2290
        %v2292 = vsub.f32 %v2244, %v2261
        %v2293 = vsub.f32 %v2245, %v2263
        %v2294 = vsub.f32 %v2246, %v2265
        %v2295 = vsub.f32 %v2247, %v2267
        %v2296 = vsub.f32 %v2248, %v2269
        %v2297 = vsub.f32 %v2249, %v2271
        %v2298 = vsub.f32 %v2250, %v2273
        %v2299 = vsub.f32 %v2251, %v2275
        %v2300 = vsub.f32 %v2252, %v2277
        %v2301 = vsub.f32 %v2253, %v2279
        %v2302 = vsub.f32 %v2254, %v2281
        %v2303 = vsub.f32 %v2255, %v2283
        %v2304 = vsub.f32 %v2256, %v2285
        %v2305 = vsub.f32 %v2257, %v2287
        %v2306 = vsub.f32 %v2258, %v2289
        %v2307 = vsub.f32 %v2259, %v2291
        %v2308 = vmul.f32 %v2292, 1.442695
        %v2309 = vpow.pop %v2308
        %v2310 = vmul.f32 %v2293, 1.442695
        %v2311 = vpow.pop %v2310
        %v2312 = vmul.f32 %v2294, 1.442695
        %v2313 = vpow.pop %v2312
        %v2314 = vmul.f32 %v2295, 1.442695
        %v2315 = vpow.pop %v2314
        %v2316 = vmul.f32 %v2296, 1.442695
        %v2317 = vpow.pop %v2316
        %v2318 = vmul.f32 %v2297, 1.442695
        %v2319 = vpow.pop %v2318
        %v2320 = vmul.f32 %v2298, 1.442695
        %v2321 = vpow.pop %v2320
        %v2322 = vmul.f32 %v2299, 1.442695
        %v2323 = vpow.pop %v2322
        %v2324 = vmul.f32 %v2300, 1.442695
        %v2325 = vpow.pop %v2324
        %v2326 = vmul.f32 %v2301, 1.442695
        %v2327 = vpow.pop %v2326
        %v2328 = vmul.f32 %v2302, 1.442695
        %v2329 = vpow.pop %v2328
        %v2330 = vmul.f32 %v2303, 1.442695
        %v2331 = vpow.pop %v2330
        %v2332 = vmul.f32 %v2304, 1.442695
        %v2333 = vpow.pop %v2332
        %v2334 = vmul.f32 %v2305, 1.442695
        %v2335 = vpow.pop %v2334
        %v2336 = vmul.f32 %v2306, 1.442695
        %v2337 = vpow.pop %v2336
        %v2338 = vmul.f32 %v2307, 1.442695
        %v2339 = vpow.pop %v2338
        %2340 = vadd.xlane.f32.xlu0 %v2309
        %v2341 = vpop.xlane.xlu0 %2340
        %2342 = vadd.xlane.f32.xlu0 %v2311
        %v2343 = vpop.xlane.xlu0 %2342
        %2344 = vadd.xlane.f32.xlu0 %v2313
        %v2345 = vpop.xlane.xlu0 %2344
        %2346 = vadd.xlane.f32.xlu0 %v2315
        %v2347 = vpop.xlane.xlu0 %2346
        %2348 = vadd.xlane.f32.xlu0 %v2317
        %v2349 = vpop.xlane.xlu0 %2348
        %2350 = vadd.xlane.f32.xlu0 %v2319
        %v2351 = vpop.xlane.xlu0 %2350
        %2352 = vadd.xlane.f32.xlu0 %v2321
        %v2353 = vpop.xlane.xlu0 %2352
        %2354 = vadd.xlane.f32.xlu0 %v2323
        %v2355 = vpop.xlane.xlu0 %2354
        %2356 = vadd.xlane.f32.xlu0 %v2325
        %v2357 = vpop.xlane.xlu0 %2356
        %2358 = vadd.xlane.f32.xlu0 %v2327
        %v2359 = vpop.xlane.xlu0 %2358
        %2360 = vadd.xlane.f32.xlu0 %v2329
        %v2361 = vpop.xlane.xlu0 %2360
        %2362 = vadd.xlane.f32.xlu0 %v2331
        %v2363 = vpop.xlane.xlu0 %2362
        %2364 = vadd.xlane.f32.xlu0 %v2333
        %v2365 = vpop.xlane.xlu0 %2364
        %2366 = vadd.xlane.f32.xlu0 %v2335
        %v2367 = vpop.xlane.xlu0 %2366
        %2368 = vadd.xlane.f32.xlu0 %v2337
        %v2369 = vpop.xlane.xlu0 %2368
        %2370 = vadd.xlane.f32.xlu0 %v2339
        %v2371 = vpop.xlane.xlu0 %2370
        %v2372 = vrcp.pop %v2341
        %v2373 = vrcp.pop %v2343
        %v2374 = vrcp.pop %v2345
        %v2375 = vrcp.pop %v2347
        %v2376 = vrcp.pop %v2349
        %v2377 = vrcp.pop %v2351
        %v2378 = vrcp.pop %v2353
        %v2379 = vrcp.pop %v2355
        %v2380 = vrcp.pop %v2357
        %v2381 = vrcp.pop %v2359
        %v2382 = vrcp.pop %v2361
        %v2383 = vrcp.pop %v2363
        %v2384 = vrcp.pop %v2365
        %v2385 = vrcp.pop %v2367
        %v2386 = vrcp.pop %v2369
        %v2387 = vrcp.pop %v2371
        %v2388 = vmul.f32 %v2309, %v2372
        %v2389 = vmul.f32 %v2311, %v2373
        %v2390 = vmul.f32 %v2313, %v2374
        %v2391 = vmul.f32 %v2315, %v2375
        %v2392 = vmul.f32 %v2317, %v2376
        %v2393 = vmul.f32 %v2319, %v2377
        %v2394 = vmul.f32 %v2321, %v2378
        %v2395 = vmul.f32 %v2323, %v2379
        %v2396 = vmul.f32 %v2325, %v2380
        %v2397 = vmul.f32 %v2327, %v2381
        %v2398 = vmul.f32 %v2329, %v2382
        %v2399 = vmul.f32 %v2331, %v2383
        %v2400 = vmul.f32 %v2333, %v2384
        %v2401 = vmul.f32 %v2335, %v2385
        %v2402 = vmul.f32 %v2337, %v2386
        %v2403 = vmul.f32 %v2339, %v2387
        %v2404 = vpack.c.bf16 %v2389, %v2388
        %v2405 = vpack.c.bf16 %v2391, %v2390
        %v2406 = vpack.c.bf16 %v2393, %v2392
        %v2407 = vpack.c.bf16 %v2395, %v2394
        %v2408 = vpack.c.bf16 %v2397, %v2396
        %v2409 = vpack.c.bf16 %v2399, %v2398
        %v2410 = vpack.c.bf16 %v2401, %v2400
        %v2411 = vpack.c.bf16 %v2403, %v2402
        %v2412 = vadd.f32 %v2071, %v287
        %v2413 = vadd.f32 %v2075, %v287
        %v2414 = vadd.f32 %v2081, %v287
        %v2415 = vadd.f32 %v2085, %v287
        %v2416 = vadd.f32 %v2091, %v287
        %v2417 = vadd.f32 %v2095, %v287
        %v2418 = vadd.f32 %v2101, %v287
        %v2419 = vadd.f32 %v2105, %v287
        %v2420 = vadd.f32 %v2111, %v287
        %v2421 = vadd.f32 %v2115, %v287
        %v2422 = vadd.f32 %v2121, %v287
        %v2423 = vadd.f32 %v2125, %v287
        %v2424 = vadd.f32 %v2131, %v287
        %v2425 = vadd.f32 %v2135, %v287
        %v2426 = vadd.f32 %v2141, %v287
        %v2427 = vadd.f32 %v2145, %v287
        %2428 = vmax.xlane.f32.xlu0 %v2412
        %v2429 = vpop.xlane.xlu0 %2428
        %2430 = vmax.xlane.f32.xlu0 %v2413
        %v2431 = vpop.xlane.xlu0 %2430
        %2432 = vmax.xlane.f32.xlu0 %v2414
        %v2433 = vpop.xlane.xlu0 %2432
        %2434 = vmax.xlane.f32.xlu0 %v2415
        %v2435 = vpop.xlane.xlu0 %2434
        %2436 = vmax.xlane.f32.xlu0 %v2416
        %v2437 = vpop.xlane.xlu0 %2436
        %2438 = vmax.xlane.f32.xlu0 %v2417
        %v2439 = vpop.xlane.xlu0 %2438
        %2440 = vmax.xlane.f32.xlu0 %v2418
        %v2441 = vpop.xlane.xlu0 %2440
        %2442 = vmax.xlane.f32.xlu0 %v2419
        %v2443 = vpop.xlane.xlu0 %2442
        %2444 = vmax.xlane.f32.xlu0 %v2420
        %v2445 = vpop.xlane.xlu0 %2444
        %2446 = vmax.xlane.f32.xlu0 %v2421
        %v2447 = vpop.xlane.xlu0 %2446
        %2448 = vmax.xlane.f32.xlu0 %v2422
        %v2449 = vpop.xlane.xlu0 %2448
        %2450 = vmax.xlane.f32.xlu0 %v2423
        %v2451 = vpop.xlane.xlu0 %2450
        %2452 = vmax.xlane.f32.xlu0 %v2424
        %v2453 = vpop.xlane.xlu0 %2452
        %2454 = vmax.xlane.f32.xlu0 %v2425
        %v2455 = vpop.xlane.xlu0 %2454
        %2456 = vmax.xlane.f32.xlu0 %v2426
        %v2457 = vpop.xlane.xlu0 %2456
        %2458 = vmax.xlane.f32.xlu0 %v2427
        %v2459 = vpop.xlane.xlu0 %2458
        %v2460 = vsub.f32 %v2412, %v2429
        %v2461 = vsub.f32 %v2413, %v2431
        %v2462 = vsub.f32 %v2414, %v2433
        %v2463 = vsub.f32 %v2415, %v2435
        %v2464 = vsub.f32 %v2416, %v2437
        %v2465 = vsub.f32 %v2417, %v2439
        %v2466 = vsub.f32 %v2418, %v2441
        %v2467 = vsub.f32 %v2419, %v2443
        %v2468 = vsub.f32 %v2420, %v2445
        %v2469 = vsub.f32 %v2421, %v2447
        %v2470 = vsub.f32 %v2422, %v2449
        %v2471 = vsub.f32 %v2423, %v2451
        %v2472 = vsub.f32 %v2424, %v2453
        %v2473 = vsub.f32 %v2425, %v2455
        %v2474 = vsub.f32 %v2426, %v2457
        %v2475 = vsub.f32 %v2427, %v2459
        %v2476 = vmul.f32 %v2460, 1.442695
        %v2477 = vpow.pop %v2476
        %v2478 = vmul.f32 %v2461, 1.442695
        %v2479 = vpow.pop %v2478
        %v2480 = vmul.f32 %v2462, 1.442695
        %v2481 = vpow.pop %v2480
        %v2482 = vmul.f32 %v2463, 1.442695
        %v2483 = vpow.pop %v2482
        %v2484 = vmul.f32 %v2464, 1.442695
        %v2485 = vpow.pop %v2484
        %v2486 = vmul.f32 %v2465, 1.442695
        %v2487 = vpow.pop %v2486
        %v2488 = vmul.f32 %v2466, 1.442695
        %v2489 = vpow.pop %v2488
        %v2490 = vmul.f32 %v2467, 1.442695
        %v2491 = vpow.pop %v2490
        %v2492 = vmul.f32 %v2468, 1.442695
        %v2493 = vpow.pop %v2492
        %v2494 = vmul.f32 %v2469, 1.442695
        %v2495 = vpow.pop %v2494
        %v2496 = vmul.f32 %v2470, 1.442695
        %v2497 = vpow.pop %v2496
        %v2498 = vmul.f32 %v2471, 1.442695
        %v2499 = vpow.pop %v2498
        %v2500 = vmul.f32 %v2472, 1.442695
        %v2501 = vpow.pop %v2500
        %v2502 = vmul.f32 %v2473, 1.442695
        %v2503 = vpow.pop %v2502
        %v2504 = vmul.f32 %v2474, 1.442695
        %v2505 = vpow.pop %v2504
        %v2506 = vmul.f32 %v2475, 1.442695
        %v2507 = vpow.pop %v2506
        %2508 = vadd.xlane.f32.xlu0 %v2477
        %v2509 = vpop.xlane.xlu0 %2508
        %2510 = vadd.xlane.f32.xlu0 %v2479
        %v2511 = vpop.xlane.xlu0 %2510
        %2512 = vadd.xlane.f32.xlu0 %v2481
        %v2513 = vpop.xlane.xlu0 %2512
        %2514 = vadd.xlane.f32.xlu0 %v2483
        %v2515 = vpop.xlane.xlu0 %2514
        %2516 = vadd.xlane.f32.xlu0 %v2485
        %v2517 = vpop.xlane.xlu0 %2516
        %2518 = vadd.xlane.f32.xlu0 %v2487
        %v2519 = vpop.xlane.xlu0 %2518
        %2520 = vadd.xlane.f32.xlu0 %v2489
        %v2521 = vpop.xlane.xlu0 %2520
        %2522 = vadd.xlane.f32.xlu0 %v2491
        %v2523 = vpop.xlane.xlu0 %2522
        %2524 = vadd.xlane.f32.xlu0 %v2493
        %v2525 = vpop.xlane.xlu0 %2524
        %2526 = vadd.xlane.f32.xlu0 %v2495
        %v2527 = vpop.xlane.xlu0 %2526
        %2528 = vadd.xlane.f32.xlu0 %v2497
        %v2529 = vpop.xlane.xlu0 %2528
        %2530 = vadd.xlane.f32.xlu0 %v2499
        %v2531 = vpop.xlane.xlu0 %2530
        %2532 = vadd.xlane.f32.xlu0 %v2501
        %v2533 = vpop.xlane.xlu0 %2532
        %2534 = vadd.xlane.f32.xlu0 %v2503
        %v2535 = vpop.xlane.xlu0 %2534
        %2536 = vadd.xlane.f32.xlu0 %v2505
        %v2537 = vpop.xlane.xlu0 %2536
        %2538 = vadd.xlane.f32.xlu0 %v2507
        %v2539 = vpop.xlane.xlu0 %2538
        %v2540 = vrcp.pop %v2509
        %v2541 = vrcp.pop %v2511
        %v2542 = vrcp.pop %v2513
        %v2543 = vrcp.pop %v2515
        %v2544 = vrcp.pop %v2517
        %v2545 = vrcp.pop %v2519
        %v2546 = vrcp.pop %v2521
        %v2547 = vrcp.pop %v2523
        %v2548 = vrcp.pop %v2525
        %v2549 = vrcp.pop %v2527
        %v2550 = vrcp.pop %v2529
        %v2551 = vrcp.pop %v2531
        %v2552 = vrcp.pop %v2533
        %v2553 = vrcp.pop %v2535
        %v2554 = vrcp.pop %v2537
        %v2555 = vrcp.pop %v2539
        %v2556 = vmul.f32 %v2477, %v2540
        %v2557 = vmul.f32 %v2479, %v2541
        %v2558 = vmul.f32 %v2481, %v2542
        %v2559 = vmul.f32 %v2483, %v2543
        %v2560 = vmul.f32 %v2485, %v2544
        %v2561 = vmul.f32 %v2487, %v2545
        %v2562 = vmul.f32 %v2489, %v2546
        %v2563 = vmul.f32 %v2491, %v2547
        %v2564 = vmul.f32 %v2493, %v2548
        %v2565 = vmul.f32 %v2495, %v2549
        %v2566 = vmul.f32 %v2497, %v2550
        %v2567 = vmul.f32 %v2499, %v2551
        %v2568 = vmul.f32 %v2501, %v2552
        %v2569 = vmul.f32 %v2503, %v2553
        %v2570 = vmul.f32 %v2505, %v2554
        %v2571 = vmul.f32 %v2507, %v2555
        %v2572 = vpack.c.bf16 %v2557, %v2556
        %v2573 = vpack.c.bf16 %v2559, %v2558
        %v2574 = vpack.c.bf16 %v2561, %v2560
        %v2575 = vpack.c.bf16 %v2563, %v2562
        %v2576 = vpack.c.bf16 %v2565, %v2564
        %v2577 = vpack.c.bf16 %v2567, %v2566
        %v2578 = vpack.c.bf16 %v2569, %v2568
        %v2579 = vpack.c.bf16 %v2571, %v2570
        %v2580 = vadd.f32 %v2182, %v287
        %v2581 = vadd.f32 %v2185, %v287
        %v2582 = vadd.f32 %v2190, %v287
        %v2583 = vadd.f32 %v2193, %v287
        %v2584 = vadd.f32 %v2198, %v287
        %v2585 = vadd.f32 %v2201, %v287
        %v2586 = vadd.f32 %v2206, %v287
        %v2587 = vadd.f32 %v2209, %v287
        %v2588 = vadd.f32 %v2214, %v287
        %v2589 = vadd.f32 %v2217, %v287
        %v2590 = vadd.f32 %v2222, %v287
        %v2591 = vadd.f32 %v2225, %v287
        %v2592 = vadd.f32 %v2230, %v287
        %v2593 = vadd.f32 %v2233, %v287
        %v2594 = vadd.f32 %v2238, %v287
        %v2595 = vadd.f32 %v2241, %v287
        %2596 = vmax.xlane.f32.xlu0 %v2580
        %v2597 = vpop.xlane.xlu0 %2596
        %2598 = vmax.xlane.f32.xlu0 %v2581
        %v2599 = vpop.xlane.xlu0 %2598
        %2600 = vmax.xlane.f32.xlu0 %v2582
        %v2601 = vpop.xlane.xlu0 %2600
        %2602 = vmax.xlane.f32.xlu0 %v2583
        %v2603 = vpop.xlane.xlu0 %2602
        %2604 = vmax.xlane.f32.xlu0 %v2584
        %v2605 = vpop.xlane.xlu0 %2604
        %2606 = vmax.xlane.f32.xlu0 %v2585
        %v2607 = vpop.xlane.xlu0 %2606
        %2608 = vmax.xlane.f32.xlu0 %v2586
        %v2609 = vpop.xlane.xlu0 %2608
        %2610 = vmax.xlane.f32.xlu0 %v2587
        %v2611 = vpop.xlane.xlu0 %2610
        %2612 = vmax.xlane.f32.xlu0 %v2588
        %v2613 = vpop.xlane.xlu0 %2612
        %2614 = vmax.xlane.f32.xlu0 %v2589
        %v2615 = vpop.xlane.xlu0 %2614
        %2616 = vmax.xlane.f32.xlu0 %v2590
        %v2617 = vpop.xlane.xlu0 %2616
        %2618 = vmax.xlane.f32.xlu0 %v2591
        %v2619 = vpop.xlane.xlu0 %2618
        %2620 = vmax.xlane.f32.xlu0 %v2592
        %v2621 = vpop.xlane.xlu0 %2620
        %2622 = vmax.xlane.f32.xlu0 %v2593
        %v2623 = vpop.xlane.xlu0 %2622
        %2624 = vmax.xlane.f32.xlu0 %v2594
        %v2625 = vpop.xlane.xlu0 %2624
        %2626 = vmax.xlane.f32.xlu0 %v2595
        %v2627 = vpop.xlane.xlu0 %2626
        %v2628 = vsub.f32 %v2580, %v2597
        %v2629 = vsub.f32 %v2581, %v2599
        %v2630 = vsub.f32 %v2582, %v2601
        %v2631 = vsub.f32 %v2583, %v2603
        %v2632 = vsub.f32 %v2584, %v2605
        %v2633 = vsub.f32 %v2585, %v2607
        %v2634 = vsub.f32 %v2586, %v2609
        %v2635 = vsub.f32 %v2587, %v2611
        %v2636 = vsub.f32 %v2588, %v2613
        %v2637 = vsub.f32 %v2589, %v2615
        %v2638 = vsub.f32 %v2590, %v2617
        %v2639 = vsub.f32 %v2591, %v2619
        %v2640 = vsub.f32 %v2592, %v2621
        %v2641 = vsub.f32 %v2593, %v2623
        %v2642 = vsub.f32 %v2594, %v2625
        %v2643 = vsub.f32 %v2595, %v2627
        %v2644 = vmul.f32 %v2628, 1.442695
        %v2645 = vpow.pop %v2644
        %v2646 = vmul.f32 %v2629, 1.442695
        %v2647 = vpow.pop %v2646
        %v2648 = vmul.f32 %v2630, 1.442695
        %v2649 = vpow.pop %v2648
        %v2650 = vmul.f32 %v2631, 1.442695
        %v2651 = vpow.pop %v2650
        %v2652 = vmul.f32 %v2632, 1.442695
        %v2653 = vpow.pop %v2652
        %v2654 = vmul.f32 %v2633, 1.442695
        %v2655 = vpow.pop %v2654
        %v2656 = vmul.f32 %v2634, 1.442695
        %v2657 = vpow.pop %v2656
        %v2658 = vmul.f32 %v2635, 1.442695
        %v2659 = vpow.pop %v2658
        %v2660 = vmul.f32 %v2636, 1.442695
        %v2661 = vpow.pop %v2660
        %v2662 = vmul.f32 %v2637, 1.442695
        %v2663 = vpow.pop %v2662
        %v2664 = vmul.f32 %v2638, 1.442695
        %v2665 = vpow.pop %v2664
        %v2666 = vmul.f32 %v2639, 1.442695
        %v2667 = vpow.pop %v2666
        %v2668 = vmul.f32 %v2640, 1.442695
        %v2669 = vpow.pop %v2668
        %v2670 = vmul.f32 %v2641, 1.442695
        %v2671 = vpow.pop %v2670
        %v2672 = vmul.f32 %v2642, 1.442695
        %v2673 = vpow.pop %v2672
        %v2674 = vmul.f32 %v2643, 1.442695
        %v2675 = vpow.pop %v2674
        %2676 = vadd.xlane.f32.xlu0 %v2645
        %v2677 = vpop.xlane.xlu0 %2676
        %2678 = vadd.xlane.f32.xlu0 %v2647
        %v2679 = vpop.xlane.xlu0 %2678
        %2680 = vadd.xlane.f32.xlu0 %v2649
        %v2681 = vpop.xlane.xlu0 %2680
        %2682 = vadd.xlane.f32.xlu0 %v2651
        %v2683 = vpop.xlane.xlu0 %2682
        %2684 = vadd.xlane.f32.xlu0 %v2653
        %v2685 = vpop.xlane.xlu0 %2684
        %2686 = vadd.xlane.f32.xlu0 %v2655
        %v2687 = vpop.xlane.xlu0 %2686
        %2688 = vadd.xlane.f32.xlu0 %v2657
        %v2689 = vpop.xlane.xlu0 %2688
        %2690 = vadd.xlane.f32.xlu0 %v2659
        %v2691 = vpop.xlane.xlu0 %2690
        %2692 = vadd.xlane.f32.xlu0 %v2661
        %v2693 = vpop.xlane.xlu0 %2692
        %2694 = vadd.xlane.f32.xlu0 %v2663
        %v2695 = vpop.xlane.xlu0 %2694
        %2696 = vadd.xlane.f32.xlu0 %v2665
        %v2697 = vpop.xlane.xlu0 %2696
        %2698 = vadd.xlane.f32.xlu0 %v2667
        %v2699 = vpop.xlane.xlu0 %2698
        %2700 = vadd.xlane.f32.xlu0 %v2669
        %v2701 = vpop.xlane.xlu0 %2700
        %2702 = vadd.xlane.f32.xlu0 %v2671
        %v2703 = vpop.xlane.xlu0 %2702
        %2704 = vadd.xlane.f32.xlu0 %v2673
        %v2705 = vpop.xlane.xlu0 %2704
        %2706 = vadd.xlane.f32.xlu0 %v2675
        %v2707 = vpop.xlane.xlu0 %2706
        %v2708 = vrcp.pop %v2677
        %v2709 = vrcp.pop %v2679
        %v2710 = vrcp.pop %v2681
        %v2711 = vrcp.pop %v2683
        %v2712 = vrcp.pop %v2685
        %v2713 = vrcp.pop %v2687
        %v2714 = vrcp.pop %v2689
        %v2715 = vrcp.pop %v2691
        %v2716 = vrcp.pop %v2693
        %v2717 = vrcp.pop %v2695
        %v2718 = vrcp.pop %v2697
        %v2719 = vrcp.pop %v2699
        %v2720 = vrcp.pop %v2701
        %v2721 = vrcp.pop %v2703
        %v2722 = vrcp.pop %v2705
        %v2723 = vrcp.pop %v2707
        %v2724 = vmul.f32 %v2645, %v2708
        %v2725 = vmul.f32 %v2647, %v2709
        %v2726 = vmul.f32 %v2649, %v2710
        %v2727 = vmul.f32 %v2651, %v2711
        %v2728 = vmul.f32 %v2653, %v2712
        %v2729 = vmul.f32 %v2655, %v2713
        %v2730 = vmul.f32 %v2657, %v2714
        %v2731 = vmul.f32 %v2659, %v2715
        %v2732 = vmul.f32 %v2661, %v2716
        %v2733 = vmul.f32 %v2663, %v2717
        %v2734 = vmul.f32 %v2665, %v2718
        %v2735 = vmul.f32 %v2667, %v2719
        %v2736 = vmul.f32 %v2669, %v2720
        %v2737 = vmul.f32 %v2671, %v2721
        %v2738 = vmul.f32 %v2673, %v2722
        %v2739 = vmul.f32 %v2675, %v2723
        %v2740 = vpack.c.bf16 %v2725, %v2724
        %v2741 = vpack.c.bf16 %v2727, %v2726
        %v2742 = vpack.c.bf16 %v2729, %v2728
        %v2743 = vpack.c.bf16 %v2731, %v2730
        %v2744 = vpack.c.bf16 %v2733, %v2732
        %v2745 = vpack.c.bf16 %v2735, %v2734
        %v2746 = vpack.c.bf16 %v2737, %v2736
        %v2747 = vpack.c.bf16 %v2739, %v2738
        %2756 = vrot.lane.b32.xlu0 %v1930, 120
        %v2757 = vpop.permute.xlu0 %2756
        %2758 = vrot.lane.b32.xlu0 %v1931, 120
        %v2759 = vpop.permute.xlu0 %2758
        %2760 = vrot.lane.b32.xlu0 %v1932, 120
        %v2761 = vpop.permute.xlu0 %2760
        %2762 = vrot.lane.b32.xlu0 %v1933, 120
        %v2763 = vpop.permute.xlu0 %2762
        %2764 = vrot.lane.b32.xlu0 %v1934, 120
        %v2765 = vpop.permute.xlu0 %2764
        %2766 = vrot.lane.b32.xlu0 %v1935, 120
        %v2767 = vpop.permute.xlu0 %2766
        %2768 = vrot.lane.b32.xlu0 %v1936, 120
        %v2769 = vpop.permute.xlu0 %2768
        %2770 = vrot.lane.b32.xlu0 %v1937, 120
        %v2771 = vpop.permute.xlu0 %2770
        %2772 = vrot.lane.b32.xlu0 %v718, 120
        %v2773 = vpop.permute.xlu0 %2772
        %2774 = vrot.lane.b32.xlu0 %v719, 120
        %v2775 = vpop.permute.xlu0 %2774
        %2776 = vrot.lane.b32.xlu0 %v720, 120
        %v2777 = vpop.permute.xlu0 %2776
        %2778 = vrot.lane.b32.xlu0 %v721, 120
        %v2779 = vpop.permute.xlu0 %2778
        %2780 = vrot.lane.b32.xlu0 %v722, 120
        %v2781 = vpop.permute.xlu0 %2780
        %2782 = vrot.lane.b32.xlu0 %v723, 120
        %v2783 = vpop.permute.xlu0 %2782
        %2784 = vrot.lane.b32.xlu0 %v724, 120
        %v2785 = vpop.permute.xlu0 %2784
        %2786 = vrot.lane.b32.xlu0 %v725, 120
        %v2787 = vpop.permute.xlu0 %2786
        %2788 = vrot.lane.b32.xlu0 %v726, 120
        %v2789 = vpop.permute.xlu0 %2788
        %2790 = vrot.lane.b32.xlu0 %v727, 120
        %v2791 = vpop.permute.xlu0 %2790
        %2792 = vrot.lane.b32.xlu0 %v728, 120
        %v2793 = vpop.permute.xlu0 %2792
        %2794 = vrot.lane.b32.xlu0 %v729, 120
        %v2795 = vpop.permute.xlu0 %2794
        %2796 = vrot.lane.b32.xlu0 %v730, 120
        %v2797 = vpop.permute.xlu0 %2796
        %2798 = vrot.lane.b32.xlu0 %v731, 120
        %v2799 = vpop.permute.xlu0 %2798
        %2800 = vrot.lane.b32.xlu0 %v732, 120
        %v2801 = vpop.permute.xlu0 %2800
        %2802 = vrot.lane.b32.xlu0 %v733, 120
        %v2803 = vpop.permute.xlu0 %2802
        %2804 = vrot.lane.b32.xlu0 %v734, 120
        %v2805 = vpop.permute.xlu0 %2804
        %2806 = vrot.lane.b32.xlu0 %v735, 120
        %v2807 = vpop.permute.xlu0 %2806
        %2808 = vrot.lane.b32.xlu0 %v736, 120
        %v2809 = vpop.permute.xlu0 %2808
        %2810 = vrot.lane.b32.xlu0 %v737, 120
        %v2811 = vpop.permute.xlu0 %2810
        %2812 = vrot.lane.b32.xlu0 %v738, 120
        %v2813 = vpop.permute.xlu0 %2812
        %2814 = vrot.lane.b32.xlu0 %v739, 120
        %v2815 = vpop.permute.xlu0 %2814
        %2816 = vrot.lane.b32.xlu0 %v740, 120
        %v2817 = vpop.permute.xlu0 %2816
        %2818 = vrot.lane.b32.xlu0 %v741, 120
        %v2819 = vpop.permute.xlu0 %2818
        %v2821 = vsel %vm824, %v2757, 0
        %v2824 = vsel %vm824, %v2759, 0
        %v2827 = vsel %vm824, %v2761, 0
        %v2830 = vsel %vm824, %v2763, 0
        %v2833 = vsel %vm824, %v2765, 0
        %v2836 = vsel %vm824, %v2767, 0
        %v2839 = vsel %vm824, %v2769, 0
        %v2842 = vsel %vm824, %v2771, 0
        %v2845 = vsel %vm824, %v2773, 0
        %v2848 = vsel %vm824, %v2775, 0
        %v2851 = vsel %vm824, %v2777, 0
        %v2854 = vsel %vm824, %v2779, 0
        %v2857 = vsel %vm824, %v2781, 0
        %v2860 = vsel %vm824, %v2783, 0
        %v2863 = vsel %vm824, %v2785, 0
        %v2866 = vsel %vm824, %v2787, 0
        %v2869 = vsel %vm824, %v2789, 0
        %v2872 = vsel %vm824, %v2791, 0
        %v2875 = vsel %vm824, %v2793, 0
        %v2878 = vsel %vm824, %v2795, 0
        %v2881 = vsel %vm824, %v2797, 0
        %v2884 = vsel %vm824, %v2799, 0
        %v2887 = vsel %vm824, %v2801, 0
        %v2890 = vsel %vm824, %v2803, 0
        %v2893 = vsel %vm824, %v2805, 0
        %v2896 = vsel %vm824, %v2807, 0
        %v2899 = vsel %vm824, %v2809, 0
        %v2902 = vsel %vm824, %v2811, 0
        %v2905 = vsel %vm824, %v2813, 0
        %v2908 = vsel %vm824, %v2815, 0
        %v2911 = vsel %vm824, %v2817, 0
        %v2914 = vsel %vm824, %v2819, 0
        %2916 = vmatprep.subr.bf16.mxu0 0
        %2917 = vmatpush1.bf16.xpose.msra.mxu0 %v2866
        %2918 = vmatprep.subr.bf16.mxu0 0
        %2919 = vmatpush1.bf16.xpose.msra.mxu0 %v2863
        %2920 = vmatprep.subr.bf16.mxu0 0
        %2921 = vmatpush1.bf16.xpose.msra.mxu0 %v2860
        %2922 = vmatprep.subr.bf16.mxu0 0
        %2923 = vmatpush1.bf16.xpose.msra.mxu0 %v2857
        %2924 = vmatprep.subr.bf16.mxu0 0
        %2925 = vmatpush1.bf16.xpose.msra.mxu0 %v2854
        %2926 = vmatprep.subr.bf16.mxu0 0
        %2927 = vmatpush1.bf16.xpose.msra.mxu0 %v2851
        %2928 = vmatprep.subr.bf16.mxu0 0
        %2929 = vmatpush1.bf16.xpose.msra.mxu0 %v2848
        %2930 = vmatprep.subr.bf16.mxu0 0
        %2931 = vmatpush1.bf16.xpose.msra.mxu0 %v2845
        %2932 = vmatprep.subr.bf16.mxu0 0
        %2933 = vmatpush2.bf16.xpose.msra.mxu0 %v2890
        %2934 = vmatprep.subr.bf16.mxu0 0
        %2935 = vmatpush2.bf16.xpose.msra.mxu0 %v2887
        %2936 = vmatprep.subr.bf16.mxu0 0
        %2937 = vmatpush2.bf16.xpose.msra.mxu0 %v2884
        %2938 = vmatprep.subr.bf16.mxu0 0
        %2939 = vmatpush2.bf16.xpose.msra.mxu0 %v2881
        %2940 = vmatprep.subr.bf16.mxu0 0
        %2941 = vmatpush2.bf16.xpose.msra.mxu0 %v2878
        %2942 = vmatprep.subr.bf16.mxu0 0
        %2943 = vmatpush2.bf16.xpose.msra.mxu0 %v2875
        %2944 = vmatprep.subr.bf16.mxu0 0
        %2945 = vmatpush2.bf16.xpose.msra.mxu0 %v2872
        %2946 = vmatprep.subr.bf16.mxu0 0
        %2947 = vmatpush2.bf16.xpose.msra.mxu0 %v2869
        %2948 = vmatprep.mubr.bf16.mxu0 0
        %2949 = vmatmul.mubr.bf16.gmra.mxu0 %v2821
        %v2950 = vpop.f32.mrf.mxu0
        %v2951 = vadd.f32 0.0, %v2950
        %v2952 = vpop.f32.mrf.mxu0
        %v2953 = vadd.f32 0.0, %v2952
        %v2954 = vpop.f32.mrf.mxu0
        %v2955 = vadd.f32 0.0, %v2954
        %v2956 = vpop.f32.mrf.mxu0
        %v2957 = vadd.f32 0.0, %v2956
        %2958 = vmatprep.mubr.bf16.mxu0 0
        %2959 = vmatmul.mubr.bf16.gmra.mxu0 %v2824
        %v2960 = vpop.f32.mrf.mxu0
        %v2961 = vadd.f32 0.0, %v2960
        %v2962 = vpop.f32.mrf.mxu0
        %v2963 = vadd.f32 0.0, %v2962
        %v2964 = vpop.f32.mrf.mxu0
        %v2965 = vadd.f32 0.0, %v2964
        %v2966 = vpop.f32.mrf.mxu0
        %v2967 = vadd.f32 0.0, %v2966
        %2968 = vmatprep.mubr.bf16.mxu0 0
        %2969 = vmatmul.mubr.bf16.gmra.mxu0 %v2827
        %v2970 = vpop.f32.mrf.mxu0
        %v2971 = vadd.f32 0.0, %v2970
        %v2972 = vpop.f32.mrf.mxu0
        %v2973 = vadd.f32 0.0, %v2972
        %v2974 = vpop.f32.mrf.mxu0
        %v2975 = vadd.f32 0.0, %v2974
        %v2976 = vpop.f32.mrf.mxu0
        %v2977 = vadd.f32 0.0, %v2976
        %2978 = vmatprep.mubr.bf16.mxu0 0
        %2979 = vmatmul.mubr.bf16.gmra.mxu0 %v2830
        %v2980 = vpop.f32.mrf.mxu0
        %v2981 = vadd.f32 0.0, %v2980
        %v2982 = vpop.f32.mrf.mxu0
        %v2983 = vadd.f32 0.0, %v2982
        %v2984 = vpop.f32.mrf.mxu0
        %v2985 = vadd.f32 0.0, %v2984
        %v2986 = vpop.f32.mrf.mxu0
        %v2987 = vadd.f32 0.0, %v2986
        %2988 = vmatprep.mubr.bf16.mxu0 0
        %2989 = vmatmul.mubr.bf16.gmra.mxu0 %v2833
        %v2990 = vpop.f32.mrf.mxu0
        %v2991 = vadd.f32 0.0, %v2990
        %v2992 = vpop.f32.mrf.mxu0
        %v2993 = vadd.f32 0.0, %v2992
        %v2994 = vpop.f32.mrf.mxu0
        %v2995 = vadd.f32 0.0, %v2994
        %v2996 = vpop.f32.mrf.mxu0
        %v2997 = vadd.f32 0.0, %v2996
        %2998 = vmatprep.mubr.bf16.mxu0 0
        %2999 = vmatmul.mubr.bf16.gmra.mxu0 %v2836
        %v3000 = vpop.f32.mrf.mxu0
        %v3001 = vadd.f32 0.0, %v3000
        %v3002 = vpop.f32.mrf.mxu0
        %v3003 = vadd.f32 0.0, %v3002
        %v3004 = vpop.f32.mrf.mxu0
        %v3005 = vadd.f32 0.0, %v3004
        %v3006 = vpop.f32.mrf.mxu0
        %v3007 = vadd.f32 0.0, %v3006
        %3008 = vmatprep.mubr.bf16.mxu0 0
        %3009 = vmatmul.mubr.bf16.gmra.mxu0 %v2839
        %v3010 = vpop.f32.mrf.mxu0
        %v3011 = vadd.f32 0.0, %v3010
        %v3012 = vpop.f32.mrf.mxu0
        %v3013 = vadd.f32 0.0, %v3012
        %v3014 = vpop.f32.mrf.mxu0
        %v3015 = vadd.f32 0.0, %v3014
        %v3016 = vpop.f32.mrf.mxu0
        %v3017 = vadd.f32 0.0, %v3016
        %3018 = vmatprep.mubr.bf16.mxu0 0
        %3019 = vmatmul.mubr.bf16.gmra.mxu0 %v2842
        %v3020 = vpop.f32.mrf.mxu0
        %v3021 = vadd.f32 0.0, %v3020
        %v3022 = vpop.f32.mrf.mxu0
        %v3023 = vadd.f32 0.0, %v3022
        %v3024 = vpop.f32.mrf.mxu0
        %v3025 = vadd.f32 0.0, %v3024
        %v3026 = vpop.f32.mrf.mxu0
        %v3027 = vadd.f32 0.0, %v3026
        %3028 = vdwg.mxu0
        %3029 = vmatprep.subr.bf16.mxu0 0
        %3030 = vmatpush1.bf16.xpose.msra.mxu0 %v2914
        %3031 = vmatprep.subr.bf16.mxu0 0
        %3032 = vmatpush1.bf16.xpose.msra.mxu0 %v2911
        %3033 = vmatprep.subr.bf16.mxu0 0
        %3034 = vmatpush1.bf16.xpose.msra.mxu0 %v2908
        %3035 = vmatprep.subr.bf16.mxu0 0
        %3036 = vmatpush1.bf16.xpose.msra.mxu0 %v2905
        %3037 = vmatprep.subr.bf16.mxu0 0
        %3038 = vmatpush1.bf16.xpose.msra.mxu0 %v2902
        %3039 = vmatprep.subr.bf16.mxu0 0
        %3040 = vmatpush1.bf16.xpose.msra.mxu0 %v2899
        %3041 = vmatprep.subr.bf16.mxu0 0
        %3042 = vmatpush1.bf16.xpose.msra.mxu0 %v2896
        %3043 = vmatprep.subr.bf16.mxu0 0
        %3044 = vmatpush1.bf16.xpose.msra.mxu0 %v2893
        %3045 = vmatprep.subr.bf16.mxu0 0
        %3046 = vmatpush2.bf16.xpose.msra.mxu0 0
        %3047 = vmatprep.subr.bf16.mxu0 0
        %3048 = vmatpush2.bf16.xpose.msra.mxu0 0
        %3049 = vmatprep.subr.bf16.mxu0 0
        %3050 = vmatpush2.bf16.xpose.msra.mxu0 0
        %3051 = vmatprep.subr.bf16.mxu0 0
        %3052 = vmatpush2.bf16.xpose.msra.mxu0 0
        %3053 = vmatprep.subr.bf16.mxu0 0
        %3054 = vmatpush2.bf16.xpose.msra.mxu0 0
        %3055 = vmatprep.subr.bf16.mxu0 0
        %3056 = vmatpush2.bf16.xpose.msra.mxu0 0
        %3057 = vmatprep.subr.bf16.mxu0 0
        %3058 = vmatpush2.bf16.xpose.msra.mxu0 0
        %3059 = vmatprep.subr.bf16.mxu0 0
        %3060 = vmatpush2.bf16.xpose.msra.mxu0 0
        %3061 = vmatprep.mubr.bf16.mxu0 0
        %3062 = vmatmul.mubr.bf16.gmra.mxu0 %v2821
        %v3063 = vpop.f32.mrf.mxu0
        %v3064 = vadd.f32 0.0, %v3063
        %v3065 = vpop.f32.mrf.mxu0
        %v3066 = vpop.f32.mrf.mxu0
        %v3067 = vadd.f32 0.0, %v3066
        %v3068 = vpop.f32.mrf.mxu0
        %3069 = vmatprep.mubr.bf16.mxu0 0
        %3070 = vmatmul.mubr.bf16.gmra.mxu0 %v2824
        %v3071 = vpop.f32.mrf.mxu0
        %v3072 = vadd.f32 0.0, %v3071
        %v3073 = vpop.f32.mrf.mxu0
        %v3074 = vpop.f32.mrf.mxu0
        %v3075 = vadd.f32 0.0, %v3074
        %v3076 = vpop.f32.mrf.mxu0
        %3077 = vmatprep.mubr.bf16.mxu0 0
        %3078 = vmatmul.mubr.bf16.gmra.mxu0 %v2827
        %v3079 = vpop.f32.mrf.mxu0
        %v3080 = vadd.f32 0.0, %v3079
        %v3081 = vpop.f32.mrf.mxu0
        %v3082 = vpop.f32.mrf.mxu0
        %v3083 = vadd.f32 0.0, %v3082
        %v3084 = vpop.f32.mrf.mxu0
        %3085 = vmatprep.mubr.bf16.mxu0 0
        %3086 = vmatmul.mubr.bf16.gmra.mxu0 %v2830
        %v3087 = vpop.f32.mrf.mxu0
        %v3088 = vadd.f32 0.0, %v3087
        %v3089 = vpop.f32.mrf.mxu0
        %v3090 = vpop.f32.mrf.mxu0
        %v3091 = vadd.f32 0.0, %v3090
        %v3092 = vpop.f32.mrf.mxu0
        %3093 = vmatprep.mubr.bf16.mxu0 0
        %3094 = vmatmul.mubr.bf16.gmra.mxu0 %v2833
        %v3095 = vpop.f32.mrf.mxu0
        %v3096 = vadd.f32 0.0, %v3095
        %v3097 = vpop.f32.mrf.mxu0
        %v3098 = vpop.f32.mrf.mxu0
        %v3099 = vadd.f32 0.0, %v3098
        %v3100 = vpop.f32.mrf.mxu0
        %3101 = vmatprep.mubr.bf16.mxu0 0
        %3102 = vmatmul.mubr.bf16.gmra.mxu0 %v2836
        %v3103 = vpop.f32.mrf.mxu0
        %v3104 = vadd.f32 0.0, %v3103
        %v3105 = vpop.f32.mrf.mxu0
        %v3106 = vpop.f32.mrf.mxu0
        %v3107 = vadd.f32 0.0, %v3106
        %v3108 = vpop.f32.mrf.mxu0
        %3109 = vmatprep.mubr.bf16.mxu0 0
        %3110 = vmatmul.mubr.bf16.gmra.mxu0 %v2839
        %v3111 = vpop.f32.mrf.mxu0
        %v3112 = vadd.f32 0.0, %v3111
        %v3113 = vpop.f32.mrf.mxu0
        %v3114 = vpop.f32.mrf.mxu0
        %v3115 = vadd.f32 0.0, %v3114
        %v3116 = vpop.f32.mrf.mxu0
        %3117 = vmatprep.mubr.bf16.mxu0 0
        %3118 = vmatmul.mubr.bf16.gmra.mxu0 %v2842
        %v3119 = vpop.f32.mrf.mxu0
        %v3120 = vadd.f32 0.0, %v3119
        %v3121 = vpop.f32.mrf.mxu0
        %v3122 = vpop.f32.mrf.mxu0
        %v3123 = vadd.f32 0.0, %v3122
        %v3124 = vpop.f32.mrf.mxu0
        %3125 = vdwg.mxu0
        %v3126 = vadd.f32 %v2951, %v287
        %v3127 = vadd.f32 %v2955, %v287
        %v3128 = vadd.f32 %v2961, %v287
        %v3129 = vadd.f32 %v2965, %v287
        %v3130 = vadd.f32 %v2971, %v287
        %v3131 = vadd.f32 %v2975, %v287
        %v3132 = vadd.f32 %v2981, %v287
        %v3133 = vadd.f32 %v2985, %v287
        %v3134 = vadd.f32 %v2991, %v287
        %v3135 = vadd.f32 %v2995, %v287
        %v3136 = vadd.f32 %v3001, %v287
        %v3137 = vadd.f32 %v3005, %v287
        %v3138 = vadd.f32 %v3011, %v287
        %v3139 = vadd.f32 %v3015, %v287
        %v3140 = vadd.f32 %v3021, %v287
        %v3141 = vadd.f32 %v3025, %v287
        %3142 = vmax.xlane.f32.xlu0 %v3126
        %v3143 = vpop.xlane.xlu0 %3142
        %3144 = vmax.xlane.f32.xlu0 %v3127
        %v3145 = vpop.xlane.xlu0 %3144
        %3146 = vmax.xlane.f32.xlu0 %v3128
        %v3147 = vpop.xlane.xlu0 %3146
        %3148 = vmax.xlane.f32.xlu0 %v3129
        %v3149 = vpop.xlane.xlu0 %3148
        %3150 = vmax.xlane.f32.xlu0 %v3130
        %v3151 = vpop.xlane.xlu0 %3150
        %3152 = vmax.xlane.f32.xlu0 %v3131
        %v3153 = vpop.xlane.xlu0 %3152
        %3154 = vmax.xlane.f32.xlu0 %v3132
        %v3155 = vpop.xlane.xlu0 %3154
        %3156 = vmax.xlane.f32.xlu0 %v3133
        %v3157 = vpop.xlane.xlu0 %3156
        %3158 = vmax.xlane.f32.xlu0 %v3134
        %v3159 = vpop.xlane.xlu0 %3158
        %3160 = vmax.xlane.f32.xlu0 %v3135
        %v3161 = vpop.xlane.xlu0 %3160
        %3162 = vmax.xlane.f32.xlu0 %v3136
        %v3163 = vpop.xlane.xlu0 %3162
        %3164 = vmax.xlane.f32.xlu0 %v3137
        %v3165 = vpop.xlane.xlu0 %3164
        %3166 = vmax.xlane.f32.xlu0 %v3138
        %v3167 = vpop.xlane.xlu0 %3166
        %3168 = vmax.xlane.f32.xlu0 %v3139
        %v3169 = vpop.xlane.xlu0 %3168
        %3170 = vmax.xlane.f32.xlu0 %v3140
        %v3171 = vpop.xlane.xlu0 %3170
        %3172 = vmax.xlane.f32.xlu0 %v3141
        %v3173 = vpop.xlane.xlu0 %3172
        %v3174 = vsub.f32 %v3126, %v3143
        %v3175 = vsub.f32 %v3127, %v3145
        %v3176 = vsub.f32 %v3128, %v3147
        %v3177 = vsub.f32 %v3129, %v3149
        %v3178 = vsub.f32 %v3130, %v3151
        %v3179 = vsub.f32 %v3131, %v3153
        %v3180 = vsub.f32 %v3132, %v3155
        %v3181 = vsub.f32 %v3133, %v3157
        %v3182 = vsub.f32 %v3134, %v3159
        %v3183 = vsub.f32 %v3135, %v3161
        %v3184 = vsub.f32 %v3136, %v3163
        %v3185 = vsub.f32 %v3137, %v3165
        %v3186 = vsub.f32 %v3138, %v3167
        %v3187 = vsub.f32 %v3139, %v3169
        %v3188 = vsub.f32 %v3140, %v3171
        %v3189 = vsub.f32 %v3141, %v3173
        %v3190 = vmul.f32 %v3174, 1.442695
        %v3191 = vpow.pop %v3190
        %v3192 = vmul.f32 %v3175, 1.442695
        %v3193 = vpow.pop %v3192
        %v3194 = vmul.f32 %v3176, 1.442695
        %v3195 = vpow.pop %v3194
        %v3196 = vmul.f32 %v3177, 1.442695
        %v3197 = vpow.pop %v3196
        %v3198 = vmul.f32 %v3178, 1.442695
        %v3199 = vpow.pop %v3198
        %v3200 = vmul.f32 %v3179, 1.442695
        %v3201 = vpow.pop %v3200
        %v3202 = vmul.f32 %v3180, 1.442695
        %v3203 = vpow.pop %v3202
        %v3204 = vmul.f32 %v3181, 1.442695
        %v3205 = vpow.pop %v3204
        %v3206 = vmul.f32 %v3182, 1.442695
        %v3207 = vpow.pop %v3206
        %v3208 = vmul.f32 %v3183, 1.442695
        %v3209 = vpow.pop %v3208
        %v3210 = vmul.f32 %v3184, 1.442695
        %v3211 = vpow.pop %v3210
        %v3212 = vmul.f32 %v3185, 1.442695
        %v3213 = vpow.pop %v3212
        %v3214 = vmul.f32 %v3186, 1.442695
        %v3215 = vpow.pop %v3214
        %v3216 = vmul.f32 %v3187, 1.442695
        %v3217 = vpow.pop %v3216
        %v3218 = vmul.f32 %v3188, 1.442695
        %v3219 = vpow.pop %v3218
        %v3220 = vmul.f32 %v3189, 1.442695
        %v3221 = vpow.pop %v3220
        %3222 = vadd.xlane.f32.xlu0 %v3191
        %v3223 = vpop.xlane.xlu0 %3222
        %3224 = vadd.xlane.f32.xlu0 %v3193
        %v3225 = vpop.xlane.xlu0 %3224
        %3226 = vadd.xlane.f32.xlu0 %v3195
        %v3227 = vpop.xlane.xlu0 %3226
        %3228 = vadd.xlane.f32.xlu0 %v3197
        %v3229 = vpop.xlane.xlu0 %3228
        %3230 = vadd.xlane.f32.xlu0 %v3199
        %v3231 = vpop.xlane.xlu0 %3230
        %3232 = vadd.xlane.f32.xlu0 %v3201
        %v3233 = vpop.xlane.xlu0 %3232
        %3234 = vadd.xlane.f32.xlu0 %v3203
        %v3235 = vpop.xlane.xlu0 %3234
        %3236 = vadd.xlane.f32.xlu0 %v3205
        %v3237 = vpop.xlane.xlu0 %3236
        %3238 = vadd.xlane.f32.xlu0 %v3207
        %v3239 = vpop.xlane.xlu0 %3238
        %3240 = vadd.xlane.f32.xlu0 %v3209
        %v3241 = vpop.xlane.xlu0 %3240
        %3242 = vadd.xlane.f32.xlu0 %v3211
        %v3243 = vpop.xlane.xlu0 %3242
        %3244 = vadd.xlane.f32.xlu0 %v3213
        %v3245 = vpop.xlane.xlu0 %3244
        %3246 = vadd.xlane.f32.xlu0 %v3215
        %v3247 = vpop.xlane.xlu0 %3246
        %3248 = vadd.xlane.f32.xlu0 %v3217
        %v3249 = vpop.xlane.xlu0 %3248
        %3250 = vadd.xlane.f32.xlu0 %v3219
        %v3251 = vpop.xlane.xlu0 %3250
        %3252 = vadd.xlane.f32.xlu0 %v3221
        %v3253 = vpop.xlane.xlu0 %3252
        %v3254 = vrcp.pop %v3223
        %v3255 = vrcp.pop %v3225
        %v3256 = vrcp.pop %v3227
        %v3257 = vrcp.pop %v3229
        %v3258 = vrcp.pop %v3231
        %v3259 = vrcp.pop %v3233
        %v3260 = vrcp.pop %v3235
        %v3261 = vrcp.pop %v3237
        %v3262 = vrcp.pop %v3239
        %v3263 = vrcp.pop %v3241
        %v3264 = vrcp.pop %v3243
        %v3265 = vrcp.pop %v3245
        %v3266 = vrcp.pop %v3247
        %v3267 = vrcp.pop %v3249
        %v3268 = vrcp.pop %v3251
        %v3269 = vrcp.pop %v3253
        %v3270 = vmul.f32 %v3191, %v3254
        %v3271 = vmul.f32 %v3193, %v3255
        %v3272 = vmul.f32 %v3195, %v3256
        %v3273 = vmul.f32 %v3197, %v3257
        %v3274 = vmul.f32 %v3199, %v3258
        %v3275 = vmul.f32 %v3201, %v3259
        %v3276 = vmul.f32 %v3203, %v3260
        %v3277 = vmul.f32 %v3205, %v3261
        %v3278 = vmul.f32 %v3207, %v3262
        %v3279 = vmul.f32 %v3209, %v3263
        %v3280 = vmul.f32 %v3211, %v3264
        %v3281 = vmul.f32 %v3213, %v3265
        %v3282 = vmul.f32 %v3215, %v3266
        %v3283 = vmul.f32 %v3217, %v3267
        %v3284 = vmul.f32 %v3219, %v3268
        %v3285 = vmul.f32 %v3221, %v3269
        %v3286 = vpack.c.bf16 %v3271, %v3270
        %v3287 = vpack.c.bf16 %v3273, %v3272
        %v3288 = vpack.c.bf16 %v3275, %v3274
        %v3289 = vpack.c.bf16 %v3277, %v3276
        %v3290 = vpack.c.bf16 %v3279, %v3278
        %v3291 = vpack.c.bf16 %v3281, %v3280
        %v3292 = vpack.c.bf16 %v3283, %v3282
        %v3293 = vpack.c.bf16 %v3285, %v3284
        %3294 = vmatprep.subr.bf16.mxu0 0
        %3295 = vmatpush1.bf16.xpose.msra.mxu0 %v3293
        %3296 = vmatprep.subr.bf16.mxu0 0
        %3297 = vmatpush1.bf16.xpose.msra.mxu0 %v3292
        %3298 = vmatprep.subr.bf16.mxu0 0
        %3299 = vmatpush1.bf16.xpose.msra.mxu0 %v3291
        %3300 = vmatprep.subr.bf16.mxu0 0
        %3301 = vmatpush1.bf16.xpose.msra.mxu0 %v3290
        %3302 = vmatprep.subr.bf16.mxu0 0
        %3303 = vmatpush1.bf16.xpose.msra.mxu0 %v3289
        %3304 = vmatprep.subr.bf16.mxu0 0
        %3305 = vmatpush1.bf16.xpose.msra.mxu0 %v3288
        %3306 = vmatprep.subr.bf16.mxu0 0
        %3307 = vmatpush1.bf16.xpose.msra.mxu0 %v3287
        %3308 = vmatprep.subr.bf16.mxu0 0
        %3309 = vmatpush1.bf16.xpose.msra.mxu0 %v3286
        %3310 = vmatprep.subr.bf16.mxu0 0
        %3311 = vmatpush2.bf16.xpose.msra.mxu0 0
        %3312 = vmatprep.subr.bf16.mxu0 0
        %3313 = vmatpush2.bf16.xpose.msra.mxu0 0
        %3314 = vmatprep.subr.bf16.mxu0 0
        %3315 = vmatpush2.bf16.xpose.msra.mxu0 0
        %3316 = vmatprep.subr.bf16.mxu0 0
        %3317 = vmatpush2.bf16.xpose.msra.mxu0 0
        %3318 = vmatprep.subr.bf16.mxu0 0
        %3319 = vmatpush2.bf16.xpose.msra.mxu0 0
        %3320 = vmatprep.subr.bf16.mxu0 0
        %3321 = vmatpush2.bf16.xpose.msra.mxu0 0
        %3322 = vmatprep.subr.bf16.mxu0 0
        %3323 = vmatpush2.bf16.xpose.msra.mxu0 0
        %3324 = vmatprep.subr.bf16.mxu0 0
        %3325 = vmatpush2.bf16.xpose.msra.mxu0 0
        %3326 = vmatprep.mubr.bf16.mxu0 0
        %3327 = vmatmul.mubr.bf16.gmra.mxu0 %v1243
        %v3328 = vpop.f32.mrf.mxu0
        %v3329 = vadd.f32 0.0, %v3328
        %v3330 = vpop.f32.mrf.mxu0
        %v3331 = vpop.f32.mrf.mxu0
        %v3332 = vadd.f32 0.0, %v3331
        %v3333 = vpop.f32.mrf.mxu0
        %3334 = vmatprep.mubr.bf16.mxu0 0
        %3335 = vmatmul.mubr.bf16.gmra.mxu0 %v1246
        %v3336 = vpop.f32.mrf.mxu0
        %v3337 = vadd.f32 0.0, %v3336
        %v3338 = vpop.f32.mrf.mxu0
        %v3339 = vpop.f32.mrf.mxu0
        %v3340 = vadd.f32 0.0, %v3339
        %v3341 = vpop.f32.mrf.mxu0
        %3342 = vdwg.mxu0
        %3343 = vmatprep.subr.bf16.mxu0 0
        %3344 = vmatpush1.bf16.xpose.msra.mxu0 %v2411
        %3345 = vmatprep.subr.bf16.mxu0 0
        %3346 = vmatpush1.bf16.xpose.msra.mxu0 %v2410
        %3347 = vmatprep.subr.bf16.mxu0 0
        %3348 = vmatpush1.bf16.xpose.msra.mxu0 %v2409
        %3349 = vmatprep.subr.bf16.mxu0 0
        %3350 = vmatpush1.bf16.xpose.msra.mxu0 %v2408
        %3351 = vmatprep.subr.bf16.mxu0 0
        %3352 = vmatpush1.bf16.xpose.msra.mxu0 %v2407
        %3353 = vmatprep.subr.bf16.mxu0 0
        %3354 = vmatpush1.bf16.xpose.msra.mxu0 %v2406
        %3355 = vmatprep.subr.bf16.mxu0 0
        %3356 = vmatpush1.bf16.xpose.msra.mxu0 %v2405
        %3357 = vmatprep.subr.bf16.mxu0 0
        %3358 = vmatpush1.bf16.xpose.msra.mxu0 %v2404
        %3359 = vmatprep.subr.bf16.mxu0 0
        %3360 = vmatpush2.bf16.xpose.msra.mxu0 0
        %3361 = vmatprep.subr.bf16.mxu0 0
        %3362 = vmatpush2.bf16.xpose.msra.mxu0 0
        %3363 = vmatprep.subr.bf16.mxu0 0
        %3364 = vmatpush2.bf16.xpose.msra.mxu0 0
        %3365 = vmatprep.subr.bf16.mxu0 0
        %3366 = vmatpush2.bf16.xpose.msra.mxu0 0
        %3367 = vmatprep.subr.bf16.mxu0 0
        %3368 = vmatpush2.bf16.xpose.msra.mxu0 0
        %3369 = vmatprep.subr.bf16.mxu0 0
        %3370 = vmatpush2.bf16.xpose.msra.mxu0 0
        %3371 = vmatprep.subr.bf16.mxu0 0
        %3372 = vmatpush2.bf16.xpose.msra.mxu0 0
        %3373 = vmatprep.subr.bf16.mxu0 0
        %3374 = vmatpush2.bf16.xpose.msra.mxu0 0
        %3375 = vmatprep.mubr.bf16.mxu0 0
        %3376 = vmatmul.mubr.bf16.gmra.mxu0 %v1005
        %v3377 = vpop.f32.mrf.mxu0
        %v3378 = vadd.f32 %v3329, %v3377
        %v3379 = vpop.f32.mrf.mxu0
        %v3380 = vpop.f32.mrf.mxu0
        %v3381 = vadd.f32 %v3332, %v3380
        %v3382 = vpop.f32.mrf.mxu0
        %3383 = vmatprep.mubr.bf16.mxu0 0
        %3384 = vmatmul.mubr.bf16.gmra.mxu0 %v1008
        %v3385 = vpop.f32.mrf.mxu0
        %v3386 = vadd.f32 %v3337, %v3385
        %v3387 = vpop.f32.mrf.mxu0
        %v3388 = vpop.f32.mrf.mxu0
        %v3389 = vadd.f32 %v3340, %v3388
        %v3390 = vpop.f32.mrf.mxu0
        %3391 = vdwg.mxu0
        %v3392 = vadd.f32 %v2953, %v287
        %v3393 = vadd.f32 %v2957, %v287
        %v3394 = vadd.f32 %v2963, %v287
        %v3395 = vadd.f32 %v2967, %v287
        %v3396 = vadd.f32 %v2973, %v287
        %v3397 = vadd.f32 %v2977, %v287
        %v3398 = vadd.f32 %v2983, %v287
        %v3399 = vadd.f32 %v2987, %v287
        %v3400 = vadd.f32 %v2993, %v287
        %v3401 = vadd.f32 %v2997, %v287
        %v3402 = vadd.f32 %v3003, %v287
        %v3403 = vadd.f32 %v3007, %v287
        %v3404 = vadd.f32 %v3013, %v287
        %v3405 = vadd.f32 %v3017, %v287
        %v3406 = vadd.f32 %v3023, %v287
        %v3407 = vadd.f32 %v3027, %v287
        %3408 = vmax.xlane.f32.xlu0 %v3392
        %v3409 = vpop.xlane.xlu0 %3408
        %3410 = vmax.xlane.f32.xlu0 %v3393
        %v3411 = vpop.xlane.xlu0 %3410
        %3412 = vmax.xlane.f32.xlu0 %v3394
        %v3413 = vpop.xlane.xlu0 %3412
        %3414 = vmax.xlane.f32.xlu0 %v3395
        %v3415 = vpop.xlane.xlu0 %3414
        %3416 = vmax.xlane.f32.xlu0 %v3396
        %v3417 = vpop.xlane.xlu0 %3416
        %3418 = vmax.xlane.f32.xlu0 %v3397
        %v3419 = vpop.xlane.xlu0 %3418
        %3420 = vmax.xlane.f32.xlu0 %v3398
        %v3421 = vpop.xlane.xlu0 %3420
        %3422 = vmax.xlane.f32.xlu0 %v3399
        %v3423 = vpop.xlane.xlu0 %3422
        %3424 = vmax.xlane.f32.xlu0 %v3400
        %v3425 = vpop.xlane.xlu0 %3424
        %3426 = vmax.xlane.f32.xlu0 %v3401
        %v3427 = vpop.xlane.xlu0 %3426
        %3428 = vmax.xlane.f32.xlu0 %v3402
        %v3429 = vpop.xlane.xlu0 %3428
        %3430 = vmax.xlane.f32.xlu0 %v3403
        %v3431 = vpop.xlane.xlu0 %3430
        %3432 = vmax.xlane.f32.xlu0 %v3404
        %v3433 = vpop.xlane.xlu0 %3432
        %3434 = vmax.xlane.f32.xlu0 %v3405
        %v3435 = vpop.xlane.xlu0 %3434
        %3436 = vmax.xlane.f32.xlu0 %v3406
        %v3437 = vpop.xlane.xlu0 %3436
        %3438 = vmax.xlane.f32.xlu0 %v3407
        %v3439 = vpop.xlane.xlu0 %3438
        %v3440 = vsub.f32 %v3392, %v3409
        %v3441 = vsub.f32 %v3393, %v3411
        %v3442 = vsub.f32 %v3394, %v3413
        %v3443 = vsub.f32 %v3395, %v3415
        %v3444 = vsub.f32 %v3396, %v3417
        %v3445 = vsub.f32 %v3397, %v3419
        %v3446 = vsub.f32 %v3398, %v3421
        %v3447 = vsub.f32 %v3399, %v3423
        %v3448 = vsub.f32 %v3400, %v3425
        %v3449 = vsub.f32 %v3401, %v3427
        %v3450 = vsub.f32 %v3402, %v3429
        %v3451 = vsub.f32 %v3403, %v3431
        %v3452 = vsub.f32 %v3404, %v3433
        %v3453 = vsub.f32 %v3405, %v3435
        %v3454 = vsub.f32 %v3406, %v3437
        %v3455 = vsub.f32 %v3407, %v3439
        %v3456 = vmul.f32 %v3440, 1.442695
        %v3457 = vpow.pop %v3456
        %v3458 = vmul.f32 %v3441, 1.442695
        %v3459 = vpow.pop %v3458
        %v3460 = vmul.f32 %v3442, 1.442695
        %v3461 = vpow.pop %v3460
        %v3462 = vmul.f32 %v3443, 1.442695
        %v3463 = vpow.pop %v3462
        %v3464 = vmul.f32 %v3444, 1.442695
        %v3465 = vpow.pop %v3464
        %v3466 = vmul.f32 %v3445, 1.442695
        %v3467 = vpow.pop %v3466
        %v3468 = vmul.f32 %v3446, 1.442695
        %v3469 = vpow.pop %v3468
        %v3470 = vmul.f32 %v3447, 1.442695
        %v3471 = vpow.pop %v3470
        %v3472 = vmul.f32 %v3448, 1.442695
        %v3473 = vpow.pop %v3472
        %v3474 = vmul.f32 %v3449, 1.442695
        %v3475 = vpow.pop %v3474
        %v3476 = vmul.f32 %v3450, 1.442695
        %v3477 = vpow.pop %v3476
        %v3478 = vmul.f32 %v3451, 1.442695
        %v3479 = vpow.pop %v3478
        %v3480 = vmul.f32 %v3452, 1.442695
        %v3481 = vpow.pop %v3480
        %v3482 = vmul.f32 %v3453, 1.442695
        %v3483 = vpow.pop %v3482
        %v3484 = vmul.f32 %v3454, 1.442695
        %v3485 = vpow.pop %v3484
        %v3486 = vmul.f32 %v3455, 1.442695
        %v3487 = vpow.pop %v3486
        %3488 = vadd.xlane.f32.xlu0 %v3457
        %v3489 = vpop.xlane.xlu0 %3488
        %3490 = vadd.xlane.f32.xlu0 %v3459
        %v3491 = vpop.xlane.xlu0 %3490
        %3492 = vadd.xlane.f32.xlu0 %v3461
        %v3493 = vpop.xlane.xlu0 %3492
        %3494 = vadd.xlane.f32.xlu0 %v3463
        %v3495 = vpop.xlane.xlu0 %3494
        %3496 = vadd.xlane.f32.xlu0 %v3465
        %v3497 = vpop.xlane.xlu0 %3496
        %3498 = vadd.xlane.f32.xlu0 %v3467
        %v3499 = vpop.xlane.xlu0 %3498
        %3500 = vadd.xlane.f32.xlu0 %v3469
        %v3501 = vpop.xlane.xlu0 %3500
        %3502 = vadd.xlane.f32.xlu0 %v3471
        %v3503 = vpop.xlane.xlu0 %3502
        %3504 = vadd.xlane.f32.xlu0 %v3473
        %v3505 = vpop.xlane.xlu0 %3504
        %3506 = vadd.xlane.f32.xlu0 %v3475
        %v3507 = vpop.xlane.xlu0 %3506
        %3508 = vadd.xlane.f32.xlu0 %v3477
        %v3509 = vpop.xlane.xlu0 %3508
        %3510 = vadd.xlane.f32.xlu0 %v3479
        %v3511 = vpop.xlane.xlu0 %3510
        %3512 = vadd.xlane.f32.xlu0 %v3481
        %v3513 = vpop.xlane.xlu0 %3512
        %3514 = vadd.xlane.f32.xlu0 %v3483
        %v3515 = vpop.xlane.xlu0 %3514
        %3516 = vadd.xlane.f32.xlu0 %v3485
        %v3517 = vpop.xlane.xlu0 %3516
        %3518 = vadd.xlane.f32.xlu0 %v3487
        %v3519 = vpop.xlane.xlu0 %3518
        %v3520 = vrcp.pop %v3489
        %v3521 = vrcp.pop %v3491
        %v3522 = vrcp.pop %v3493
        %v3523 = vrcp.pop %v3495
        %v3524 = vrcp.pop %v3497
        %v3525 = vrcp.pop %v3499
        %v3526 = vrcp.pop %v3501
        %v3527 = vrcp.pop %v3503
        %v3528 = vrcp.pop %v3505
        %v3529 = vrcp.pop %v3507
        %v3530 = vrcp.pop %v3509
        %v3531 = vrcp.pop %v3511
        %v3532 = vrcp.pop %v3513
        %v3533 = vrcp.pop %v3515
        %v3534 = vrcp.pop %v3517
        %v3535 = vrcp.pop %v3519
        %v3536 = vmul.f32 %v3457, %v3520
        %v3537 = vmul.f32 %v3459, %v3521
        %v3538 = vmul.f32 %v3461, %v3522
        %v3539 = vmul.f32 %v3463, %v3523
        %v3540 = vmul.f32 %v3465, %v3524
        %v3541 = vmul.f32 %v3467, %v3525
        %v3542 = vmul.f32 %v3469, %v3526
        %v3543 = vmul.f32 %v3471, %v3527
        %v3544 = vmul.f32 %v3473, %v3528
        %v3545 = vmul.f32 %v3475, %v3529
        %v3546 = vmul.f32 %v3477, %v3530
        %v3547 = vmul.f32 %v3479, %v3531
        %v3548 = vmul.f32 %v3481, %v3532
        %v3549 = vmul.f32 %v3483, %v3533
        %v3550 = vmul.f32 %v3485, %v3534
        %v3551 = vmul.f32 %v3487, %v3535
        %v3552 = vpack.c.bf16 %v3537, %v3536
        %v3553 = vpack.c.bf16 %v3539, %v3538
        %v3554 = vpack.c.bf16 %v3541, %v3540
        %v3555 = vpack.c.bf16 %v3543, %v3542
        %v3556 = vpack.c.bf16 %v3545, %v3544
        %v3557 = vpack.c.bf16 %v3547, %v3546
        %v3558 = vpack.c.bf16 %v3549, %v3548
        %v3559 = vpack.c.bf16 %v3551, %v3550
        %3560 = vmatprep.subr.bf16.mxu0 0
        %3561 = vmatpush1.bf16.xpose.msra.mxu0 %v3559
        %3562 = vmatprep.subr.bf16.mxu0 0
        %3563 = vmatpush1.bf16.xpose.msra.mxu0 %v3558
        %3564 = vmatprep.subr.bf16.mxu0 0
        %3565 = vmatpush1.bf16.xpose.msra.mxu0 %v3557
        %3566 = vmatprep.subr.bf16.mxu0 0
        %3567 = vmatpush1.bf16.xpose.msra.mxu0 %v3556
        %3568 = vmatprep.subr.bf16.mxu0 0
        %3569 = vmatpush1.bf16.xpose.msra.mxu0 %v3555
        %3570 = vmatprep.subr.bf16.mxu0 0
        %3571 = vmatpush1.bf16.xpose.msra.mxu0 %v3554
        %3572 = vmatprep.subr.bf16.mxu0 0
        %3573 = vmatpush1.bf16.xpose.msra.mxu0 %v3553
        %3574 = vmatprep.subr.bf16.mxu0 0
        %3575 = vmatpush1.bf16.xpose.msra.mxu0 %v3552
        %3576 = vmatprep.subr.bf16.mxu0 0
        %3577 = vmatpush2.bf16.xpose.msra.mxu0 0
        %3578 = vmatprep.subr.bf16.mxu0 0
        %3579 = vmatpush2.bf16.xpose.msra.mxu0 0
        %3580 = vmatprep.subr.bf16.mxu0 0
        %3581 = vmatpush2.bf16.xpose.msra.mxu0 0
        %3582 = vmatprep.subr.bf16.mxu0 0
        %3583 = vmatpush2.bf16.xpose.msra.mxu0 0
        %3584 = vmatprep.subr.bf16.mxu0 0
        %3585 = vmatpush2.bf16.xpose.msra.mxu0 0
        %3586 = vmatprep.subr.bf16.mxu0 0
        %3587 = vmatpush2.bf16.xpose.msra.mxu0 0
        %3588 = vmatprep.subr.bf16.mxu0 0
        %3589 = vmatpush2.bf16.xpose.msra.mxu0 0
        %3590 = vmatprep.subr.bf16.mxu0 0
        %3591 = vmatpush2.bf16.xpose.msra.mxu0 0
        %3592 = vmatprep.mubr.bf16.mxu0 0
        %3593 = vmatmul.mubr.bf16.gmra.mxu0 %v1244
        %v3594 = vpop.f32.mrf.mxu0
        %v3595 = vadd.f32 0.0, %v3594
        %v3596 = vpop.f32.mrf.mxu0
        %v3597 = vpop.f32.mrf.mxu0
        %v3598 = vadd.f32 0.0, %v3597
        %v3599 = vpop.f32.mrf.mxu0
        %3600 = vmatprep.mubr.bf16.mxu0 0
        %3601 = vmatmul.mubr.bf16.gmra.mxu0 %v1247
        %v3602 = vpop.f32.mrf.mxu0
        %v3603 = vadd.f32 0.0, %v3602
        %v3604 = vpop.f32.mrf.mxu0
        %v3605 = vpop.f32.mrf.mxu0
        %v3606 = vadd.f32 0.0, %v3605
        %v3607 = vpop.f32.mrf.mxu0
        %3608 = vdwg.mxu0
        %3609 = vmatprep.subr.bf16.mxu0 0
        %3610 = vmatpush1.bf16.xpose.msra.mxu0 %v2579
        %3611 = vmatprep.subr.bf16.mxu0 0
        %3612 = vmatpush1.bf16.xpose.msra.mxu0 %v2578
        %3613 = vmatprep.subr.bf16.mxu0 0
        %3614 = vmatpush1.bf16.xpose.msra.mxu0 %v2577
        %3615 = vmatprep.subr.bf16.mxu0 0
        %3616 = vmatpush1.bf16.xpose.msra.mxu0 %v2576
        %3617 = vmatprep.subr.bf16.mxu0 0
        %3618 = vmatpush1.bf16.xpose.msra.mxu0 %v2575
        %3619 = vmatprep.subr.bf16.mxu0 0
        %3620 = vmatpush1.bf16.xpose.msra.mxu0 %v2574
        %3621 = vmatprep.subr.bf16.mxu0 0
        %3622 = vmatpush1.bf16.xpose.msra.mxu0 %v2573
        %3623 = vmatprep.subr.bf16.mxu0 0
        %3624 = vmatpush1.bf16.xpose.msra.mxu0 %v2572
        %3625 = vmatprep.subr.bf16.mxu0 0
        %3626 = vmatpush2.bf16.xpose.msra.mxu0 0
        %3627 = vmatprep.subr.bf16.mxu0 0
        %3628 = vmatpush2.bf16.xpose.msra.mxu0 0
        %3629 = vmatprep.subr.bf16.mxu0 0
        %3630 = vmatpush2.bf16.xpose.msra.mxu0 0
        %3631 = vmatprep.subr.bf16.mxu0 0
        %3632 = vmatpush2.bf16.xpose.msra.mxu0 0
        %3633 = vmatprep.subr.bf16.mxu0 0
        %3634 = vmatpush2.bf16.xpose.msra.mxu0 0
        %3635 = vmatprep.subr.bf16.mxu0 0
        %3636 = vmatpush2.bf16.xpose.msra.mxu0 0
        %3637 = vmatprep.subr.bf16.mxu0 0
        %3638 = vmatpush2.bf16.xpose.msra.mxu0 0
        %3639 = vmatprep.subr.bf16.mxu0 0
        %3640 = vmatpush2.bf16.xpose.msra.mxu0 0
        %3641 = vmatprep.mubr.bf16.mxu0 0
        %3642 = vmatmul.mubr.bf16.gmra.mxu0 %v1006
        %v3643 = vpop.f32.mrf.mxu0
        %v3644 = vadd.f32 %v3595, %v3643
        %v3645 = vpop.f32.mrf.mxu0
        %v3646 = vpop.f32.mrf.mxu0
        %v3647 = vadd.f32 %v3598, %v3646
        %v3648 = vpop.f32.mrf.mxu0
        %3649 = vmatprep.mubr.bf16.mxu0 0
        %3650 = vmatmul.mubr.bf16.gmra.mxu0 %v1009
        %v3651 = vpop.f32.mrf.mxu0
        %v3652 = vadd.f32 %v3603, %v3651
        %v3653 = vpop.f32.mrf.mxu0
        %v3654 = vpop.f32.mrf.mxu0
        %v3655 = vadd.f32 %v3606, %v3654
        %v3656 = vpop.f32.mrf.mxu0
        %3657 = vdwg.mxu0
        %v3658 = vadd.f32 %v3064, %v287
        %v3659 = vadd.f32 %v3067, %v287
        %v3660 = vadd.f32 %v3072, %v287
        %v3661 = vadd.f32 %v3075, %v287
        %v3662 = vadd.f32 %v3080, %v287
        %v3663 = vadd.f32 %v3083, %v287
        %v3664 = vadd.f32 %v3088, %v287
        %v3665 = vadd.f32 %v3091, %v287
        %v3666 = vadd.f32 %v3096, %v287
        %v3667 = vadd.f32 %v3099, %v287
        %v3668 = vadd.f32 %v3104, %v287
        %v3669 = vadd.f32 %v3107, %v287
        %v3670 = vadd.f32 %v3112, %v287
        %v3671 = vadd.f32 %v3115, %v287
        %v3672 = vadd.f32 %v3120, %v287
        %v3673 = vadd.f32 %v3123, %v287
        %3674 = vmax.xlane.f32.xlu0 %v3658
        %v3675 = vpop.xlane.xlu0 %3674
        %3676 = vmax.xlane.f32.xlu0 %v3659
        %v3677 = vpop.xlane.xlu0 %3676
        %3678 = vmax.xlane.f32.xlu0 %v3660
        %v3679 = vpop.xlane.xlu0 %3678
        %3680 = vmax.xlane.f32.xlu0 %v3661
        %v3681 = vpop.xlane.xlu0 %3680
        %3682 = vmax.xlane.f32.xlu0 %v3662
        %v3683 = vpop.xlane.xlu0 %3682
        %3684 = vmax.xlane.f32.xlu0 %v3663
        %v3685 = vpop.xlane.xlu0 %3684
        %3686 = vmax.xlane.f32.xlu0 %v3664
        %v3687 = vpop.xlane.xlu0 %3686
        %3688 = vmax.xlane.f32.xlu0 %v3665
        %v3689 = vpop.xlane.xlu0 %3688
        %3690 = vmax.xlane.f32.xlu0 %v3666
        %v3691 = vpop.xlane.xlu0 %3690
        %3692 = vmax.xlane.f32.xlu0 %v3667
        %v3693 = vpop.xlane.xlu0 %3692
        %3694 = vmax.xlane.f32.xlu0 %v3668
        %v3695 = vpop.xlane.xlu0 %3694
        %3696 = vmax.xlane.f32.xlu0 %v3669
        %v3697 = vpop.xlane.xlu0 %3696
        %3698 = vmax.xlane.f32.xlu0 %v3670
        %v3699 = vpop.xlane.xlu0 %3698
        %3700 = vmax.xlane.f32.xlu0 %v3671
        %v3701 = vpop.xlane.xlu0 %3700
        %3702 = vmax.xlane.f32.xlu0 %v3672
        %v3703 = vpop.xlane.xlu0 %3702
        %3704 = vmax.xlane.f32.xlu0 %v3673
        %v3705 = vpop.xlane.xlu0 %3704
        %v3706 = vsub.f32 %v3658, %v3675
        %v3707 = vsub.f32 %v3659, %v3677
        %v3708 = vsub.f32 %v3660, %v3679
        %v3709 = vsub.f32 %v3661, %v3681
        %v3710 = vsub.f32 %v3662, %v3683
        %v3711 = vsub.f32 %v3663, %v3685
        %v3712 = vsub.f32 %v3664, %v3687
        %v3713 = vsub.f32 %v3665, %v3689
        %v3714 = vsub.f32 %v3666, %v3691
        %v3715 = vsub.f32 %v3667, %v3693
        %v3716 = vsub.f32 %v3668, %v3695
        %v3717 = vsub.f32 %v3669, %v3697
        %v3718 = vsub.f32 %v3670, %v3699
        %v3719 = vsub.f32 %v3671, %v3701
        %v3720 = vsub.f32 %v3672, %v3703
        %v3721 = vsub.f32 %v3673, %v3705
        %v3722 = vmul.f32 %v3706, 1.442695
        %v3723 = vpow.pop %v3722
        %v3724 = vmul.f32 %v3707, 1.442695
        %v3725 = vpow.pop %v3724
        %v3726 = vmul.f32 %v3708, 1.442695
        %v3727 = vpow.pop %v3726
        %v3728 = vmul.f32 %v3709, 1.442695
        %v3729 = vpow.pop %v3728
        %v3730 = vmul.f32 %v3710, 1.442695
        %v3731 = vpow.pop %v3730
        %v3732 = vmul.f32 %v3711, 1.442695
        %v3733 = vpow.pop %v3732
        %v3734 = vmul.f32 %v3712, 1.442695
        %v3735 = vpow.pop %v3734
        %v3736 = vmul.f32 %v3713, 1.442695
        %v3737 = vpow.pop %v3736
        %v3738 = vmul.f32 %v3714, 1.442695
        %v3739 = vpow.pop %v3738
        %v3740 = vmul.f32 %v3715, 1.442695
        %v3741 = vpow.pop %v3740
        %v3742 = vmul.f32 %v3716, 1.442695
        %v3743 = vpow.pop %v3742
        %v3744 = vmul.f32 %v3717, 1.442695
        %v3745 = vpow.pop %v3744
        %v3746 = vmul.f32 %v3718, 1.442695
        %v3747 = vpow.pop %v3746
        %v3748 = vmul.f32 %v3719, 1.442695
        %v3749 = vpow.pop %v3748
        %v3750 = vmul.f32 %v3720, 1.442695
        %v3751 = vpow.pop %v3750
        %v3752 = vmul.f32 %v3721, 1.442695
        %v3753 = vpow.pop %v3752
        %3754 = vadd.xlane.f32.xlu0 %v3723
        %v3755 = vpop.xlane.xlu0 %3754
        %3756 = vadd.xlane.f32.xlu0 %v3725
        %v3757 = vpop.xlane.xlu0 %3756
        %3758 = vadd.xlane.f32.xlu0 %v3727
        %v3759 = vpop.xlane.xlu0 %3758
        %3760 = vadd.xlane.f32.xlu0 %v3729
        %v3761 = vpop.xlane.xlu0 %3760
        %3762 = vadd.xlane.f32.xlu0 %v3731
        %v3763 = vpop.xlane.xlu0 %3762
        %3764 = vadd.xlane.f32.xlu0 %v3733
        %v3765 = vpop.xlane.xlu0 %3764
        %3766 = vadd.xlane.f32.xlu0 %v3735
        %v3767 = vpop.xlane.xlu0 %3766
        %3768 = vadd.xlane.f32.xlu0 %v3737
        %v3769 = vpop.xlane.xlu0 %3768
        %3770 = vadd.xlane.f32.xlu0 %v3739
        %v3771 = vpop.xlane.xlu0 %3770
        %3772 = vadd.xlane.f32.xlu0 %v3741
        %v3773 = vpop.xlane.xlu0 %3772
        %3774 = vadd.xlane.f32.xlu0 %v3743
        %v3775 = vpop.xlane.xlu0 %3774
        %3776 = vadd.xlane.f32.xlu0 %v3745
        %v3777 = vpop.xlane.xlu0 %3776
        %3778 = vadd.xlane.f32.xlu0 %v3747
        %v3779 = vpop.xlane.xlu0 %3778
        %3780 = vadd.xlane.f32.xlu0 %v3749
        %v3781 = vpop.xlane.xlu0 %3780
        %3782 = vadd.xlane.f32.xlu0 %v3751
        %v3783 = vpop.xlane.xlu0 %3782
        %3784 = vadd.xlane.f32.xlu0 %v3753
        %v3785 = vpop.xlane.xlu0 %3784
        %v3786 = vrcp.pop %v3755
        %v3787 = vrcp.pop %v3757
        %v3788 = vrcp.pop %v3759
        %v3789 = vrcp.pop %v3761
        %v3790 = vrcp.pop %v3763
        %v3791 = vrcp.pop %v3765
        %v3792 = vrcp.pop %v3767
        %v3793 = vrcp.pop %v3769
        %v3794 = vrcp.pop %v3771
        %v3795 = vrcp.pop %v3773
        %v3796 = vrcp.pop %v3775
        %v3797 = vrcp.pop %v3777
        %v3798 = vrcp.pop %v3779
        %v3799 = vrcp.pop %v3781
        %v3800 = vrcp.pop %v3783
        %v3801 = vrcp.pop %v3785
        %v3802 = vmul.f32 %v3723, %v3786
        %v3803 = vmul.f32 %v3725, %v3787
        %v3804 = vmul.f32 %v3727, %v3788
        %v3805 = vmul.f32 %v3729, %v3789
        %v3806 = vmul.f32 %v3731, %v3790
        %v3807 = vmul.f32 %v3733, %v3791
        %v3808 = vmul.f32 %v3735, %v3792
        %v3809 = vmul.f32 %v3737, %v3793
        %v3810 = vmul.f32 %v3739, %v3794
        %v3811 = vmul.f32 %v3741, %v3795
        %v3812 = vmul.f32 %v3743, %v3796
        %v3813 = vmul.f32 %v3745, %v3797
        %v3814 = vmul.f32 %v3747, %v3798
        %v3815 = vmul.f32 %v3749, %v3799
        %v3816 = vmul.f32 %v3751, %v3800
        %v3817 = vmul.f32 %v3753, %v3801
        %v3818 = vpack.c.bf16 %v3803, %v3802
        %v3819 = vpack.c.bf16 %v3805, %v3804
        %v3820 = vpack.c.bf16 %v3807, %v3806
        %v3821 = vpack.c.bf16 %v3809, %v3808
        %v3822 = vpack.c.bf16 %v3811, %v3810
        %v3823 = vpack.c.bf16 %v3813, %v3812
        %v3824 = vpack.c.bf16 %v3815, %v3814
        %v3825 = vpack.c.bf16 %v3817, %v3816
        %3826 = vmatprep.subr.bf16.mxu0 0
        %3827 = vmatpush1.bf16.xpose.msra.mxu0 %v3825
        %3828 = vmatprep.subr.bf16.mxu0 0
        %3829 = vmatpush1.bf16.xpose.msra.mxu0 %v3824
        %3830 = vmatprep.subr.bf16.mxu0 0
        %3831 = vmatpush1.bf16.xpose.msra.mxu0 %v3823
        %3832 = vmatprep.subr.bf16.mxu0 0
        %3833 = vmatpush1.bf16.xpose.msra.mxu0 %v3822
        %3834 = vmatprep.subr.bf16.mxu0 0
        %3835 = vmatpush1.bf16.xpose.msra.mxu0 %v3821
        %3836 = vmatprep.subr.bf16.mxu0 0
        %3837 = vmatpush1.bf16.xpose.msra.mxu0 %v3820
        %3838 = vmatprep.subr.bf16.mxu0 0
        %3839 = vmatpush1.bf16.xpose.msra.mxu0 %v3819
        %3840 = vmatprep.subr.bf16.mxu0 0
        %3841 = vmatpush1.bf16.xpose.msra.mxu0 %v3818
        %3842 = vmatprep.subr.bf16.mxu0 0
        %3843 = vmatpush2.bf16.xpose.msra.mxu0 0
        %3844 = vmatprep.subr.bf16.mxu0 0
        %3845 = vmatpush2.bf16.xpose.msra.mxu0 0
        %3846 = vmatprep.subr.bf16.mxu0 0
        %3847 = vmatpush2.bf16.xpose.msra.mxu0 0
        %3848 = vmatprep.subr.bf16.mxu0 0
        %3849 = vmatpush2.bf16.xpose.msra.mxu0 0
        %3850 = vmatprep.subr.bf16.mxu0 0
        %3851 = vmatpush2.bf16.xpose.msra.mxu0 0
        %3852 = vmatprep.subr.bf16.mxu0 0
        %3853 = vmatpush2.bf16.xpose.msra.mxu0 0
        %3854 = vmatprep.subr.bf16.mxu0 0
        %3855 = vmatpush2.bf16.xpose.msra.mxu0 0
        %3856 = vmatprep.subr.bf16.mxu0 0
        %3857 = vmatpush2.bf16.xpose.msra.mxu0 0
        %3858 = vmatprep.mubr.bf16.mxu0 0
        %3859 = vmatmul.mubr.bf16.gmra.mxu0 %v1245
        %v3860 = vpop.f32.mrf.mxu0
        %v3861 = vadd.f32 0.0, %v3860
        %v3862 = vpop.f32.mrf.mxu0
        %v3863 = vpop.f32.mrf.mxu0
        %v3864 = vadd.f32 0.0, %v3863
        %v3865 = vpop.f32.mrf.mxu0
        %3866 = vmatprep.mubr.bf16.mxu0 0
        %3867 = vmatmul.mubr.bf16.gmra.mxu0 %v1248
        %v3868 = vpop.f32.mrf.mxu0
        %v3869 = vadd.f32 0.0, %v3868
        %v3870 = vpop.f32.mrf.mxu0
        %v3871 = vpop.f32.mrf.mxu0
        %v3872 = vadd.f32 0.0, %v3871
        %v3873 = vpop.f32.mrf.mxu0
        %3874 = vdwg.mxu0
        %3875 = vmatprep.subr.bf16.mxu0 0
        %3876 = vmatpush1.bf16.xpose.msra.mxu0 %v2747
        %3877 = vmatprep.subr.bf16.mxu0 0
        %3878 = vmatpush1.bf16.xpose.msra.mxu0 %v2746
        %3879 = vmatprep.subr.bf16.mxu0 0
        %3880 = vmatpush1.bf16.xpose.msra.mxu0 %v2745
        %3881 = vmatprep.subr.bf16.mxu0 0
        %3882 = vmatpush1.bf16.xpose.msra.mxu0 %v2744
        %3883 = vmatprep.subr.bf16.mxu0 0
        %3884 = vmatpush1.bf16.xpose.msra.mxu0 %v2743
        %3885 = vmatprep.subr.bf16.mxu0 0
        %3886 = vmatpush1.bf16.xpose.msra.mxu0 %v2742
        %3887 = vmatprep.subr.bf16.mxu0 0
        %3888 = vmatpush1.bf16.xpose.msra.mxu0 %v2741
        %3889 = vmatprep.subr.bf16.mxu0 0
        %3890 = vmatpush1.bf16.xpose.msra.mxu0 %v2740
        %3891 = vmatprep.subr.bf16.mxu0 0
        %3892 = vmatpush2.bf16.xpose.msra.mxu0 0
        %3893 = vmatprep.subr.bf16.mxu0 0
        %3894 = vmatpush2.bf16.xpose.msra.mxu0 0
        %3895 = vmatprep.subr.bf16.mxu0 0
        %3896 = vmatpush2.bf16.xpose.msra.mxu0 0
        %3897 = vmatprep.subr.bf16.mxu0 0
        %3898 = vmatpush2.bf16.xpose.msra.mxu0 0
        %3899 = vmatprep.subr.bf16.mxu0 0
        %3900 = vmatpush2.bf16.xpose.msra.mxu0 0
        %3901 = vmatprep.subr.bf16.mxu0 0
        %3902 = vmatpush2.bf16.xpose.msra.mxu0 0
        %3903 = vmatprep.subr.bf16.mxu0 0
        %3904 = vmatpush2.bf16.xpose.msra.mxu0 0
        %3905 = vmatprep.subr.bf16.mxu0 0
        %3906 = vmatpush2.bf16.xpose.msra.mxu0 0
        %3907 = vmatprep.mubr.bf16.mxu0 0
        %3908 = vmatmul.mubr.bf16.gmra.mxu0 %v1007
        %v3909 = vpop.f32.mrf.mxu0
        %v3910 = vadd.f32 %v3861, %v3909
        %v3911 = vpop.f32.mrf.mxu0
        %v3912 = vpop.f32.mrf.mxu0
        %v3913 = vadd.f32 %v3864, %v3912
        %v3914 = vpop.f32.mrf.mxu0
        %3915 = vmatprep.mubr.bf16.mxu0 0
        %3916 = vmatmul.mubr.bf16.gmra.mxu0 %v1010
        %v3917 = vpop.f32.mrf.mxu0
        %v3918 = vadd.f32 %v3869, %v3917
        %v3919 = vpop.f32.mrf.mxu0
        %v3920 = vpop.f32.mrf.mxu0
        %v3921 = vadd.f32 %v3872, %v3920
        %v3922 = vpop.f32.mrf.mxu0
        %3923 = vdwg.mxu0
        %3924 = vrot.lane.b32.xlu0 %v1930, 112
        %v3925 = vpop.permute.xlu0 %3924
        %3926 = vrot.lane.b32.xlu0 %v1931, 112
        %v3927 = vpop.permute.xlu0 %3926
        %3928 = vrot.lane.b32.xlu0 %v1932, 112
        %v3929 = vpop.permute.xlu0 %3928
        %3930 = vrot.lane.b32.xlu0 %v1933, 112
        %v3931 = vpop.permute.xlu0 %3930
        %3932 = vrot.lane.b32.xlu0 %v1934, 112
        %v3933 = vpop.permute.xlu0 %3932
        %3934 = vrot.lane.b32.xlu0 %v1935, 112
        %v3935 = vpop.permute.xlu0 %3934
        %3936 = vrot.lane.b32.xlu0 %v1936, 112
        %v3937 = vpop.permute.xlu0 %3936
        %3938 = vrot.lane.b32.xlu0 %v1937, 112
        %v3939 = vpop.permute.xlu0 %3938
        %3940 = vrot.lane.b32.xlu0 %v718, 112
        %v3941 = vpop.permute.xlu0 %3940
        %3942 = vrot.lane.b32.xlu0 %v719, 112
        %v3943 = vpop.permute.xlu0 %3942
        %3944 = vrot.lane.b32.xlu0 %v720, 112
        %v3945 = vpop.permute.xlu0 %3944
        %3946 = vrot.lane.b32.xlu0 %v721, 112
        %v3947 = vpop.permute.xlu0 %3946
        %3948 = vrot.lane.b32.xlu0 %v722, 112
        %v3949 = vpop.permute.xlu0 %3948
        %3950 = vrot.lane.b32.xlu0 %v723, 112
        %v3951 = vpop.permute.xlu0 %3950
        %3952 = vrot.lane.b32.xlu0 %v724, 112
        %v3953 = vpop.permute.xlu0 %3952
        %3954 = vrot.lane.b32.xlu0 %v725, 112
        %v3955 = vpop.permute.xlu0 %3954
        %3956 = vrot.lane.b32.xlu0 %v726, 112
        %v3957 = vpop.permute.xlu0 %3956
        %3958 = vrot.lane.b32.xlu0 %v727, 112
        %v3959 = vpop.permute.xlu0 %3958
        %3960 = vrot.lane.b32.xlu0 %v728, 112
        %v3961 = vpop.permute.xlu0 %3960
        %3962 = vrot.lane.b32.xlu0 %v729, 112
        %v3963 = vpop.permute.xlu0 %3962
        %3964 = vrot.lane.b32.xlu0 %v730, 112
        %v3965 = vpop.permute.xlu0 %3964
        %3966 = vrot.lane.b32.xlu0 %v731, 112
        %v3967 = vpop.permute.xlu0 %3966
        %3968 = vrot.lane.b32.xlu0 %v732, 112
        %v3969 = vpop.permute.xlu0 %3968
        %3970 = vrot.lane.b32.xlu0 %v733, 112
        %v3971 = vpop.permute.xlu0 %3970
        %3972 = vrot.lane.b32.xlu0 %v734, 112
        %v3973 = vpop.permute.xlu0 %3972
        %3974 = vrot.lane.b32.xlu0 %v735, 112
        %v3975 = vpop.permute.xlu0 %3974
        %3976 = vrot.lane.b32.xlu0 %v736, 112
        %v3977 = vpop.permute.xlu0 %3976
        %3978 = vrot.lane.b32.xlu0 %v737, 112
        %v3979 = vpop.permute.xlu0 %3978
        %3980 = vrot.lane.b32.xlu0 %v738, 112
        %v3981 = vpop.permute.xlu0 %3980
        %3982 = vrot.lane.b32.xlu0 %v739, 112
        %v3983 = vpop.permute.xlu0 %3982
        %3984 = vrot.lane.b32.xlu0 %v740, 112
        %v3985 = vpop.permute.xlu0 %3984
        %3986 = vrot.lane.b32.xlu0 %v741, 112
        %v3987 = vpop.permute.xlu0 %3986
        %v3989 = vsel %vm824, %v3925, 0
        %v3992 = vsel %vm824, %v3927, 0
        %v3995 = vsel %vm824, %v3929, 0
        %v3998 = vsel %vm824, %v3931, 0
        %v4001 = vsel %vm824, %v3933, 0
        %v4004 = vsel %vm824, %v3935, 0
        %v4007 = vsel %vm824, %v3937, 0
        %v4010 = vsel %vm824, %v3939, 0
        %v4013 = vsel %vm824, %v3941, 0
        %v4016 = vsel %vm824, %v3943, 0
        %v4019 = vsel %vm824, %v3945, 0
        %v4022 = vsel %vm824, %v3947, 0
        %v4025 = vsel %vm824, %v3949, 0
        %v4028 = vsel %vm824, %v3951, 0
        %v4031 = vsel %vm824, %v3953, 0
        %v4034 = vsel %vm824, %v3955, 0
        %v4037 = vsel %vm824, %v3957, 0
        %v4040 = vsel %vm824, %v3959, 0
        %v4043 = vsel %vm824, %v3961, 0
        %v4046 = vsel %vm824, %v3963, 0
        %v4049 = vsel %vm824, %v3965, 0
        %v4052 = vsel %vm824, %v3967, 0
        %v4055 = vsel %vm824, %v3969, 0
        %v4058 = vsel %vm824, %v3971, 0
        %v4061 = vsel %vm824, %v3973, 0
        %v4064 = vsel %vm824, %v3975, 0
        %v4067 = vsel %vm824, %v3977, 0
        %v4070 = vsel %vm824, %v3979, 0
        %v4073 = vsel %vm824, %v3981, 0
        %v4076 = vsel %vm824, %v3983, 0
        %v4079 = vsel %vm824, %v3985, 0
        %v4082 = vsel %vm824, %v3987, 0
        %4084 = vmatprep.subr.bf16.mxu0 0
        %4085 = vmatpush1.bf16.xpose.msra.mxu0 %v4034
        %4086 = vmatprep.subr.bf16.mxu0 0
        %4087 = vmatpush1.bf16.xpose.msra.mxu0 %v4031
        %4088 = vmatprep.subr.bf16.mxu0 0
        %4089 = vmatpush1.bf16.xpose.msra.mxu0 %v4028
        %4090 = vmatprep.subr.bf16.mxu0 0
        %4091 = vmatpush1.bf16.xpose.msra.mxu0 %v4025
        %4092 = vmatprep.subr.bf16.mxu0 0
        %4093 = vmatpush1.bf16.xpose.msra.mxu0 %v4022
        %4094 = vmatprep.subr.bf16.mxu0 0
        %4095 = vmatpush1.bf16.xpose.msra.mxu0 %v4019
        %4096 = vmatprep.subr.bf16.mxu0 0
        %4097 = vmatpush1.bf16.xpose.msra.mxu0 %v4016
        %4098 = vmatprep.subr.bf16.mxu0 0
        %4099 = vmatpush1.bf16.xpose.msra.mxu0 %v4013
        %4100 = vmatprep.subr.bf16.mxu0 0
        %4101 = vmatpush2.bf16.xpose.msra.mxu0 %v4058
        %4102 = vmatprep.subr.bf16.mxu0 0
        %4103 = vmatpush2.bf16.xpose.msra.mxu0 %v4055
        %4104 = vmatprep.subr.bf16.mxu0 0
        %4105 = vmatpush2.bf16.xpose.msra.mxu0 %v4052
        %4106 = vmatprep.subr.bf16.mxu0 0
        %4107 = vmatpush2.bf16.xpose.msra.mxu0 %v4049
        %4108 = vmatprep.subr.bf16.mxu0 0
        %4109 = vmatpush2.bf16.xpose.msra.mxu0 %v4046
        %4110 = vmatprep.subr.bf16.mxu0 0
        %4111 = vmatpush2.bf16.xpose.msra.mxu0 %v4043
        %4112 = vmatprep.subr.bf16.mxu0 0
        %4113 = vmatpush2.bf16.xpose.msra.mxu0 %v4040
        %4114 = vmatprep.subr.bf16.mxu0 0
        %4115 = vmatpush2.bf16.xpose.msra.mxu0 %v4037
        %4116 = vmatprep.mubr.bf16.mxu0 0
        %4117 = vmatmul.mubr.bf16.gmra.mxu0 %v3989
        %v4118 = vpop.f32.mrf.mxu0
        %v4119 = vadd.f32 0.0, %v4118
        %v4120 = vpop.f32.mrf.mxu0
        %v4121 = vadd.f32 0.0, %v4120
        %v4122 = vpop.f32.mrf.mxu0
        %v4123 = vadd.f32 0.0, %v4122
        %v4124 = vpop.f32.mrf.mxu0
        %v4125 = vadd.f32 0.0, %v4124
        %4126 = vmatprep.mubr.bf16.mxu0 0
        %4127 = vmatmul.mubr.bf16.gmra.mxu0 %v3992
        %v4128 = vpop.f32.mrf.mxu0
        %v4129 = vadd.f32 0.0, %v4128
        %v4130 = vpop.f32.mrf.mxu0
        %v4131 = vadd.f32 0.0, %v4130
        %v4132 = vpop.f32.mrf.mxu0
        %v4133 = vadd.f32 0.0, %v4132
        %v4134 = vpop.f32.mrf.mxu0
        %v4135 = vadd.f32 0.0, %v4134
        %4136 = vmatprep.mubr.bf16.mxu0 0
        %4137 = vmatmul.mubr.bf16.gmra.mxu0 %v3995
        %v4138 = vpop.f32.mrf.mxu0
        %v4139 = vadd.f32 0.0, %v4138
        %v4140 = vpop.f32.mrf.mxu0
        %v4141 = vadd.f32 0.0, %v4140
        %v4142 = vpop.f32.mrf.mxu0
        %v4143 = vadd.f32 0.0, %v4142
        %v4144 = vpop.f32.mrf.mxu0
        %v4145 = vadd.f32 0.0, %v4144
        %4146 = vmatprep.mubr.bf16.mxu0 0
        %4147 = vmatmul.mubr.bf16.gmra.mxu0 %v3998
        %v4148 = vpop.f32.mrf.mxu0
        %v4149 = vadd.f32 0.0, %v4148
        %v4150 = vpop.f32.mrf.mxu0
        %v4151 = vadd.f32 0.0, %v4150
        %v4152 = vpop.f32.mrf.mxu0
        %v4153 = vadd.f32 0.0, %v4152
        %v4154 = vpop.f32.mrf.mxu0
        %v4155 = vadd.f32 0.0, %v4154
        %4156 = vmatprep.mubr.bf16.mxu0 0
        %4157 = vmatmul.mubr.bf16.gmra.mxu0 %v4001
        %v4158 = vpop.f32.mrf.mxu0
        %v4159 = vadd.f32 0.0, %v4158
        %v4160 = vpop.f32.mrf.mxu0
        %v4161 = vadd.f32 0.0, %v4160
        %v4162 = vpop.f32.mrf.mxu0
        %v4163 = vadd.f32 0.0, %v4162
        %v4164 = vpop.f32.mrf.mxu0
        %v4165 = vadd.f32 0.0, %v4164
        %4166 = vmatprep.mubr.bf16.mxu0 0
        %4167 = vmatmul.mubr.bf16.gmra.mxu0 %v4004
        %v4168 = vpop.f32.mrf.mxu0
        %v4169 = vadd.f32 0.0, %v4168
        %v4170 = vpop.f32.mrf.mxu0
        %v4171 = vadd.f32 0.0, %v4170
        %v4172 = vpop.f32.mrf.mxu0
        %v4173 = vadd.f32 0.0, %v4172
        %v4174 = vpop.f32.mrf.mxu0
        %v4175 = vadd.f32 0.0, %v4174
        %4176 = vmatprep.mubr.bf16.mxu0 0
        %4177 = vmatmul.mubr.bf16.gmra.mxu0 %v4007
        %v4178 = vpop.f32.mrf.mxu0
        %v4179 = vadd.f32 0.0, %v4178
        %v4180 = vpop.f32.mrf.mxu0
        %v4181 = vadd.f32 0.0, %v4180
        %v4182 = vpop.f32.mrf.mxu0
        %v4183 = vadd.f32 0.0, %v4182
        %v4184 = vpop.f32.mrf.mxu0
        %v4185 = vadd.f32 0.0, %v4184
        %4186 = vmatprep.mubr.bf16.mxu0 0
        %4187 = vmatmul.mubr.bf16.gmra.mxu0 %v4010
        %v4188 = vpop.f32.mrf.mxu0
        %v4189 = vadd.f32 0.0, %v4188
        %v4190 = vpop.f32.mrf.mxu0
        %v4191 = vadd.f32 0.0, %v4190
        %v4192 = vpop.f32.mrf.mxu0
        %v4193 = vadd.f32 0.0, %v4192
        %v4194 = vpop.f32.mrf.mxu0
        %v4195 = vadd.f32 0.0, %v4194
        %4196 = vdwg.mxu0
        %4197 = vmatprep.subr.bf16.mxu0 0
        %4198 = vmatpush1.bf16.xpose.msra.mxu0 %v4082
        %4199 = vmatprep.subr.bf16.mxu0 0
        %4200 = vmatpush1.bf16.xpose.msra.mxu0 %v4079
        %4201 = vmatprep.subr.bf16.mxu0 0
        %4202 = vmatpush1.bf16.xpose.msra.mxu0 %v4076
        %4203 = vmatprep.subr.bf16.mxu0 0
        %4204 = vmatpush1.bf16.xpose.msra.mxu0 %v4073
        %4205 = vmatprep.subr.bf16.mxu0 0
        %4206 = vmatpush1.bf16.xpose.msra.mxu0 %v4070
        %4207 = vmatprep.subr.bf16.mxu0 0
        %4208 = vmatpush1.bf16.xpose.msra.mxu0 %v4067
        %4209 = vmatprep.subr.bf16.mxu0 0
        %4210 = vmatpush1.bf16.xpose.msra.mxu0 %v4064
        %4211 = vmatprep.subr.bf16.mxu0 0
        %4212 = vmatpush1.bf16.xpose.msra.mxu0 %v4061
        %4213 = vmatprep.subr.bf16.mxu0 0
        %4214 = vmatpush2.bf16.xpose.msra.mxu0 0
        %4215 = vmatprep.subr.bf16.mxu0 0
        %4216 = vmatpush2.bf16.xpose.msra.mxu0 0
        %4217 = vmatprep.subr.bf16.mxu0 0
        %4218 = vmatpush2.bf16.xpose.msra.mxu0 0
        %4219 = vmatprep.subr.bf16.mxu0 0
        %4220 = vmatpush2.bf16.xpose.msra.mxu0 0
        %4221 = vmatprep.subr.bf16.mxu0 0
        %4222 = vmatpush2.bf16.xpose.msra.mxu0 0
        %4223 = vmatprep.subr.bf16.mxu0 0
        %4224 = vmatpush2.bf16.xpose.msra.mxu0 0
        %4225 = vmatprep.subr.bf16.mxu0 0
        %4226 = vmatpush2.bf16.xpose.msra.mxu0 0
        %4227 = vmatprep.subr.bf16.mxu0 0
        %4228 = vmatpush2.bf16.xpose.msra.mxu0 0
        %4229 = vmatprep.mubr.bf16.mxu0 0
        %4230 = vmatmul.mubr.bf16.gmra.mxu0 %v3989
        %v4231 = vpop.f32.mrf.mxu0
        %v4232 = vadd.f32 0.0, %v4231
        %v4233 = vpop.f32.mrf.mxu0
        %v4234 = vpop.f32.mrf.mxu0
        %v4235 = vadd.f32 0.0, %v4234
        %v4236 = vpop.f32.mrf.mxu0
        %4237 = vmatprep.mubr.bf16.mxu0 0
        %4238 = vmatmul.mubr.bf16.gmra.mxu0 %v3992
        %v4239 = vpop.f32.mrf.mxu0
        %v4240 = vadd.f32 0.0, %v4239
        %v4241 = vpop.f32.mrf.mxu0
        %v4242 = vpop.f32.mrf.mxu0
        %v4243 = vadd.f32 0.0, %v4242
        %v4244 = vpop.f32.mrf.mxu0
        %4245 = vmatprep.mubr.bf16.mxu0 0
        %4246 = vmatmul.mubr.bf16.gmra.mxu0 %v3995
        %v4247 = vpop.f32.mrf.mxu0
        %v4248 = vadd.f32 0.0, %v4247
        %v4249 = vpop.f32.mrf.mxu0
        %v4250 = vpop.f32.mrf.mxu0
        %v4251 = vadd.f32 0.0, %v4250
        %v4252 = vpop.f32.mrf.mxu0
        %4253 = vmatprep.mubr.bf16.mxu0 0
        %4254 = vmatmul.mubr.bf16.gmra.mxu0 %v3998
        %v4255 = vpop.f32.mrf.mxu0
        %v4256 = vadd.f32 0.0, %v4255
        %v4257 = vpop.f32.mrf.mxu0
        %v4258 = vpop.f32.mrf.mxu0
        %v4259 = vadd.f32 0.0, %v4258
        %v4260 = vpop.f32.mrf.mxu0
        %4261 = vmatprep.mubr.bf16.mxu0 0
        %4262 = vmatmul.mubr.bf16.gmra.mxu0 %v4001
        %v4263 = vpop.f32.mrf.mxu0
        %v4264 = vadd.f32 0.0, %v4263
        %v4265 = vpop.f32.mrf.mxu0
        %v4266 = vpop.f32.mrf.mxu0
        %v4267 = vadd.f32 0.0, %v4266
        %v4268 = vpop.f32.mrf.mxu0
        %4269 = vmatprep.mubr.bf16.mxu0 0
        %4270 = vmatmul.mubr.bf16.gmra.mxu0 %v4004
        %v4271 = vpop.f32.mrf.mxu0
        %v4272 = vadd.f32 0.0, %v4271
        %v4273 = vpop.f32.mrf.mxu0
        %v4274 = vpop.f32.mrf.mxu0
        %v4275 = vadd.f32 0.0, %v4274
        %v4276 = vpop.f32.mrf.mxu0
        %4277 = vmatprep.mubr.bf16.mxu0 0
        %4278 = vmatmul.mubr.bf16.gmra.mxu0 %v4007
        %v4279 = vpop.f32.mrf.mxu0
        %v4280 = vadd.f32 0.0, %v4279
        %v4281 = vpop.f32.mrf.mxu0
        %v4282 = vpop.f32.mrf.mxu0
        %v4283 = vadd.f32 0.0, %v4282
        %v4284 = vpop.f32.mrf.mxu0
        %4285 = vmatprep.mubr.bf16.mxu0 0
        %4286 = vmatmul.mubr.bf16.gmra.mxu0 %v4010
        %v4287 = vpop.f32.mrf.mxu0
        %v4288 = vadd.f32 0.0, %v4287
        %v4289 = vpop.f32.mrf.mxu0
        %v4290 = vpop.f32.mrf.mxu0
        %v4291 = vadd.f32 0.0, %v4290
        %v4292 = vpop.f32.mrf.mxu0
        %4293 = vdwg.mxu0
        %v4294 = vadd.f32 %v4119, %v287
        %v4295 = vadd.f32 %v4123, %v287
        %v4296 = vadd.f32 %v4129, %v287
        %v4297 = vadd.f32 %v4133, %v287
        %v4298 = vadd.f32 %v4139, %v287
        %v4299 = vadd.f32 %v4143, %v287
        %v4300 = vadd.f32 %v4149, %v287
        %v4301 = vadd.f32 %v4153, %v287
        %v4302 = vadd.f32 %v4159, %v287
        %v4303 = vadd.f32 %v4163, %v287
        %v4304 = vadd.f32 %v4169, %v287
        %v4305 = vadd.f32 %v4173, %v287
        %v4306 = vadd.f32 %v4179, %v287
        %v4307 = vadd.f32 %v4183, %v287
        %v4308 = vadd.f32 %v4189, %v287
        %v4309 = vadd.f32 %v4193, %v287
        %4310 = vmax.xlane.f32.xlu0 %v4294
        %v4311 = vpop.xlane.xlu0 %4310
        %4312 = vmax.xlane.f32.xlu0 %v4295
        %v4313 = vpop.xlane.xlu0 %4312
        %4314 = vmax.xlane.f32.xlu0 %v4296
        %v4315 = vpop.xlane.xlu0 %4314
        %4316 = vmax.xlane.f32.xlu0 %v4297
        %v4317 = vpop.xlane.xlu0 %4316
        %4318 = vmax.xlane.f32.xlu0 %v4298
        %v4319 = vpop.xlane.xlu0 %4318
        %4320 = vmax.xlane.f32.xlu0 %v4299
        %v4321 = vpop.xlane.xlu0 %4320
        %4322 = vmax.xlane.f32.xlu0 %v4300
        %v4323 = vpop.xlane.xlu0 %4322
        %4324 = vmax.xlane.f32.xlu0 %v4301
        %v4325 = vpop.xlane.xlu0 %4324
        %4326 = vmax.xlane.f32.xlu0 %v4302
        %v4327 = vpop.xlane.xlu0 %4326
        %4328 = vmax.xlane.f32.xlu0 %v4303
        %v4329 = vpop.xlane.xlu0 %4328
        %4330 = vmax.xlane.f32.xlu0 %v4304
        %v4331 = vpop.xlane.xlu0 %4330
        %4332 = vmax.xlane.f32.xlu0 %v4305
        %v4333 = vpop.xlane.xlu0 %4332
        %4334 = vmax.xlane.f32.xlu0 %v4306
        %v4335 = vpop.xlane.xlu0 %4334
        %4336 = vmax.xlane.f32.xlu0 %v4307
        %v4337 = vpop.xlane.xlu0 %4336
        %4338 = vmax.xlane.f32.xlu0 %v4308
        %v4339 = vpop.xlane.xlu0 %4338
        %4340 = vmax.xlane.f32.xlu0 %v4309
        %v4341 = vpop.xlane.xlu0 %4340
        %v4342 = vsub.f32 %v4294, %v4311
        %v4343 = vsub.f32 %v4295, %v4313
        %v4344 = vsub.f32 %v4296, %v4315
        %v4345 = vsub.f32 %v4297, %v4317
        %v4346 = vsub.f32 %v4298, %v4319
        %v4347 = vsub.f32 %v4299, %v4321
        %v4348 = vsub.f32 %v4300, %v4323
        %v4349 = vsub.f32 %v4301, %v4325
        %v4350 = vsub.f32 %v4302, %v4327
        %v4351 = vsub.f32 %v4303, %v4329
        %v4352 = vsub.f32 %v4304, %v4331
        %v4353 = vsub.f32 %v4305, %v4333
        %v4354 = vsub.f32 %v4306, %v4335
        %v4355 = vsub.f32 %v4307, %v4337
        %v4356 = vsub.f32 %v4308, %v4339
        %v4357 = vsub.f32 %v4309, %v4341
        %v4358 = vmul.f32 %v4342, 1.442695
        %v4359 = vpow.pop %v4358
        %v4360 = vmul.f32 %v4343, 1.442695
        %v4361 = vpow.pop %v4360
        %v4362 = vmul.f32 %v4344, 1.442695
        %v4363 = vpow.pop %v4362
        %v4364 = vmul.f32 %v4345, 1.442695
        %v4365 = vpow.pop %v4364
        %v4366 = vmul.f32 %v4346, 1.442695
        %v4367 = vpow.pop %v4366
        %v4368 = vmul.f32 %v4347, 1.442695
        %v4369 = vpow.pop %v4368
        %v4370 = vmul.f32 %v4348, 1.442695
        %v4371 = vpow.pop %v4370
        %v4372 = vmul.f32 %v4349, 1.442695
        %v4373 = vpow.pop %v4372
        %v4374 = vmul.f32 %v4350, 1.442695
        %v4375 = vpow.pop %v4374
        %v4376 = vmul.f32 %v4351, 1.442695
        %v4377 = vpow.pop %v4376
        %v4378 = vmul.f32 %v4352, 1.442695
        %v4379 = vpow.pop %v4378
        %v4380 = vmul.f32 %v4353, 1.442695
        %v4381 = vpow.pop %v4380
        %v4382 = vmul.f32 %v4354, 1.442695
        %v4383 = vpow.pop %v4382
        %v4384 = vmul.f32 %v4355, 1.442695
        %v4385 = vpow.pop %v4384
        %v4386 = vmul.f32 %v4356, 1.442695
        %v4387 = vpow.pop %v4386
        %v4388 = vmul.f32 %v4357, 1.442695
        %v4389 = vpow.pop %v4388
        %4390 = vadd.xlane.f32.xlu0 %v4359
        %v4391 = vpop.xlane.xlu0 %4390
        %4392 = vadd.xlane.f32.xlu0 %v4361
        %v4393 = vpop.xlane.xlu0 %4392
        %4394 = vadd.xlane.f32.xlu0 %v4363
        %v4395 = vpop.xlane.xlu0 %4394
        %4396 = vadd.xlane.f32.xlu0 %v4365
        %v4397 = vpop.xlane.xlu0 %4396
        %4398 = vadd.xlane.f32.xlu0 %v4367
        %v4399 = vpop.xlane.xlu0 %4398
        %4400 = vadd.xlane.f32.xlu0 %v4369
        %v4401 = vpop.xlane.xlu0 %4400
        %4402 = vadd.xlane.f32.xlu0 %v4371
        %v4403 = vpop.xlane.xlu0 %4402
        %4404 = vadd.xlane.f32.xlu0 %v4373
        %v4405 = vpop.xlane.xlu0 %4404
        %4406 = vadd.xlane.f32.xlu0 %v4375
        %v4407 = vpop.xlane.xlu0 %4406
        %4408 = vadd.xlane.f32.xlu0 %v4377
        %v4409 = vpop.xlane.xlu0 %4408
        %4410 = vadd.xlane.f32.xlu0 %v4379
        %v4411 = vpop.xlane.xlu0 %4410
        %4412 = vadd.xlane.f32.xlu0 %v4381
        %v4413 = vpop.xlane.xlu0 %4412
        %4414 = vadd.xlane.f32.xlu0 %v4383
        %v4415 = vpop.xlane.xlu0 %4414
        %4416 = vadd.xlane.f32.xlu0 %v4385
        %v4417 = vpop.xlane.xlu0 %4416
        %4418 = vadd.xlane.f32.xlu0 %v4387
        %v4419 = vpop.xlane.xlu0 %4418
        %4420 = vadd.xlane.f32.xlu0 %v4389
        %v4421 = vpop.xlane.xlu0 %4420
        %v4422 = vrcp.pop %v4391
        %v4423 = vrcp.pop %v4393
        %v4424 = vrcp.pop %v4395
        %v4425 = vrcp.pop %v4397
        %v4426 = vrcp.pop %v4399
        %v4427 = vrcp.pop %v4401
        %v4428 = vrcp.pop %v4403
        %v4429 = vrcp.pop %v4405
        %v4430 = vrcp.pop %v4407
        %v4431 = vrcp.pop %v4409
        %v4432 = vrcp.pop %v4411
        %v4433 = vrcp.pop %v4413
        %v4434 = vrcp.pop %v4415
        %v4435 = vrcp.pop %v4417
        %v4436 = vrcp.pop %v4419
        %v4437 = vrcp.pop %v4421
        %v4438 = vmul.f32 %v4359, %v4422
        %v4439 = vmul.f32 %v4361, %v4423
        %v4440 = vmul.f32 %v4363, %v4424
        %v4441 = vmul.f32 %v4365, %v4425
        %v4442 = vmul.f32 %v4367, %v4426
        %v4443 = vmul.f32 %v4369, %v4427
        %v4444 = vmul.f32 %v4371, %v4428
        %v4445 = vmul.f32 %v4373, %v4429
        %v4446 = vmul.f32 %v4375, %v4430
        %v4447 = vmul.f32 %v4377, %v4431
        %v4448 = vmul.f32 %v4379, %v4432
        %v4449 = vmul.f32 %v4381, %v4433
        %v4450 = vmul.f32 %v4383, %v4434
        %v4451 = vmul.f32 %v4385, %v4435
        %v4452 = vmul.f32 %v4387, %v4436
        %v4453 = vmul.f32 %v4389, %v4437
        %v4454 = vpack.c.bf16 %v4439, %v4438
        %v4455 = vpack.c.bf16 %v4441, %v4440
        %v4456 = vpack.c.bf16 %v4443, %v4442
        %v4457 = vpack.c.bf16 %v4445, %v4444
        %v4458 = vpack.c.bf16 %v4447, %v4446
        %v4459 = vpack.c.bf16 %v4449, %v4448
        %v4460 = vpack.c.bf16 %v4451, %v4450
        %v4461 = vpack.c.bf16 %v4453, %v4452
        %4462 = vmatprep.subr.bf16.mxu0 0
        %4463 = vmatpush1.bf16.xpose.msra.mxu0 %v4461
        %4464 = vmatprep.subr.bf16.mxu0 0
        %4465 = vmatpush1.bf16.xpose.msra.mxu0 %v4460
        %4466 = vmatprep.subr.bf16.mxu0 0
        %4467 = vmatpush1.bf16.xpose.msra.mxu0 %v4459
        %4468 = vmatprep.subr.bf16.mxu0 0
        %4469 = vmatpush1.bf16.xpose.msra.mxu0 %v4458
        %4470 = vmatprep.subr.bf16.mxu0 0
        %4471 = vmatpush1.bf16.xpose.msra.mxu0 %v4457
        %4472 = vmatprep.subr.bf16.mxu0 0
        %4473 = vmatpush1.bf16.xpose.msra.mxu0 %v4456
        %4474 = vmatprep.subr.bf16.mxu0 0
        %4475 = vmatpush1.bf16.xpose.msra.mxu0 %v4455
        %4476 = vmatprep.subr.bf16.mxu0 0
        %4477 = vmatpush1.bf16.xpose.msra.mxu0 %v4454
        %4478 = vmatprep.subr.bf16.mxu0 0
        %4479 = vmatpush2.bf16.xpose.msra.mxu0 0
        %4480 = vmatprep.subr.bf16.mxu0 0
        %4481 = vmatpush2.bf16.xpose.msra.mxu0 0
        %4482 = vmatprep.subr.bf16.mxu0 0
        %4483 = vmatpush2.bf16.xpose.msra.mxu0 0
        %4484 = vmatprep.subr.bf16.mxu0 0
        %4485 = vmatpush2.bf16.xpose.msra.mxu0 0
        %4486 = vmatprep.subr.bf16.mxu0 0
        %4487 = vmatpush2.bf16.xpose.msra.mxu0 0
        %4488 = vmatprep.subr.bf16.mxu0 0
        %4489 = vmatpush2.bf16.xpose.msra.mxu0 0
        %4490 = vmatprep.subr.bf16.mxu0 0
        %4491 = vmatpush2.bf16.xpose.msra.mxu0 0
        %4492 = vmatprep.subr.bf16.mxu0 0
        %4493 = vmatpush2.bf16.xpose.msra.mxu0 0
        %4494 = vmatprep.mubr.bf16.mxu0 0
        %4495 = vmatmul.mubr.bf16.gmra.mxu0 %v1481
        %v4496 = vpop.f32.mrf.mxu0
        %v4497 = vadd.f32 0.0, %v4496
        %v4498 = vpop.f32.mrf.mxu0
        %v4499 = vpop.f32.mrf.mxu0
        %v4500 = vadd.f32 0.0, %v4499
        %v4501 = vpop.f32.mrf.mxu0
        %4502 = vmatprep.mubr.bf16.mxu0 0
        %4503 = vmatmul.mubr.bf16.gmra.mxu0 %v1484
        %v4504 = vpop.f32.mrf.mxu0
        %v4505 = vadd.f32 0.0, %v4504
        %v4506 = vpop.f32.mrf.mxu0
        %v4507 = vpop.f32.mrf.mxu0
        %v4508 = vadd.f32 0.0, %v4507
        %v4509 = vpop.f32.mrf.mxu0
        %4510 = vdwg.mxu0
        %v4511 = vadd.f32 %v3378, %v4497
        %v4512 = vadd.f32 %v3381, %v4500
        %v4513 = vadd.f32 %v3386, %v4505
        %v4514 = vadd.f32 %v3389, %v4508
        %v4515 = vadd.f32 %v4121, %v287
        %v4516 = vadd.f32 %v4125, %v287
        %v4517 = vadd.f32 %v4131, %v287
        %v4518 = vadd.f32 %v4135, %v287
        %v4519 = vadd.f32 %v4141, %v287
        %v4520 = vadd.f32 %v4145, %v287
        %v4521 = vadd.f32 %v4151, %v287
        %v4522 = vadd.f32 %v4155, %v287
        %v4523 = vadd.f32 %v4161, %v287
        %v4524 = vadd.f32 %v4165, %v287
        %v4525 = vadd.f32 %v4171, %v287
        %v4526 = vadd.f32 %v4175, %v287
        %v4527 = vadd.f32 %v4181, %v287
        %v4528 = vadd.f32 %v4185, %v287
        %v4529 = vadd.f32 %v4191, %v287
        %v4530 = vadd.f32 %v4195, %v287
        %4531 = vmax.xlane.f32.xlu0 %v4515
        %v4532 = vpop.xlane.xlu0 %4531
        %4533 = vmax.xlane.f32.xlu0 %v4516
        %v4534 = vpop.xlane.xlu0 %4533
        %4535 = vmax.xlane.f32.xlu0 %v4517
        %v4536 = vpop.xlane.xlu0 %4535
        %4537 = vmax.xlane.f32.xlu0 %v4518
        %v4538 = vpop.xlane.xlu0 %4537
        %4539 = vmax.xlane.f32.xlu0 %v4519
        %v4540 = vpop.xlane.xlu0 %4539
        %4541 = vmax.xlane.f32.xlu0 %v4520
        %v4542 = vpop.xlane.xlu0 %4541
        %4543 = vmax.xlane.f32.xlu0 %v4521
        %v4544 = vpop.xlane.xlu0 %4543
        %4545 = vmax.xlane.f32.xlu0 %v4522
        %v4546 = vpop.xlane.xlu0 %4545
        %4547 = vmax.xlane.f32.xlu0 %v4523
        %v4548 = vpop.xlane.xlu0 %4547
        %4549 = vmax.xlane.f32.xlu0 %v4524
        %v4550 = vpop.xlane.xlu0 %4549
        %4551 = vmax.xlane.f32.xlu0 %v4525
        %v4552 = vpop.xlane.xlu0 %4551
        %4553 = vmax.xlane.f32.xlu0 %v4526
        %v4554 = vpop.xlane.xlu0 %4553
        %4555 = vmax.xlane.f32.xlu0 %v4527
        %v4556 = vpop.xlane.xlu0 %4555
        %4557 = vmax.xlane.f32.xlu0 %v4528
        %v4558 = vpop.xlane.xlu0 %4557
        %4559 = vmax.xlane.f32.xlu0 %v4529
        %v4560 = vpop.xlane.xlu0 %4559
        %4561 = vmax.xlane.f32.xlu0 %v4530
        %v4562 = vpop.xlane.xlu0 %4561
        %v4563 = vsub.f32 %v4515, %v4532
        %v4564 = vsub.f32 %v4516, %v4534
        %v4565 = vsub.f32 %v4517, %v4536
        %v4566 = vsub.f32 %v4518, %v4538
        %v4567 = vsub.f32 %v4519, %v4540
        %v4568 = vsub.f32 %v4520, %v4542
        %v4569 = vsub.f32 %v4521, %v4544
        %v4570 = vsub.f32 %v4522, %v4546
        %v4571 = vsub.f32 %v4523, %v4548
        %v4572 = vsub.f32 %v4524, %v4550
        %v4573 = vsub.f32 %v4525, %v4552
        %v4574 = vsub.f32 %v4526, %v4554
        %v4575 = vsub.f32 %v4527, %v4556
        %v4576 = vsub.f32 %v4528, %v4558
        %v4577 = vsub.f32 %v4529, %v4560
        %v4578 = vsub.f32 %v4530, %v4562
        %v4579 = vmul.f32 %v4563, 1.442695
        %v4580 = vpow.pop %v4579
        %v4581 = vmul.f32 %v4564, 1.442695
        %v4582 = vpow.pop %v4581
        %v4583 = vmul.f32 %v4565, 1.442695
        %v4584 = vpow.pop %v4583
        %v4585 = vmul.f32 %v4566, 1.442695
        %v4586 = vpow.pop %v4585
        %v4587 = vmul.f32 %v4567, 1.442695
        %v4588 = vpow.pop %v4587
        %v4589 = vmul.f32 %v4568, 1.442695
        %v4590 = vpow.pop %v4589
        %v4591 = vmul.f32 %v4569, 1.442695
        %v4592 = vpow.pop %v4591
        %v4593 = vmul.f32 %v4570, 1.442695
        %v4594 = vpow.pop %v4593
        %v4595 = vmul.f32 %v4571, 1.442695
        %v4596 = vpow.pop %v4595
        %v4597 = vmul.f32 %v4572, 1.442695
        %v4598 = vpow.pop %v4597
        %v4599 = vmul.f32 %v4573, 1.442695
        %v4600 = vpow.pop %v4599
        %v4601 = vmul.f32 %v4574, 1.442695
        %v4602 = vpow.pop %v4601
        %v4603 = vmul.f32 %v4575, 1.442695
        %v4604 = vpow.pop %v4603
        %v4605 = vmul.f32 %v4576, 1.442695
        %v4606 = vpow.pop %v4605
        %v4607 = vmul.f32 %v4577, 1.442695
        %v4608 = vpow.pop %v4607
        %v4609 = vmul.f32 %v4578, 1.442695
        %v4610 = vpow.pop %v4609
        %4611 = vadd.xlane.f32.xlu0 %v4580
        %v4612 = vpop.xlane.xlu0 %4611
        %4613 = vadd.xlane.f32.xlu0 %v4582
        %v4614 = vpop.xlane.xlu0 %4613
        %4615 = vadd.xlane.f32.xlu0 %v4584
        %v4616 = vpop.xlane.xlu0 %4615
        %4617 = vadd.xlane.f32.xlu0 %v4586
        %v4618 = vpop.xlane.xlu0 %4617
        %4619 = vadd.xlane.f32.xlu0 %v4588
        %v4620 = vpop.xlane.xlu0 %4619
        %4621 = vadd.xlane.f32.xlu0 %v4590
        %v4622 = vpop.xlane.xlu0 %4621
        %4623 = vadd.xlane.f32.xlu0 %v4592
        %v4624 = vpop.xlane.xlu0 %4623
        %4625 = vadd.xlane.f32.xlu0 %v4594
        %v4626 = vpop.xlane.xlu0 %4625
        %4627 = vadd.xlane.f32.xlu0 %v4596
        %v4628 = vpop.xlane.xlu0 %4627
        %4629 = vadd.xlane.f32.xlu0 %v4598
        %v4630 = vpop.xlane.xlu0 %4629
        %4631 = vadd.xlane.f32.xlu0 %v4600
        %v4632 = vpop.xlane.xlu0 %4631
        %4633 = vadd.xlane.f32.xlu0 %v4602
        %v4634 = vpop.xlane.xlu0 %4633
        %4635 = vadd.xlane.f32.xlu0 %v4604
        %v4636 = vpop.xlane.xlu0 %4635
        %4637 = vadd.xlane.f32.xlu0 %v4606
        %v4638 = vpop.xlane.xlu0 %4637
        %4639 = vadd.xlane.f32.xlu0 %v4608
        %v4640 = vpop.xlane.xlu0 %4639
        %4641 = vadd.xlane.f32.xlu0 %v4610
        %v4642 = vpop.xlane.xlu0 %4641
        %v4643 = vrcp.pop %v4612
        %v4644 = vrcp.pop %v4614
        %v4645 = vrcp.pop %v4616
        %v4646 = vrcp.pop %v4618
        %v4647 = vrcp.pop %v4620
        %v4648 = vrcp.pop %v4622
        %v4649 = vrcp.pop %v4624
        %v4650 = vrcp.pop %v4626
        %v4651 = vrcp.pop %v4628
        %v4652 = vrcp.pop %v4630
        %v4653 = vrcp.pop %v4632
        %v4654 = vrcp.pop %v4634
        %v4655 = vrcp.pop %v4636
        %v4656 = vrcp.pop %v4638
        %v4657 = vrcp.pop %v4640
        %v4658 = vrcp.pop %v4642
        %v4659 = vmul.f32 %v4580, %v4643
        %v4660 = vmul.f32 %v4582, %v4644
        %v4661 = vmul.f32 %v4584, %v4645
        %v4662 = vmul.f32 %v4586, %v4646
        %v4663 = vmul.f32 %v4588, %v4647
        %v4664 = vmul.f32 %v4590, %v4648
        %v4665 = vmul.f32 %v4592, %v4649
        %v4666 = vmul.f32 %v4594, %v4650
        %v4667 = vmul.f32 %v4596, %v4651
        %v4668 = vmul.f32 %v4598, %v4652
        %v4669 = vmul.f32 %v4600, %v4653
        %v4670 = vmul.f32 %v4602, %v4654
        %v4671 = vmul.f32 %v4604, %v4655
        %v4672 = vmul.f32 %v4606, %v4656
        %v4673 = vmul.f32 %v4608, %v4657
        %v4674 = vmul.f32 %v4610, %v4658
        %v4675 = vpack.c.bf16 %v4660, %v4659
        %v4676 = vpack.c.bf16 %v4662, %v4661
        %v4677 = vpack.c.bf16 %v4664, %v4663
        %v4678 = vpack.c.bf16 %v4666, %v4665
        %v4679 = vpack.c.bf16 %v4668, %v4667
        %v4680 = vpack.c.bf16 %v4670, %v4669
        %v4681 = vpack.c.bf16 %v4672, %v4671
        %v4682 = vpack.c.bf16 %v4674, %v4673
        %4683 = vmatprep.subr.bf16.mxu0 0
        %4684 = vmatpush1.bf16.xpose.msra.mxu0 %v4682
        %4685 = vmatprep.subr.bf16.mxu0 0
        %4686 = vmatpush1.bf16.xpose.msra.mxu0 %v4681
        %4687 = vmatprep.subr.bf16.mxu0 0
        %4688 = vmatpush1.bf16.xpose.msra.mxu0 %v4680
        %4689 = vmatprep.subr.bf16.mxu0 0
        %4690 = vmatpush1.bf16.xpose.msra.mxu0 %v4679
        %4691 = vmatprep.subr.bf16.mxu0 0
        %4692 = vmatpush1.bf16.xpose.msra.mxu0 %v4678
        %4693 = vmatprep.subr.bf16.mxu0 0
        %4694 = vmatpush1.bf16.xpose.msra.mxu0 %v4677
        %4695 = vmatprep.subr.bf16.mxu0 0
        %4696 = vmatpush1.bf16.xpose.msra.mxu0 %v4676
        %4697 = vmatprep.subr.bf16.mxu0 0
        %4698 = vmatpush1.bf16.xpose.msra.mxu0 %v4675
        %4699 = vmatprep.subr.bf16.mxu0 0
        %4700 = vmatpush2.bf16.xpose.msra.mxu0 0
        %4701 = vmatprep.subr.bf16.mxu0 0
        %4702 = vmatpush2.bf16.xpose.msra.mxu0 0
        %4703 = vmatprep.subr.bf16.mxu0 0
        %4704 = vmatpush2.bf16.xpose.msra.mxu0 0
        %4705 = vmatprep.subr.bf16.mxu0 0
        %4706 = vmatpush2.bf16.xpose.msra.mxu0 0
        %4707 = vmatprep.subr.bf16.mxu0 0
        %4708 = vmatpush2.bf16.xpose.msra.mxu0 0
        %4709 = vmatprep.subr.bf16.mxu0 0
        %4710 = vmatpush2.bf16.xpose.msra.mxu0 0
        %4711 = vmatprep.subr.bf16.mxu0 0
        %4712 = vmatpush2.bf16.xpose.msra.mxu0 0
        %4713 = vmatprep.subr.bf16.mxu0 0
        %4714 = vmatpush2.bf16.xpose.msra.mxu0 0
        %4715 = vmatprep.mubr.bf16.mxu0 0
        %4716 = vmatmul.mubr.bf16.gmra.mxu0 %v1482
        %v4717 = vpop.f32.mrf.mxu0
        %v4718 = vadd.f32 0.0, %v4717
        %v4719 = vpop.f32.mrf.mxu0
        %v4720 = vpop.f32.mrf.mxu0
        %v4721 = vadd.f32 0.0, %v4720
        %v4722 = vpop.f32.mrf.mxu0
        %4723 = vmatprep.mubr.bf16.mxu0 0
        %4724 = vmatmul.mubr.bf16.gmra.mxu0 %v1485
        %v4725 = vpop.f32.mrf.mxu0
        %v4726 = vadd.f32 0.0, %v4725
        %v4727 = vpop.f32.mrf.mxu0
        %v4728 = vpop.f32.mrf.mxu0
        %v4729 = vadd.f32 0.0, %v4728
        %v4730 = vpop.f32.mrf.mxu0
        %4731 = vdwg.mxu0
        %v4732 = vadd.f32 %v3644, %v4718
        %v4733 = vadd.f32 %v3647, %v4721
        %v4734 = vadd.f32 %v3652, %v4726
        %v4735 = vadd.f32 %v3655, %v4729
        %v4736 = vadd.f32 %v4232, %v287
        %v4737 = vadd.f32 %v4235, %v287
        %v4738 = vadd.f32 %v4240, %v287
        %v4739 = vadd.f32 %v4243, %v287
        %v4740 = vadd.f32 %v4248, %v287
        %v4741 = vadd.f32 %v4251, %v287
        %v4742 = vadd.f32 %v4256, %v287
        %v4743 = vadd.f32 %v4259, %v287
        %v4744 = vadd.f32 %v4264, %v287
        %v4745 = vadd.f32 %v4267, %v287
        %v4746 = vadd.f32 %v4272, %v287
        %v4747 = vadd.f32 %v4275, %v287
        %v4748 = vadd.f32 %v4280, %v287
        %v4749 = vadd.f32 %v4283, %v287
        %v4750 = vadd.f32 %v4288, %v287
        %v4751 = vadd.f32 %v4291, %v287
        %4752 = vmax.xlane.f32.xlu0 %v4736
        %v4753 = vpop.xlane.xlu0 %4752
        %4754 = vmax.xlane.f32.xlu0 %v4737
        %v4755 = vpop.xlane.xlu0 %4754
        %4756 = vmax.xlane.f32.xlu0 %v4738
        %v4757 = vpop.xlane.xlu0 %4756
        %4758 = vmax.xlane.f32.xlu0 %v4739
        %v4759 = vpop.xlane.xlu0 %4758
        %4760 = vmax.xlane.f32.xlu0 %v4740
        %v4761 = vpop.xlane.xlu0 %4760
        %4762 = vmax.xlane.f32.xlu0 %v4741
        %v4763 = vpop.xlane.xlu0 %4762
        %4764 = vmax.xlane.f32.xlu0 %v4742
        %v4765 = vpop.xlane.xlu0 %4764
        %4766 = vmax.xlane.f32.xlu0 %v4743
        %v4767 = vpop.xlane.xlu0 %4766
        %4768 = vmax.xlane.f32.xlu0 %v4744
        %v4769 = vpop.xlane.xlu0 %4768
        %4770 = vmax.xlane.f32.xlu0 %v4745
        %v4771 = vpop.xlane.xlu0 %4770
        %4772 = vmax.xlane.f32.xlu0 %v4746
        %v4773 = vpop.xlane.xlu0 %4772
        %4774 = vmax.xlane.f32.xlu0 %v4747
        %v4775 = vpop.xlane.xlu0 %4774
        %4776 = vmax.xlane.f32.xlu0 %v4748
        %v4777 = vpop.xlane.xlu0 %4776
        %4778 = vmax.xlane.f32.xlu0 %v4749
        %v4779 = vpop.xlane.xlu0 %4778
        %4780 = vmax.xlane.f32.xlu0 %v4750
        %v4781 = vpop.xlane.xlu0 %4780
        %4782 = vmax.xlane.f32.xlu0 %v4751
        %v4783 = vpop.xlane.xlu0 %4782
        %v4784 = vsub.f32 %v4736, %v4753
        %v4785 = vsub.f32 %v4737, %v4755
        %v4786 = vsub.f32 %v4738, %v4757
        %v4787 = vsub.f32 %v4739, %v4759
        %v4788 = vsub.f32 %v4740, %v4761
        %v4789 = vsub.f32 %v4741, %v4763
        %v4790 = vsub.f32 %v4742, %v4765
        %v4791 = vsub.f32 %v4743, %v4767
        %v4792 = vsub.f32 %v4744, %v4769
        %v4793 = vsub.f32 %v4745, %v4771
        %v4794 = vsub.f32 %v4746, %v4773
        %v4795 = vsub.f32 %v4747, %v4775
        %v4796 = vsub.f32 %v4748, %v4777
        %v4797 = vsub.f32 %v4749, %v4779
        %v4798 = vsub.f32 %v4750, %v4781
        %v4799 = vsub.f32 %v4751, %v4783
        %v4800 = vmul.f32 %v4784, 1.442695
        %v4801 = vpow.pop %v4800
        %v4802 = vmul.f32 %v4785, 1.442695
        %v4803 = vpow.pop %v4802
        %v4804 = vmul.f32 %v4786, 1.442695
        %v4805 = vpow.pop %v4804
        %v4806 = vmul.f32 %v4787, 1.442695
        %v4807 = vpow.pop %v4806
        %v4808 = vmul.f32 %v4788, 1.442695
        %v4809 = vpow.pop %v4808
        %v4810 = vmul.f32 %v4789, 1.442695
        %v4811 = vpow.pop %v4810
        %v4812 = vmul.f32 %v4790, 1.442695
        %v4813 = vpow.pop %v4812
        %v4814 = vmul.f32 %v4791, 1.442695
        %v4815 = vpow.pop %v4814
        %v4816 = vmul.f32 %v4792, 1.442695
        %v4817 = vpow.pop %v4816
        %v4818 = vmul.f32 %v4793, 1.442695
        %v4819 = vpow.pop %v4818
        %v4820 = vmul.f32 %v4794, 1.442695
        %v4821 = vpow.pop %v4820
        %v4822 = vmul.f32 %v4795, 1.442695
        %v4823 = vpow.pop %v4822
        %v4824 = vmul.f32 %v4796, 1.442695
        %v4825 = vpow.pop %v4824
        %v4826 = vmul.f32 %v4797, 1.442695
        %v4827 = vpow.pop %v4826
        %v4828 = vmul.f32 %v4798, 1.442695
        %v4829 = vpow.pop %v4828
        %v4830 = vmul.f32 %v4799, 1.442695
        %v4831 = vpow.pop %v4830
        %4832 = vadd.xlane.f32.xlu0 %v4801
        %v4833 = vpop.xlane.xlu0 %4832
        %4834 = vadd.xlane.f32.xlu0 %v4803
        %v4835 = vpop.xlane.xlu0 %4834
        %4836 = vadd.xlane.f32.xlu0 %v4805
        %v4837 = vpop.xlane.xlu0 %4836
        %4838 = vadd.xlane.f32.xlu0 %v4807
        %v4839 = vpop.xlane.xlu0 %4838
        %4840 = vadd.xlane.f32.xlu0 %v4809
        %v4841 = vpop.xlane.xlu0 %4840
        %4842 = vadd.xlane.f32.xlu0 %v4811
        %v4843 = vpop.xlane.xlu0 %4842
        %4844 = vadd.xlane.f32.xlu0 %v4813
        %v4845 = vpop.xlane.xlu0 %4844
        %4846 = vadd.xlane.f32.xlu0 %v4815
        %v4847 = vpop.xlane.xlu0 %4846
        %4848 = vadd.xlane.f32.xlu0 %v4817
        %v4849 = vpop.xlane.xlu0 %4848
        %4850 = vadd.xlane.f32.xlu0 %v4819
        %v4851 = vpop.xlane.xlu0 %4850
        %4852 = vadd.xlane.f32.xlu0 %v4821
        %v4853 = vpop.xlane.xlu0 %4852
        %4854 = vadd.xlane.f32.xlu0 %v4823
        %v4855 = vpop.xlane.xlu0 %4854
        %4856 = vadd.xlane.f32.xlu0 %v4825
        %v4857 = vpop.xlane.xlu0 %4856
        %4858 = vadd.xlane.f32.xlu0 %v4827
        %v4859 = vpop.xlane.xlu0 %4858
        %4860 = vadd.xlane.f32.xlu0 %v4829
        %v4861 = vpop.xlane.xlu0 %4860
        %4862 = vadd.xlane.f32.xlu0 %v4831
        %v4863 = vpop.xlane.xlu0 %4862
        %v4864 = vrcp.pop %v4833
        %v4865 = vrcp.pop %v4835
        %v4866 = vrcp.pop %v4837
        %v4867 = vrcp.pop %v4839
        %v4868 = vrcp.pop %v4841
        %v4869 = vrcp.pop %v4843
        %v4870 = vrcp.pop %v4845
        %v4871 = vrcp.pop %v4847
        %v4872 = vrcp.pop %v4849
        %v4873 = vrcp.pop %v4851
        %v4874 = vrcp.pop %v4853
        %v4875 = vrcp.pop %v4855
        %v4876 = vrcp.pop %v4857
        %v4877 = vrcp.pop %v4859
        %v4878 = vrcp.pop %v4861
        %v4879 = vrcp.pop %v4863
        %v4880 = vmul.f32 %v4801, %v4864
        %v4881 = vmul.f32 %v4803, %v4865
        %v4882 = vmul.f32 %v4805, %v4866
        %v4883 = vmul.f32 %v4807, %v4867
        %v4884 = vmul.f32 %v4809, %v4868
        %v4885 = vmul.f32 %v4811, %v4869
        %v4886 = vmul.f32 %v4813, %v4870
        %v4887 = vmul.f32 %v4815, %v4871
        %v4888 = vmul.f32 %v4817, %v4872
        %v4889 = vmul.f32 %v4819, %v4873
        %v4890 = vmul.f32 %v4821, %v4874
        %v4891 = vmul.f32 %v4823, %v4875
        %v4892 = vmul.f32 %v4825, %v4876
        %v4893 = vmul.f32 %v4827, %v4877
        %v4894 = vmul.f32 %v4829, %v4878
        %v4895 = vmul.f32 %v4831, %v4879
        %v4896 = vpack.c.bf16 %v4881, %v4880
        %v4897 = vpack.c.bf16 %v4883, %v4882
        %v4898 = vpack.c.bf16 %v4885, %v4884
        %v4899 = vpack.c.bf16 %v4887, %v4886
        %v4900 = vpack.c.bf16 %v4889, %v4888
        %v4901 = vpack.c.bf16 %v4891, %v4890
        %v4902 = vpack.c.bf16 %v4893, %v4892
        %v4903 = vpack.c.bf16 %v4895, %v4894
        %4904 = vmatprep.subr.bf16.mxu0 0
        %4905 = vmatpush1.bf16.xpose.msra.mxu0 %v4903
        %4906 = vmatprep.subr.bf16.mxu0 0
        %4907 = vmatpush1.bf16.xpose.msra.mxu0 %v4902
        %4908 = vmatprep.subr.bf16.mxu0 0
        %4909 = vmatpush1.bf16.xpose.msra.mxu0 %v4901
        %4910 = vmatprep.subr.bf16.mxu0 0
        %4911 = vmatpush1.bf16.xpose.msra.mxu0 %v4900
        %4912 = vmatprep.subr.bf16.mxu0 0
        %4913 = vmatpush1.bf16.xpose.msra.mxu0 %v4899
        %4914 = vmatprep.subr.bf16.mxu0 0
        %4915 = vmatpush1.bf16.xpose.msra.mxu0 %v4898
        %4916 = vmatprep.subr.bf16.mxu0 0
        %4917 = vmatpush1.bf16.xpose.msra.mxu0 %v4897
        %4918 = vmatprep.subr.bf16.mxu0 0
        %4919 = vmatpush1.bf16.xpose.msra.mxu0 %v4896
        %4920 = vmatprep.subr.bf16.mxu0 0
        %4921 = vmatpush2.bf16.xpose.msra.mxu0 0
        %4922 = vmatprep.subr.bf16.mxu0 0
        %4923 = vmatpush2.bf16.xpose.msra.mxu0 0
        %4924 = vmatprep.subr.bf16.mxu0 0
        %4925 = vmatpush2.bf16.xpose.msra.mxu0 0
        %4926 = vmatprep.subr.bf16.mxu0 0
        %4927 = vmatpush2.bf16.xpose.msra.mxu0 0
        %4928 = vmatprep.subr.bf16.mxu0 0
        %4929 = vmatpush2.bf16.xpose.msra.mxu0 0
        %4930 = vmatprep.subr.bf16.mxu0 0
        %4931 = vmatpush2.bf16.xpose.msra.mxu0 0
        %4932 = vmatprep.subr.bf16.mxu0 0
        %4933 = vmatpush2.bf16.xpose.msra.mxu0 0
        %4934 = vmatprep.subr.bf16.mxu0 0
        %4935 = vmatpush2.bf16.xpose.msra.mxu0 0
        %4936 = vmatprep.mubr.bf16.mxu0 0
        %4937 = vmatmul.mubr.bf16.gmra.mxu0 %v1483
        %v4938 = vpop.f32.mrf.mxu0
        %v4939 = vadd.f32 0.0, %v4938
        %v4940 = vpop.f32.mrf.mxu0
        %v4941 = vpop.f32.mrf.mxu0
        %v4942 = vadd.f32 0.0, %v4941
        %v4943 = vpop.f32.mrf.mxu0
        %4944 = vmatprep.mubr.bf16.mxu0 0
        %4945 = vmatmul.mubr.bf16.gmra.mxu0 %v1486
        %v4946 = vpop.f32.mrf.mxu0
        %v4947 = vadd.f32 0.0, %v4946
        %v4948 = vpop.f32.mrf.mxu0
        %v4949 = vpop.f32.mrf.mxu0
        %v4950 = vadd.f32 0.0, %v4949
        %v4951 = vpop.f32.mrf.mxu0
        %4952 = vdwg.mxu0
        %v4953 = vadd.f32 %v3910, %v4939
        %v4954 = vadd.f32 %v3913, %v4942
        %v4955 = vadd.f32 %v3918, %v4947
        %v4956 = vadd.f32 %v3921, %v4950
        %4957 = vrot.lane.b32.xlu0 %v1930, 104
        %v4958 = vpop.permute.xlu0 %4957
        %4959 = vrot.lane.b32.xlu0 %v1931, 104
        %v4960 = vpop.permute.xlu0 %4959
        %4961 = vrot.lane.b32.xlu0 %v1932, 104
        %v4962 = vpop.permute.xlu0 %4961
        %4963 = vrot.lane.b32.xlu0 %v1933, 104
        %v4964 = vpop.permute.xlu0 %4963
        %4965 = vrot.lane.b32.xlu0 %v1934, 104
        %v4966 = vpop.permute.xlu0 %4965
        %4967 = vrot.lane.b32.xlu0 %v1935, 104
        %v4968 = vpop.permute.xlu0 %4967
        %4969 = vrot.lane.b32.xlu0 %v1936, 104
        %v4970 = vpop.permute.xlu0 %4969
        %4971 = vrot.lane.b32.xlu0 %v1937, 104
        %v4972 = vpop.permute.xlu0 %4971
        %4973 = vrot.lane.b32.xlu0 %v718, 104
        %v4974 = vpop.permute.xlu0 %4973
        %4975 = vrot.lane.b32.xlu0 %v719, 104
        %v4976 = vpop.permute.xlu0 %4975
        %4977 = vrot.lane.b32.xlu0 %v720, 104
        %v4978 = vpop.permute.xlu0 %4977
        %4979 = vrot.lane.b32.xlu0 %v721, 104
        %v4980 = vpop.permute.xlu0 %4979
        %4981 = vrot.lane.b32.xlu0 %v722, 104
        %v4982 = vpop.permute.xlu0 %4981
        %4983 = vrot.lane.b32.xlu0 %v723, 104
        %v4984 = vpop.permute.xlu0 %4983
        %4985 = vrot.lane.b32.xlu0 %v724, 104
        %v4986 = vpop.permute.xlu0 %4985
        %4987 = vrot.lane.b32.xlu0 %v725, 104
        %v4988 = vpop.permute.xlu0 %4987
        %4989 = vrot.lane.b32.xlu0 %v726, 104
        %v4990 = vpop.permute.xlu0 %4989
        %4991 = vrot.lane.b32.xlu0 %v727, 104
        %v4992 = vpop.permute.xlu0 %4991
        %4993 = vrot.lane.b32.xlu0 %v728, 104
        %v4994 = vpop.permute.xlu0 %4993
        %4995 = vrot.lane.b32.xlu0 %v729, 104
        %v4996 = vpop.permute.xlu0 %4995
        %4997 = vrot.lane.b32.xlu0 %v730, 104
        %v4998 = vpop.permute.xlu0 %4997
        %4999 = vrot.lane.b32.xlu0 %v731, 104
        %v5000 = vpop.permute.xlu0 %4999
        %5001 = vrot.lane.b32.xlu0 %v732, 104
        %v5002 = vpop.permute.xlu0 %5001
        %5003 = vrot.lane.b32.xlu0 %v733, 104
        %v5004 = vpop.permute.xlu0 %5003
        %5005 = vrot.lane.b32.xlu0 %v734, 104
        %v5006 = vpop.permute.xlu0 %5005
        %5007 = vrot.lane.b32.xlu0 %v735, 104
        %v5008 = vpop.permute.xlu0 %5007
        %5009 = vrot.lane.b32.xlu0 %v736, 104
        %v5010 = vpop.permute.xlu0 %5009
        %5011 = vrot.lane.b32.xlu0 %v737, 104
        %v5012 = vpop.permute.xlu0 %5011
        %5013 = vrot.lane.b32.xlu0 %v738, 104
        %v5014 = vpop.permute.xlu0 %5013
        %5015 = vrot.lane.b32.xlu0 %v739, 104
        %v5016 = vpop.permute.xlu0 %5015
        %5017 = vrot.lane.b32.xlu0 %v740, 104
        %v5018 = vpop.permute.xlu0 %5017
        %5019 = vrot.lane.b32.xlu0 %v741, 104
        %v5020 = vpop.permute.xlu0 %5019
        %v5022 = vsel %vm824, %v4958, 0
        %v5025 = vsel %vm824, %v4960, 0
        %v5028 = vsel %vm824, %v4962, 0
        %v5031 = vsel %vm824, %v4964, 0
        %v5034 = vsel %vm824, %v4966, 0
        %v5037 = vsel %vm824, %v4968, 0
        %v5040 = vsel %vm824, %v4970, 0
        %v5043 = vsel %vm824, %v4972, 0
        %v5046 = vsel %vm824, %v4974, 0
        %v5049 = vsel %vm824, %v4976, 0
        %v5052 = vsel %vm824, %v4978, 0
        %v5055 = vsel %vm824, %v4980, 0
        %v5058 = vsel %vm824, %v4982, 0
        %v5061 = vsel %vm824, %v4984, 0
        %v5064 = vsel %vm824, %v4986, 0
        %v5067 = vsel %vm824, %v4988, 0
        %v5070 = vsel %vm824, %v4990, 0
        %v5073 = vsel %vm824, %v4992, 0
        %v5076 = vsel %vm824, %v4994, 0
        %v5079 = vsel %vm824, %v4996, 0
        %v5082 = vsel %vm824, %v4998, 0
        %v5085 = vsel %vm824, %v5000, 0
        %v5088 = vsel %vm824, %v5002, 0
        %v5091 = vsel %vm824, %v5004, 0
        %v5094 = vsel %vm824, %v5006, 0
        %v5097 = vsel %vm824, %v5008, 0
        %v5100 = vsel %vm824, %v5010, 0
        %v5103 = vsel %vm824, %v5012, 0
        %v5106 = vsel %vm824, %v5014, 0
        %v5109 = vsel %vm824, %v5016, 0
        %v5112 = vsel %vm824, %v5018, 0
        %v5115 = vsel %vm824, %v5020, 0
        %5117 = vmatprep.subr.bf16.mxu0 0
        %5118 = vmatpush1.bf16.xpose.msra.mxu0 %v5067
        %5119 = vmatprep.subr.bf16.mxu0 0
        %5120 = vmatpush1.bf16.xpose.msra.mxu0 %v5064
        %5121 = vmatprep.subr.bf16.mxu0 0
        %5122 = vmatpush1.bf16.xpose.msra.mxu0 %v5061
        %5123 = vmatprep.subr.bf16.mxu0 0
        %5124 = vmatpush1.bf16.xpose.msra.mxu0 %v5058
        %5125 = vmatprep.subr.bf16.mxu0 0
        %5126 = vmatpush1.bf16.xpose.msra.mxu0 %v5055
        %5127 = vmatprep.subr.bf16.mxu0 0
        %5128 = vmatpush1.bf16.xpose.msra.mxu0 %v5052
        %5129 = vmatprep.subr.bf16.mxu0 0
        %5130 = vmatpush1.bf16.xpose.msra.mxu0 %v5049
        %5131 = vmatprep.subr.bf16.mxu0 0
        %5132 = vmatpush1.bf16.xpose.msra.mxu0 %v5046
        %5133 = vmatprep.subr.bf16.mxu0 0
        %5134 = vmatpush2.bf16.xpose.msra.mxu0 %v5091
        %5135 = vmatprep.subr.bf16.mxu0 0
        %5136 = vmatpush2.bf16.xpose.msra.mxu0 %v5088
        %5137 = vmatprep.subr.bf16.mxu0 0
        %5138 = vmatpush2.bf16.xpose.msra.mxu0 %v5085
        %5139 = vmatprep.subr.bf16.mxu0 0
        %5140 = vmatpush2.bf16.xpose.msra.mxu0 %v5082
        %5141 = vmatprep.subr.bf16.mxu0 0
        %5142 = vmatpush2.bf16.xpose.msra.mxu0 %v5079
        %5143 = vmatprep.subr.bf16.mxu0 0
        %5144 = vmatpush2.bf16.xpose.msra.mxu0 %v5076
        %5145 = vmatprep.subr.bf16.mxu0 0
        %5146 = vmatpush2.bf16.xpose.msra.mxu0 %v5073
        %5147 = vmatprep.subr.bf16.mxu0 0
        %5148 = vmatpush2.bf16.xpose.msra.mxu0 %v5070
        %5149 = vmatprep.mubr.bf16.mxu0 0
        %5150 = vmatmul.mubr.bf16.gmra.mxu0 %v5022
        %v5151 = vpop.f32.mrf.mxu0
        %v5152 = vadd.f32 0.0, %v5151
        %v5153 = vpop.f32.mrf.mxu0
        %v5154 = vadd.f32 0.0, %v5153
        %v5155 = vpop.f32.mrf.mxu0
        %v5156 = vadd.f32 0.0, %v5155
        %v5157 = vpop.f32.mrf.mxu0
        %v5158 = vadd.f32 0.0, %v5157
        %5159 = vmatprep.mubr.bf16.mxu0 0
        %5160 = vmatmul.mubr.bf16.gmra.mxu0 %v5025
        %v5161 = vpop.f32.mrf.mxu0
        %v5162 = vadd.f32 0.0, %v5161
        %v5163 = vpop.f32.mrf.mxu0
        %v5164 = vadd.f32 0.0, %v5163
        %v5165 = vpop.f32.mrf.mxu0
        %v5166 = vadd.f32 0.0, %v5165
        %v5167 = vpop.f32.mrf.mxu0
        %v5168 = vadd.f32 0.0, %v5167
        %5169 = vmatprep.mubr.bf16.mxu0 0
        %5170 = vmatmul.mubr.bf16.gmra.mxu0 %v5028
        %v5171 = vpop.f32.mrf.mxu0
        %v5172 = vadd.f32 0.0, %v5171
        %v5173 = vpop.f32.mrf.mxu0
        %v5174 = vadd.f32 0.0, %v5173
        %v5175 = vpop.f32.mrf.mxu0
        %v5176 = vadd.f32 0.0, %v5175
        %v5177 = vpop.f32.mrf.mxu0
        %v5178 = vadd.f32 0.0, %v5177
        %5179 = vmatprep.mubr.bf16.mxu0 0
        %5180 = vmatmul.mubr.bf16.gmra.mxu0 %v5031
        %v5181 = vpop.f32.mrf.mxu0
        %v5182 = vadd.f32 0.0, %v5181
        %v5183 = vpop.f32.mrf.mxu0
        %v5184 = vadd.f32 0.0, %v5183
        %v5185 = vpop.f32.mrf.mxu0
        %v5186 = vadd.f32 0.0, %v5185
        %v5187 = vpop.f32.mrf.mxu0
        %v5188 = vadd.f32 0.0, %v5187
        %5189 = vmatprep.mubr.bf16.mxu0 0
        %5190 = vmatmul.mubr.bf16.gmra.mxu0 %v5034
        %v5191 = vpop.f32.mrf.mxu0
        %v5192 = vadd.f32 0.0, %v5191
        %v5193 = vpop.f32.mrf.mxu0
        %v5194 = vadd.f32 0.0, %v5193
        %v5195 = vpop.f32.mrf.mxu0
        %v5196 = vadd.f32 0.0, %v5195
        %v5197 = vpop.f32.mrf.mxu0
        %v5198 = vadd.f32 0.0, %v5197
        %5199 = vmatprep.mubr.bf16.mxu0 0
        %5200 = vmatmul.mubr.bf16.gmra.mxu0 %v5037
        %v5201 = vpop.f32.mrf.mxu0
        %v5202 = vadd.f32 0.0, %v5201
        %v5203 = vpop.f32.mrf.mxu0
        %v5204 = vadd.f32 0.0, %v5203
        %v5205 = vpop.f32.mrf.mxu0
        %v5206 = vadd.f32 0.0, %v5205
        %v5207 = vpop.f32.mrf.mxu0
        %v5208 = vadd.f32 0.0, %v5207
        %5209 = vmatprep.mubr.bf16.mxu0 0
        %5210 = vmatmul.mubr.bf16.gmra.mxu0 %v5040
        %v5211 = vpop.f32.mrf.mxu0
        %v5212 = vadd.f32 0.0, %v5211
        %v5213 = vpop.f32.mrf.mxu0
        %v5214 = vadd.f32 0.0, %v5213
        %v5215 = vpop.f32.mrf.mxu0
        %v5216 = vadd.f32 0.0, %v5215
        %v5217 = vpop.f32.mrf.mxu0
        %v5218 = vadd.f32 0.0, %v5217
        %5219 = vmatprep.mubr.bf16.mxu0 0
        %5220 = vmatmul.mubr.bf16.gmra.mxu0 %v5043
        %v5221 = vpop.f32.mrf.mxu0
        %v5222 = vadd.f32 0.0, %v5221
        %v5223 = vpop.f32.mrf.mxu0
        %v5224 = vadd.f32 0.0, %v5223
        %v5225 = vpop.f32.mrf.mxu0
        %v5226 = vadd.f32 0.0, %v5225
        %v5227 = vpop.f32.mrf.mxu0
        %v5228 = vadd.f32 0.0, %v5227
        %5229 = vdwg.mxu0
        %5230 = vmatprep.subr.bf16.mxu0 0
        %5231 = vmatpush1.bf16.xpose.msra.mxu0 %v5115
        %5232 = vmatprep.subr.bf16.mxu0 0
        %5233 = vmatpush1.bf16.xpose.msra.mxu0 %v5112
        %5234 = vmatprep.subr.bf16.mxu0 0
        %5235 = vmatpush1.bf16.xpose.msra.mxu0 %v5109
        %5236 = vmatprep.subr.bf16.mxu0 0
        %5237 = vmatpush1.bf16.xpose.msra.mxu0 %v5106
        %5238 = vmatprep.subr.bf16.mxu0 0
        %5239 = vmatpush1.bf16.xpose.msra.mxu0 %v5103
        %5240 = vmatprep.subr.bf16.mxu0 0
        %5241 = vmatpush1.bf16.xpose.msra.mxu0 %v5100
        %5242 = vmatprep.subr.bf16.mxu0 0
        %5243 = vmatpush1.bf16.xpose.msra.mxu0 %v5097
        %5244 = vmatprep.subr.bf16.mxu0 0
        %5245 = vmatpush1.bf16.xpose.msra.mxu0 %v5094
        %5246 = vmatprep.subr.bf16.mxu0 0
        %5247 = vmatpush2.bf16.xpose.msra.mxu0 0
        %5248 = vmatprep.subr.bf16.mxu0 0
        %5249 = vmatpush2.bf16.xpose.msra.mxu0 0
        %5250 = vmatprep.subr.bf16.mxu0 0
        %5251 = vmatpush2.bf16.xpose.msra.mxu0 0
        %5252 = vmatprep.subr.bf16.mxu0 0
        %5253 = vmatpush2.bf16.xpose.msra.mxu0 0
        %5254 = vmatprep.subr.bf16.mxu0 0
        %5255 = vmatpush2.bf16.xpose.msra.mxu0 0
        %5256 = vmatprep.subr.bf16.mxu0 0
        %5257 = vmatpush2.bf16.xpose.msra.mxu0 0
        %5258 = vmatprep.subr.bf16.mxu0 0
        %5259 = vmatpush2.bf16.xpose.msra.mxu0 0
        %5260 = vmatprep.subr.bf16.mxu0 0
        %5261 = vmatpush2.bf16.xpose.msra.mxu0 0
        %5262 = vmatprep.mubr.bf16.mxu0 0
        %5263 = vmatmul.mubr.bf16.gmra.mxu0 %v5022
        %v5264 = vpop.f32.mrf.mxu0
        %v5265 = vadd.f32 0.0, %v5264
        %v5266 = vpop.f32.mrf.mxu0
        %v5267 = vpop.f32.mrf.mxu0
        %v5268 = vadd.f32 0.0, %v5267
        %v5269 = vpop.f32.mrf.mxu0
        %5270 = vmatprep.mubr.bf16.mxu0 0
        %5271 = vmatmul.mubr.bf16.gmra.mxu0 %v5025
        %v5272 = vpop.f32.mrf.mxu0
        %v5273 = vadd.f32 0.0, %v5272
        %v5274 = vpop.f32.mrf.mxu0
        %v5275 = vpop.f32.mrf.mxu0
        %v5276 = vadd.f32 0.0, %v5275
        %v5277 = vpop.f32.mrf.mxu0
        %5278 = vmatprep.mubr.bf16.mxu0 0
        %5279 = vmatmul.mubr.bf16.gmra.mxu0 %v5028
        %v5280 = vpop.f32.mrf.mxu0
        %v5281 = vadd.f32 0.0, %v5280
        %v5282 = vpop.f32.mrf.mxu0
        %v5283 = vpop.f32.mrf.mxu0
        %v5284 = vadd.f32 0.0, %v5283
        %v5285 = vpop.f32.mrf.mxu0
        %5286 = vmatprep.mubr.bf16.mxu0 0
        %5287 = vmatmul.mubr.bf16.gmra.mxu0 %v5031
        %v5288 = vpop.f32.mrf.mxu0
        %v5289 = vadd.f32 0.0, %v5288
        %v5290 = vpop.f32.mrf.mxu0
        %v5291 = vpop.f32.mrf.mxu0
        %v5292 = vadd.f32 0.0, %v5291
        %v5293 = vpop.f32.mrf.mxu0
        %5294 = vmatprep.mubr.bf16.mxu0 0
        %5295 = vmatmul.mubr.bf16.gmra.mxu0 %v5034
        %v5296 = vpop.f32.mrf.mxu0
        %v5297 = vadd.f32 0.0, %v5296
        %v5298 = vpop.f32.mrf.mxu0
        %v5299 = vpop.f32.mrf.mxu0
        %v5300 = vadd.f32 0.0, %v5299
        %v5301 = vpop.f32.mrf.mxu0
        %5302 = vmatprep.mubr.bf16.mxu0 0
        %5303 = vmatmul.mubr.bf16.gmra.mxu0 %v5037
        %v5304 = vpop.f32.mrf.mxu0
        %v5305 = vadd.f32 0.0, %v5304
        %v5306 = vpop.f32.mrf.mxu0
        %v5307 = vpop.f32.mrf.mxu0
        %v5308 = vadd.f32 0.0, %v5307
        %v5309 = vpop.f32.mrf.mxu0
        %5310 = vmatprep.mubr.bf16.mxu0 0
        %5311 = vmatmul.mubr.bf16.gmra.mxu0 %v5040
        %v5312 = vpop.f32.mrf.mxu0
        %v5313 = vadd.f32 0.0, %v5312
        %v5314 = vpop.f32.mrf.mxu0
        %v5315 = vpop.f32.mrf.mxu0
        %v5316 = vadd.f32 0.0, %v5315
        %v5317 = vpop.f32.mrf.mxu0
        %5318 = vmatprep.mubr.bf16.mxu0 0
        %5319 = vmatmul.mubr.bf16.gmra.mxu0 %v5043
        %v5320 = vpop.f32.mrf.mxu0
        %v5321 = vadd.f32 0.0, %v5320
        %v5322 = vpop.f32.mrf.mxu0
        %v5323 = vpop.f32.mrf.mxu0
        %v5324 = vadd.f32 0.0, %v5323
        %v5325 = vpop.f32.mrf.mxu0
        %5326 = vdwg.mxu0
        %v5327 = vadd.f32 %v5152, %v287
        %v5328 = vadd.f32 %v5156, %v287
        %v5329 = vadd.f32 %v5162, %v287
        %v5330 = vadd.f32 %v5166, %v287
        %v5331 = vadd.f32 %v5172, %v287
        %v5332 = vadd.f32 %v5176, %v287
        %v5333 = vadd.f32 %v5182, %v287
        %v5334 = vadd.f32 %v5186, %v287
        %v5335 = vadd.f32 %v5192, %v287
        %v5336 = vadd.f32 %v5196, %v287
        %v5337 = vadd.f32 %v5202, %v287
        %v5338 = vadd.f32 %v5206, %v287
        %v5339 = vadd.f32 %v5212, %v287
        %v5340 = vadd.f32 %v5216, %v287
        %v5341 = vadd.f32 %v5222, %v287
        %v5342 = vadd.f32 %v5226, %v287
        %5343 = vmax.xlane.f32.xlu0 %v5327
        %v5344 = vpop.xlane.xlu0 %5343
        %5345 = vmax.xlane.f32.xlu0 %v5328
        %v5346 = vpop.xlane.xlu0 %5345
        %5347 = vmax.xlane.f32.xlu0 %v5329
        %v5348 = vpop.xlane.xlu0 %5347
        %5349 = vmax.xlane.f32.xlu0 %v5330
        %v5350 = vpop.xlane.xlu0 %5349
        %5351 = vmax.xlane.f32.xlu0 %v5331
        %v5352 = vpop.xlane.xlu0 %5351
        %5353 = vmax.xlane.f32.xlu0 %v5332
        %v5354 = vpop.xlane.xlu0 %5353
        %5355 = vmax.xlane.f32.xlu0 %v5333
        %v5356 = vpop.xlane.xlu0 %5355
        %5357 = vmax.xlane.f32.xlu0 %v5334
        %v5358 = vpop.xlane.xlu0 %5357
        %5359 = vmax.xlane.f32.xlu0 %v5335
        %v5360 = vpop.xlane.xlu0 %5359
        %5361 = vmax.xlane.f32.xlu0 %v5336
        %v5362 = vpop.xlane.xlu0 %5361
        %5363 = vmax.xlane.f32.xlu0 %v5337
        %v5364 = vpop.xlane.xlu0 %5363
        %5365 = vmax.xlane.f32.xlu0 %v5338
        %v5366 = vpop.xlane.xlu0 %5365
        %5367 = vmax.xlane.f32.xlu0 %v5339
        %v5368 = vpop.xlane.xlu0 %5367
        %5369 = vmax.xlane.f32.xlu0 %v5340
        %v5370 = vpop.xlane.xlu0 %5369
        %5371 = vmax.xlane.f32.xlu0 %v5341
        %v5372 = vpop.xlane.xlu0 %5371
        %5373 = vmax.xlane.f32.xlu0 %v5342
        %v5374 = vpop.xlane.xlu0 %5373
        %v5375 = vsub.f32 %v5327, %v5344
        %v5376 = vsub.f32 %v5328, %v5346
        %v5377 = vsub.f32 %v5329, %v5348
        %v5378 = vsub.f32 %v5330, %v5350
        %v5379 = vsub.f32 %v5331, %v5352
        %v5380 = vsub.f32 %v5332, %v5354
        %v5381 = vsub.f32 %v5333, %v5356
        %v5382 = vsub.f32 %v5334, %v5358
        %v5383 = vsub.f32 %v5335, %v5360
        %v5384 = vsub.f32 %v5336, %v5362
        %v5385 = vsub.f32 %v5337, %v5364
        %v5386 = vsub.f32 %v5338, %v5366
        %v5387 = vsub.f32 %v5339, %v5368
        %v5388 = vsub.f32 %v5340, %v5370
        %v5389 = vsub.f32 %v5341, %v5372
        %v5390 = vsub.f32 %v5342, %v5374
        %v5391 = vmul.f32 %v5375, 1.442695
        %v5392 = vpow.pop %v5391
        %v5393 = vmul.f32 %v5376, 1.442695
        %v5394 = vpow.pop %v5393
        %v5395 = vmul.f32 %v5377, 1.442695
        %v5396 = vpow.pop %v5395
        %v5397 = vmul.f32 %v5378, 1.442695
        %v5398 = vpow.pop %v5397
        %v5399 = vmul.f32 %v5379, 1.442695
        %v5400 = vpow.pop %v5399
        %v5401 = vmul.f32 %v5380, 1.442695
        %v5402 = vpow.pop %v5401
        %v5403 = vmul.f32 %v5381, 1.442695
        %v5404 = vpow.pop %v5403
        %v5405 = vmul.f32 %v5382, 1.442695
        %v5406 = vpow.pop %v5405
        %v5407 = vmul.f32 %v5383, 1.442695
        %v5408 = vpow.pop %v5407
        %v5409 = vmul.f32 %v5384, 1.442695
        %v5410 = vpow.pop %v5409
        %v5411 = vmul.f32 %v5385, 1.442695
        %v5412 = vpow.pop %v5411
        %v5413 = vmul.f32 %v5386, 1.442695
        %v5414 = vpow.pop %v5413
        %v5415 = vmul.f32 %v5387, 1.442695
        %v5416 = vpow.pop %v5415
        %v5417 = vmul.f32 %v5388, 1.442695
        %v5418 = vpow.pop %v5417
        %v5419 = vmul.f32 %v5389, 1.442695
        %v5420 = vpow.pop %v5419
        %v5421 = vmul.f32 %v5390, 1.442695
        %v5422 = vpow.pop %v5421
        %5423 = vadd.xlane.f32.xlu0 %v5392
        %v5424 = vpop.xlane.xlu0 %5423
        %5425 = vadd.xlane.f32.xlu0 %v5394
        %v5426 = vpop.xlane.xlu0 %5425
        %5427 = vadd.xlane.f32.xlu0 %v5396
        %v5428 = vpop.xlane.xlu0 %5427
        %5429 = vadd.xlane.f32.xlu0 %v5398
        %v5430 = vpop.xlane.xlu0 %5429
        %5431 = vadd.xlane.f32.xlu0 %v5400
        %v5432 = vpop.xlane.xlu0 %5431
        %5433 = vadd.xlane.f32.xlu0 %v5402
        %v5434 = vpop.xlane.xlu0 %5433
        %5435 = vadd.xlane.f32.xlu0 %v5404
        %v5436 = vpop.xlane.xlu0 %5435
        %5437 = vadd.xlane.f32.xlu0 %v5406
        %v5438 = vpop.xlane.xlu0 %5437
        %5439 = vadd.xlane.f32.xlu0 %v5408
        %v5440 = vpop.xlane.xlu0 %5439
        %5441 = vadd.xlane.f32.xlu0 %v5410
        %v5442 = vpop.xlane.xlu0 %5441
        %5443 = vadd.xlane.f32.xlu0 %v5412
        %v5444 = vpop.xlane.xlu0 %5443
        %5445 = vadd.xlane.f32.xlu0 %v5414
        %v5446 = vpop.xlane.xlu0 %5445
        %5447 = vadd.xlane.f32.xlu0 %v5416
        %v5448 = vpop.xlane.xlu0 %5447
        %5449 = vadd.xlane.f32.xlu0 %v5418
        %v5450 = vpop.xlane.xlu0 %5449
        %5451 = vadd.xlane.f32.xlu0 %v5420
        %v5452 = vpop.xlane.xlu0 %5451
        %5453 = vadd.xlane.f32.xlu0 %v5422
        %v5454 = vpop.xlane.xlu0 %5453
        %v5455 = vrcp.pop %v5424
        %v5456 = vrcp.pop %v5426
        %v5457 = vrcp.pop %v5428
        %v5458 = vrcp.pop %v5430
        %v5459 = vrcp.pop %v5432
        %v5460 = vrcp.pop %v5434
        %v5461 = vrcp.pop %v5436
        %v5462 = vrcp.pop %v5438
        %v5463 = vrcp.pop %v5440
        %v5464 = vrcp.pop %v5442
        %v5465 = vrcp.pop %v5444
        %v5466 = vrcp.pop %v5446
        %v5467 = vrcp.pop %v5448
        %v5468 = vrcp.pop %v5450
        %v5469 = vrcp.pop %v5452
        %v5470 = vrcp.pop %v5454
        %v5471 = vmul.f32 %v5392, %v5455
        %v5472 = vmul.f32 %v5394, %v5456
        %v5473 = vmul.f32 %v5396, %v5457
        %v5474 = vmul.f32 %v5398, %v5458
        %v5475 = vmul.f32 %v5400, %v5459
        %v5476 = vmul.f32 %v5402, %v5460
        %v5477 = vmul.f32 %v5404, %v5461
        %v5478 = vmul.f32 %v5406, %v5462
        %v5479 = vmul.f32 %v5408, %v5463
        %v5480 = vmul.f32 %v5410, %v5464
        %v5481 = vmul.f32 %v5412, %v5465
        %v5482 = vmul.f32 %v5414, %v5466
        %v5483 = vmul.f32 %v5416, %v5467
        %v5484 = vmul.f32 %v5418, %v5468
        %v5485 = vmul.f32 %v5420, %v5469
        %v5486 = vmul.f32 %v5422, %v5470
        %v5487 = vpack.c.bf16 %v5472, %v5471
        %v5488 = vpack.c.bf16 %v5474, %v5473
        %v5489 = vpack.c.bf16 %v5476, %v5475
        %v5490 = vpack.c.bf16 %v5478, %v5477
        %v5491 = vpack.c.bf16 %v5480, %v5479
        %v5492 = vpack.c.bf16 %v5482, %v5481
        %v5493 = vpack.c.bf16 %v5484, %v5483
        %v5494 = vpack.c.bf16 %v5486, %v5485
        %5495 = vmatprep.subr.bf16.mxu0 0
        %5496 = vmatpush1.bf16.xpose.msra.mxu0 %v5494
        %5497 = vmatprep.subr.bf16.mxu0 0
        %5498 = vmatpush1.bf16.xpose.msra.mxu0 %v5493
        %5499 = vmatprep.subr.bf16.mxu0 0
        %5500 = vmatpush1.bf16.xpose.msra.mxu0 %v5492
        %5501 = vmatprep.subr.bf16.mxu0 0
        %5502 = vmatpush1.bf16.xpose.msra.mxu0 %v5491
        %5503 = vmatprep.subr.bf16.mxu0 0
        %5504 = vmatpush1.bf16.xpose.msra.mxu0 %v5490
        %5505 = vmatprep.subr.bf16.mxu0 0
        %5506 = vmatpush1.bf16.xpose.msra.mxu0 %v5489
        %5507 = vmatprep.subr.bf16.mxu0 0
        %5508 = vmatpush1.bf16.xpose.msra.mxu0 %v5488
        %5509 = vmatprep.subr.bf16.mxu0 0
        %5510 = vmatpush1.bf16.xpose.msra.mxu0 %v5487
        %5511 = vmatprep.subr.bf16.mxu0 0
        %5512 = vmatpush2.bf16.xpose.msra.mxu0 0
        %5513 = vmatprep.subr.bf16.mxu0 0
        %5514 = vmatpush2.bf16.xpose.msra.mxu0 0
        %5515 = vmatprep.subr.bf16.mxu0 0
        %5516 = vmatpush2.bf16.xpose.msra.mxu0 0
        %5517 = vmatprep.subr.bf16.mxu0 0
        %5518 = vmatpush2.bf16.xpose.msra.mxu0 0
        %5519 = vmatprep.subr.bf16.mxu0 0
        %5520 = vmatpush2.bf16.xpose.msra.mxu0 0
        %5521 = vmatprep.subr.bf16.mxu0 0
        %5522 = vmatpush2.bf16.xpose.msra.mxu0 0
        %5523 = vmatprep.subr.bf16.mxu0 0
        %5524 = vmatpush2.bf16.xpose.msra.mxu0 0
        %5525 = vmatprep.subr.bf16.mxu0 0
        %5526 = vmatpush2.bf16.xpose.msra.mxu0 0
        %5527 = vmatprep.mubr.bf16.mxu0 0
        %5528 = vmatmul.mubr.bf16.gmra.mxu0 %v1719
        %v5529 = vpop.f32.mrf.mxu0
        %v5530 = vadd.f32 0.0, %v5529
        %v5531 = vpop.f32.mrf.mxu0
        %v5532 = vpop.f32.mrf.mxu0
        %v5533 = vadd.f32 0.0, %v5532
        %v5534 = vpop.f32.mrf.mxu0
        %5535 = vmatprep.mubr.bf16.mxu0 0
        %5536 = vmatmul.mubr.bf16.gmra.mxu0 %v1722
        %v5537 = vpop.f32.mrf.mxu0
        %v5538 = vadd.f32 0.0, %v5537
        %v5539 = vpop.f32.mrf.mxu0
        %v5540 = vpop.f32.mrf.mxu0
        %v5541 = vadd.f32 0.0, %v5540
        %v5542 = vpop.f32.mrf.mxu0
        %5543 = vdwg.mxu0
        %v5544 = vadd.f32 %v4511, %v5530
        %v5545 = vadd.f32 %v4512, %v5533
        %v5546 = vadd.f32 %v4513, %v5538
        %v5547 = vadd.f32 %v4514, %v5541
        %v5548 = vadd.f32 %v5154, %v287
        %v5549 = vadd.f32 %v5158, %v287
        %v5550 = vadd.f32 %v5164, %v287
        %v5551 = vadd.f32 %v5168, %v287
        %v5552 = vadd.f32 %v5174, %v287
        %v5553 = vadd.f32 %v5178, %v287
        %v5554 = vadd.f32 %v5184, %v287
        %v5555 = vadd.f32 %v5188, %v287
        %v5556 = vadd.f32 %v5194, %v287
        %v5557 = vadd.f32 %v5198, %v287
        %v5558 = vadd.f32 %v5204, %v287
        %v5559 = vadd.f32 %v5208, %v287
        %v5560 = vadd.f32 %v5214, %v287
        %v5561 = vadd.f32 %v5218, %v287
        %v5562 = vadd.f32 %v5224, %v287
        %v5563 = vadd.f32 %v5228, %v287
        %5564 = vmax.xlane.f32.xlu0 %v5548
        %v5565 = vpop.xlane.xlu0 %5564
        %5566 = vmax.xlane.f32.xlu0 %v5549
        %v5567 = vpop.xlane.xlu0 %5566
        %5568 = vmax.xlane.f32.xlu0 %v5550
        %v5569 = vpop.xlane.xlu0 %5568
        %5570 = vmax.xlane.f32.xlu0 %v5551
        %v5571 = vpop.xlane.xlu0 %5570
        %5572 = vmax.xlane.f32.xlu0 %v5552
        %v5573 = vpop.xlane.xlu0 %5572
        %5574 = vmax.xlane.f32.xlu0 %v5553
        %v5575 = vpop.xlane.xlu0 %5574
        %5576 = vmax.xlane.f32.xlu0 %v5554
        %v5577 = vpop.xlane.xlu0 %5576
        %5578 = vmax.xlane.f32.xlu0 %v5555
        %v5579 = vpop.xlane.xlu0 %5578
        %5580 = vmax.xlane.f32.xlu0 %v5556
        %v5581 = vpop.xlane.xlu0 %5580
        %5582 = vmax.xlane.f32.xlu0 %v5557
        %v5583 = vpop.xlane.xlu0 %5582
        %5584 = vmax.xlane.f32.xlu0 %v5558
        %v5585 = vpop.xlane.xlu0 %5584
        %5586 = vmax.xlane.f32.xlu0 %v5559
        %v5587 = vpop.xlane.xlu0 %5586
        %5588 = vmax.xlane.f32.xlu0 %v5560
        %v5589 = vpop.xlane.xlu0 %5588
        %5590 = vmax.xlane.f32.xlu0 %v5561
        %v5591 = vpop.xlane.xlu0 %5590
        %5592 = vmax.xlane.f32.xlu0 %v5562
        %v5593 = vpop.xlane.xlu0 %5592
        %5594 = vmax.xlane.f32.xlu0 %v5563
        %v5595 = vpop.xlane.xlu0 %5594
        %v5596 = vsub.f32 %v5548, %v5565
        %v5597 = vsub.f32 %v5549, %v5567
        %v5598 = vsub.f32 %v5550, %v5569
        %v5599 = vsub.f32 %v5551, %v5571
        %v5600 = vsub.f32 %v5552, %v5573
        %v5601 = vsub.f32 %v5553, %v5575
        %v5602 = vsub.f32 %v5554, %v5577
        %v5603 = vsub.f32 %v5555, %v5579
        %v5604 = vsub.f32 %v5556, %v5581
        %v5605 = vsub.f32 %v5557, %v5583
        %v5606 = vsub.f32 %v5558, %v5585
        %v5607 = vsub.f32 %v5559, %v5587
        %v5608 = vsub.f32 %v5560, %v5589
        %v5609 = vsub.f32 %v5561, %v5591
        %v5610 = vsub.f32 %v5562, %v5593
        %v5611 = vsub.f32 %v5563, %v5595
        %v5612 = vmul.f32 %v5596, 1.442695
        %v5613 = vpow.pop %v5612
        %v5614 = vmul.f32 %v5597, 1.442695
        %v5615 = vpow.pop %v5614
        %v5616 = vmul.f32 %v5598, 1.442695
        %v5617 = vpow.pop %v5616
        %v5618 = vmul.f32 %v5599, 1.442695
        %v5619 = vpow.pop %v5618
        %v5620 = vmul.f32 %v5600, 1.442695
        %v5621 = vpow.pop %v5620
        %v5622 = vmul.f32 %v5601, 1.442695
        %v5623 = vpow.pop %v5622
        %v5624 = vmul.f32 %v5602, 1.442695
        %v5625 = vpow.pop %v5624
        %v5626 = vmul.f32 %v5603, 1.442695
        %v5627 = vpow.pop %v5626
        %v5628 = vmul.f32 %v5604, 1.442695
        %v5629 = vpow.pop %v5628
        %v5630 = vmul.f32 %v5605, 1.442695
        %v5631 = vpow.pop %v5630
        %v5632 = vmul.f32 %v5606, 1.442695
        %v5633 = vpow.pop %v5632
        %v5634 = vmul.f32 %v5607, 1.442695
        %v5635 = vpow.pop %v5634
        %v5636 = vmul.f32 %v5608, 1.442695
        %v5637 = vpow.pop %v5636
        %v5638 = vmul.f32 %v5609, 1.442695
        %v5639 = vpow.pop %v5638
        %v5640 = vmul.f32 %v5610, 1.442695
        %v5641 = vpow.pop %v5640
        %v5642 = vmul.f32 %v5611, 1.442695
        %v5643 = vpow.pop %v5642
        %5644 = vadd.xlane.f32.xlu0 %v5613
        %v5645 = vpop.xlane.xlu0 %5644
        %5646 = vadd.xlane.f32.xlu0 %v5615
        %v5647 = vpop.xlane.xlu0 %5646
        %5648 = vadd.xlane.f32.xlu0 %v5617
        %v5649 = vpop.xlane.xlu0 %5648
        %5650 = vadd.xlane.f32.xlu0 %v5619
        %v5651 = vpop.xlane.xlu0 %5650
        %5652 = vadd.xlane.f32.xlu0 %v5621
        %v5653 = vpop.xlane.xlu0 %5652
        %5654 = vadd.xlane.f32.xlu0 %v5623
        %v5655 = vpop.xlane.xlu0 %5654
        %5656 = vadd.xlane.f32.xlu0 %v5625
        %v5657 = vpop.xlane.xlu0 %5656
        %5658 = vadd.xlane.f32.xlu0 %v5627
        %v5659 = vpop.xlane.xlu0 %5658
        %5660 = vadd.xlane.f32.xlu0 %v5629
        %v5661 = vpop.xlane.xlu0 %5660
        %5662 = vadd.xlane.f32.xlu0 %v5631
        %v5663 = vpop.xlane.xlu0 %5662
        %5664 = vadd.xlane.f32.xlu0 %v5633
        %v5665 = vpop.xlane.xlu0 %5664
        %5666 = vadd.xlane.f32.xlu0 %v5635
        %v5667 = vpop.xlane.xlu0 %5666
        %5668 = vadd.xlane.f32.xlu0 %v5637
        %v5669 = vpop.xlane.xlu0 %5668
        %5670 = vadd.xlane.f32.xlu0 %v5639
        %v5671 = vpop.xlane.xlu0 %5670
        %5672 = vadd.xlane.f32.xlu0 %v5641
        %v5673 = vpop.xlane.xlu0 %5672
        %5674 = vadd.xlane.f32.xlu0 %v5643
        %v5675 = vpop.xlane.xlu0 %5674
        %v5676 = vrcp.pop %v5645
        %v5677 = vrcp.pop %v5647
        %v5678 = vrcp.pop %v5649
        %v5679 = vrcp.pop %v5651
        %v5680 = vrcp.pop %v5653
        %v5681 = vrcp.pop %v5655
        %v5682 = vrcp.pop %v5657
        %v5683 = vrcp.pop %v5659
        %v5684 = vrcp.pop %v5661
        %v5685 = vrcp.pop %v5663
        %v5686 = vrcp.pop %v5665
        %v5687 = vrcp.pop %v5667
        %v5688 = vrcp.pop %v5669
        %v5689 = vrcp.pop %v5671
        %v5690 = vrcp.pop %v5673
        %v5691 = vrcp.pop %v5675
        %v5692 = vmul.f32 %v5613, %v5676
        %v5693 = vmul.f32 %v5615, %v5677
        %v5694 = vmul.f32 %v5617, %v5678
        %v5695 = vmul.f32 %v5619, %v5679
        %v5696 = vmul.f32 %v5621, %v5680
        %v5697 = vmul.f32 %v5623, %v5681
        %v5698 = vmul.f32 %v5625, %v5682
        %v5699 = vmul.f32 %v5627, %v5683
        %v5700 = vmul.f32 %v5629, %v5684
        %v5701 = vmul.f32 %v5631, %v5685
        %v5702 = vmul.f32 %v5633, %v5686
        %v5703 = vmul.f32 %v5635, %v5687
        %v5704 = vmul.f32 %v5637, %v5688
        %v5705 = vmul.f32 %v5639, %v5689
        %v5706 = vmul.f32 %v5641, %v5690
        %v5707 = vmul.f32 %v5643, %v5691
        %v5708 = vpack.c.bf16 %v5693, %v5692
        %v5709 = vpack.c.bf16 %v5695, %v5694
        %v5710 = vpack.c.bf16 %v5697, %v5696
        %v5711 = vpack.c.bf16 %v5699, %v5698
        %v5712 = vpack.c.bf16 %v5701, %v5700
        %v5713 = vpack.c.bf16 %v5703, %v5702
        %v5714 = vpack.c.bf16 %v5705, %v5704
        %v5715 = vpack.c.bf16 %v5707, %v5706
        %5716 = vmatprep.subr.bf16.mxu0 0
        %5717 = vmatpush1.bf16.xpose.msra.mxu0 %v5715
        %5718 = vmatprep.subr.bf16.mxu0 0
        %5719 = vmatpush1.bf16.xpose.msra.mxu0 %v5714
        %5720 = vmatprep.subr.bf16.mxu0 0
        %5721 = vmatpush1.bf16.xpose.msra.mxu0 %v5713
        %5722 = vmatprep.subr.bf16.mxu0 0
        %5723 = vmatpush1.bf16.xpose.msra.mxu0 %v5712
        %5724 = vmatprep.subr.bf16.mxu0 0
        %5725 = vmatpush1.bf16.xpose.msra.mxu0 %v5711
        %5726 = vmatprep.subr.bf16.mxu0 0
        %5727 = vmatpush1.bf16.xpose.msra.mxu0 %v5710
        %5728 = vmatprep.subr.bf16.mxu0 0
        %5729 = vmatpush1.bf16.xpose.msra.mxu0 %v5709
        %5730 = vmatprep.subr.bf16.mxu0 0
        %5731 = vmatpush1.bf16.xpose.msra.mxu0 %v5708
        %5732 = vmatprep.subr.bf16.mxu0 0
        %5733 = vmatpush2.bf16.xpose.msra.mxu0 0
        %5734 = vmatprep.subr.bf16.mxu0 0
        %5735 = vmatpush2.bf16.xpose.msra.mxu0 0
        %5736 = vmatprep.subr.bf16.mxu0 0
        %5737 = vmatpush2.bf16.xpose.msra.mxu0 0
        %5738 = vmatprep.subr.bf16.mxu0 0
        %5739 = vmatpush2.bf16.xpose.msra.mxu0 0
        %5740 = vmatprep.subr.bf16.mxu0 0
        %5741 = vmatpush2.bf16.xpose.msra.mxu0 0
        %5742 = vmatprep.subr.bf16.mxu0 0
        %5743 = vmatpush2.bf16.xpose.msra.mxu0 0
        %5744 = vmatprep.subr.bf16.mxu0 0
        %5745 = vmatpush2.bf16.xpose.msra.mxu0 0
        %5746 = vmatprep.subr.bf16.mxu0 0
        %5747 = vmatpush2.bf16.xpose.msra.mxu0 0
        %5748 = vmatprep.mubr.bf16.mxu0 0
        %5749 = vmatmul.mubr.bf16.gmra.mxu0 %v1720
        %v5750 = vpop.f32.mrf.mxu0
        %v5751 = vadd.f32 0.0, %v5750
        %v5752 = vpop.f32.mrf.mxu0
        %v5753 = vpop.f32.mrf.mxu0
        %v5754 = vadd.f32 0.0, %v5753
        %v5755 = vpop.f32.mrf.mxu0
        %5756 = vmatprep.mubr.bf16.mxu0 0
        %5757 = vmatmul.mubr.bf16.gmra.mxu0 %v1723
        %v5758 = vpop.f32.mrf.mxu0
        %v5759 = vadd.f32 0.0, %v5758
        %v5760 = vpop.f32.mrf.mxu0
        %v5761 = vpop.f32.mrf.mxu0
        %v5762 = vadd.f32 0.0, %v5761
        %v5763 = vpop.f32.mrf.mxu0
        %5764 = vdwg.mxu0
        %v5765 = vadd.f32 %v4732, %v5751
        %v5766 = vadd.f32 %v4733, %v5754
        %v5767 = vadd.f32 %v4734, %v5759
        %v5768 = vadd.f32 %v4735, %v5762
        %v5769 = vadd.f32 %v5265, %v287
        %v5770 = vadd.f32 %v5268, %v287
        %v5771 = vadd.f32 %v5273, %v287
        %v5772 = vadd.f32 %v5276, %v287
        %v5773 = vadd.f32 %v5281, %v287
        %v5774 = vadd.f32 %v5284, %v287
        %v5775 = vadd.f32 %v5289, %v287
        %v5776 = vadd.f32 %v5292, %v287
        %v5777 = vadd.f32 %v5297, %v287
        %v5778 = vadd.f32 %v5300, %v287
        %v5779 = vadd.f32 %v5305, %v287
        %v5780 = vadd.f32 %v5308, %v287
        %v5781 = vadd.f32 %v5313, %v287
        %v5782 = vadd.f32 %v5316, %v287
        %v5783 = vadd.f32 %v5321, %v287
        %v5784 = vadd.f32 %v5324, %v287
        %5785 = vmax.xlane.f32.xlu0 %v5769
        %v5786 = vpop.xlane.xlu0 %5785
        %5787 = vmax.xlane.f32.xlu0 %v5770
        %v5788 = vpop.xlane.xlu0 %5787
        %5789 = vmax.xlane.f32.xlu0 %v5771
        %v5790 = vpop.xlane.xlu0 %5789
        %5791 = vmax.xlane.f32.xlu0 %v5772
        %v5792 = vpop.xlane.xlu0 %5791
        %5793 = vmax.xlane.f32.xlu0 %v5773
        %v5794 = vpop.xlane.xlu0 %5793
        %5795 = vmax.xlane.f32.xlu0 %v5774
        %v5796 = vpop.xlane.xlu0 %5795
        %5797 = vmax.xlane.f32.xlu0 %v5775
        %v5798 = vpop.xlane.xlu0 %5797
        %5799 = vmax.xlane.f32.xlu0 %v5776
        %v5800 = vpop.xlane.xlu0 %5799
        %5801 = vmax.xlane.f32.xlu0 %v5777
        %v5802 = vpop.xlane.xlu0 %5801
        %5803 = vmax.xlane.f32.xlu0 %v5778
        %v5804 = vpop.xlane.xlu0 %5803
        %5805 = vmax.xlane.f32.xlu0 %v5779
        %v5806 = vpop.xlane.xlu0 %5805
        %5807 = vmax.xlane.f32.xlu0 %v5780
        %v5808 = vpop.xlane.xlu0 %5807
        %5809 = vmax.xlane.f32.xlu0 %v5781
        %v5810 = vpop.xlane.xlu0 %5809
        %5811 = vmax.xlane.f32.xlu0 %v5782
        %v5812 = vpop.xlane.xlu0 %5811
        %5813 = vmax.xlane.f32.xlu0 %v5783
        %v5814 = vpop.xlane.xlu0 %5813
        %5815 = vmax.xlane.f32.xlu0 %v5784
        %v5816 = vpop.xlane.xlu0 %5815
        %v5817 = vsub.f32 %v5769, %v5786
        %v5818 = vsub.f32 %v5770, %v5788
        %v5819 = vsub.f32 %v5771, %v5790
        %v5820 = vsub.f32 %v5772, %v5792
        %v5821 = vsub.f32 %v5773, %v5794
        %v5822 = vsub.f32 %v5774, %v5796
        %v5823 = vsub.f32 %v5775, %v5798
        %v5824 = vsub.f32 %v5776, %v5800
        %v5825 = vsub.f32 %v5777, %v5802
        %v5826 = vsub.f32 %v5778, %v5804
        %v5827 = vsub.f32 %v5779, %v5806
        %v5828 = vsub.f32 %v5780, %v5808
        %v5829 = vsub.f32 %v5781, %v5810
        %v5830 = vsub.f32 %v5782, %v5812
        %v5831 = vsub.f32 %v5783, %v5814
        %v5832 = vsub.f32 %v5784, %v5816
        %v5833 = vmul.f32 %v5817, 1.442695
        %v5834 = vpow.pop %v5833
        %v5835 = vmul.f32 %v5818, 1.442695
        %v5836 = vpow.pop %v5835
        %v5837 = vmul.f32 %v5819, 1.442695
        %v5838 = vpow.pop %v5837
        %v5839 = vmul.f32 %v5820, 1.442695
        %v5840 = vpow.pop %v5839
        %v5841 = vmul.f32 %v5821, 1.442695
        %v5842 = vpow.pop %v5841
        %v5843 = vmul.f32 %v5822, 1.442695
        %v5844 = vpow.pop %v5843
        %v5845 = vmul.f32 %v5823, 1.442695
        %v5846 = vpow.pop %v5845
        %v5847 = vmul.f32 %v5824, 1.442695
        %v5848 = vpow.pop %v5847
        %v5849 = vmul.f32 %v5825, 1.442695
        %v5850 = vpow.pop %v5849
        %v5851 = vmul.f32 %v5826, 1.442695
        %v5852 = vpow.pop %v5851
        %v5853 = vmul.f32 %v5827, 1.442695
        %v5854 = vpow.pop %v5853
        %v5855 = vmul.f32 %v5828, 1.442695
        %v5856 = vpow.pop %v5855
        %v5857 = vmul.f32 %v5829, 1.442695
        %v5858 = vpow.pop %v5857
        %v5859 = vmul.f32 %v5830, 1.442695
        %v5860 = vpow.pop %v5859
        %v5861 = vmul.f32 %v5831, 1.442695
        %v5862 = vpow.pop %v5861
        %v5863 = vmul.f32 %v5832, 1.442695
        %v5864 = vpow.pop %v5863
        %5865 = vadd.xlane.f32.xlu0 %v5834
        %v5866 = vpop.xlane.xlu0 %5865
        %5867 = vadd.xlane.f32.xlu0 %v5836
        %v5868 = vpop.xlane.xlu0 %5867
        %5869 = vadd.xlane.f32.xlu0 %v5838
        %v5870 = vpop.xlane.xlu0 %5869
        %5871 = vadd.xlane.f32.xlu0 %v5840
        %v5872 = vpop.xlane.xlu0 %5871
        %5873 = vadd.xlane.f32.xlu0 %v5842
        %v5874 = vpop.xlane.xlu0 %5873
        %5875 = vadd.xlane.f32.xlu0 %v5844
        %v5876 = vpop.xlane.xlu0 %5875
        %5877 = vadd.xlane.f32.xlu0 %v5846
        %v5878 = vpop.xlane.xlu0 %5877
        %5879 = vadd.xlane.f32.xlu0 %v5848
        %v5880 = vpop.xlane.xlu0 %5879
        %5881 = vadd.xlane.f32.xlu0 %v5850
        %v5882 = vpop.xlane.xlu0 %5881
        %5883 = vadd.xlane.f32.xlu0 %v5852
        %v5884 = vpop.xlane.xlu0 %5883
        %5885 = vadd.xlane.f32.xlu0 %v5854
        %v5886 = vpop.xlane.xlu0 %5885
        %5887 = vadd.xlane.f32.xlu0 %v5856
        %v5888 = vpop.xlane.xlu0 %5887
        %5889 = vadd.xlane.f32.xlu0 %v5858
        %v5890 = vpop.xlane.xlu0 %5889
        %5891 = vadd.xlane.f32.xlu0 %v5860
        %v5892 = vpop.xlane.xlu0 %5891
        %5893 = vadd.xlane.f32.xlu0 %v5862
        %v5894 = vpop.xlane.xlu0 %5893
        %5895 = vadd.xlane.f32.xlu0 %v5864
        %v5896 = vpop.xlane.xlu0 %5895
        %v5897 = vrcp.pop %v5866
        %v5898 = vrcp.pop %v5868
        %v5899 = vrcp.pop %v5870
        %v5900 = vrcp.pop %v5872
        %v5901 = vrcp.pop %v5874
        %v5902 = vrcp.pop %v5876
        %v5903 = vrcp.pop %v5878
        %v5904 = vrcp.pop %v5880
        %v5905 = vrcp.pop %v5882
        %v5906 = vrcp.pop %v5884
        %v5907 = vrcp.pop %v5886
        %v5908 = vrcp.pop %v5888
        %v5909 = vrcp.pop %v5890
        %v5910 = vrcp.pop %v5892
        %v5911 = vrcp.pop %v5894
        %v5912 = vrcp.pop %v5896
        %v5913 = vmul.f32 %v5834, %v5897
        %v5914 = vmul.f32 %v5836, %v5898
        %v5915 = vmul.f32 %v5838, %v5899
        %v5916 = vmul.f32 %v5840, %v5900
        %v5917 = vmul.f32 %v5842, %v5901
        %v5918 = vmul.f32 %v5844, %v5902
        %v5919 = vmul.f32 %v5846, %v5903
        %v5920 = vmul.f32 %v5848, %v5904
        %v5921 = vmul.f32 %v5850, %v5905
        %v5922 = vmul.f32 %v5852, %v5906
        %v5923 = vmul.f32 %v5854, %v5907
        %v5924 = vmul.f32 %v5856, %v5908
        %v5925 = vmul.f32 %v5858, %v5909
        %v5926 = vmul.f32 %v5860, %v5910
        %v5927 = vmul.f32 %v5862, %v5911
        %v5928 = vmul.f32 %v5864, %v5912
        %v5929 = vpack.c.bf16 %v5914, %v5913
        %v5930 = vpack.c.bf16 %v5916, %v5915
        %v5931 = vpack.c.bf16 %v5918, %v5917
        %v5932 = vpack.c.bf16 %v5920, %v5919
        %v5933 = vpack.c.bf16 %v5922, %v5921
        %v5934 = vpack.c.bf16 %v5924, %v5923
        %v5935 = vpack.c.bf16 %v5926, %v5925
        %v5936 = vpack.c.bf16 %v5928, %v5927
        %5937 = vmatprep.subr.bf16.mxu0 0
        %5938 = vmatpush1.bf16.xpose.msra.mxu0 %v5936
        %5939 = vmatprep.subr.bf16.mxu0 0
        %5940 = vmatpush1.bf16.xpose.msra.mxu0 %v5935
        %5941 = vmatprep.subr.bf16.mxu0 0
        %5942 = vmatpush1.bf16.xpose.msra.mxu0 %v5934
        %5943 = vmatprep.subr.bf16.mxu0 0
        %5944 = vmatpush1.bf16.xpose.msra.mxu0 %v5933
        %5945 = vmatprep.subr.bf16.mxu0 0
        %5946 = vmatpush1.bf16.xpose.msra.mxu0 %v5932
        %5947 = vmatprep.subr.bf16.mxu0 0
        %5948 = vmatpush1.bf16.xpose.msra.mxu0 %v5931
        %5949 = vmatprep.subr.bf16.mxu0 0
        %5950 = vmatpush1.bf16.xpose.msra.mxu0 %v5930
        %5951 = vmatprep.subr.bf16.mxu0 0
        %5952 = vmatpush1.bf16.xpose.msra.mxu0 %v5929
        %5953 = vmatprep.subr.bf16.mxu0 0
        %5954 = vmatpush2.bf16.xpose.msra.mxu0 0
        %5955 = vmatprep.subr.bf16.mxu0 0
        %5956 = vmatpush2.bf16.xpose.msra.mxu0 0
        %5957 = vmatprep.subr.bf16.mxu0 0
        %5958 = vmatpush2.bf16.xpose.msra.mxu0 0
        %5959 = vmatprep.subr.bf16.mxu0 0
        %5960 = vmatpush2.bf16.xpose.msra.mxu0 0
        %5961 = vmatprep.subr.bf16.mxu0 0
        %5962 = vmatpush2.bf16.xpose.msra.mxu0 0
        %5963 = vmatprep.subr.bf16.mxu0 0
        %5964 = vmatpush2.bf16.xpose.msra.mxu0 0
        %5965 = vmatprep.subr.bf16.mxu0 0
        %5966 = vmatpush2.bf16.xpose.msra.mxu0 0
        %5967 = vmatprep.subr.bf16.mxu0 0
        %5968 = vmatpush2.bf16.xpose.msra.mxu0 0
        %5969 = vmatprep.mubr.bf16.mxu0 0
        %5970 = vmatmul.mubr.bf16.gmra.mxu0 %v1721
        %v5971 = vpop.f32.mrf.mxu0
        %v5972 = vadd.f32 0.0, %v5971
        %v5973 = vpop.f32.mrf.mxu0
        %v5974 = vpop.f32.mrf.mxu0
        %v5975 = vadd.f32 0.0, %v5974
        %v5976 = vpop.f32.mrf.mxu0
        %5977 = vmatprep.mubr.bf16.mxu0 0
        %5978 = vmatmul.mubr.bf16.gmra.mxu0 %v1724
        %v5979 = vpop.f32.mrf.mxu0
        %v5980 = vadd.f32 0.0, %v5979
        %v5981 = vpop.f32.mrf.mxu0
        %v5982 = vpop.f32.mrf.mxu0
        %v5983 = vadd.f32 0.0, %v5982
        %v5984 = vpop.f32.mrf.mxu0
        %5985 = vdwg.mxu0
        %v5986 = vadd.f32 %v4953, %v5972
        %v5987 = vadd.f32 %v4954, %v5975
        %v5988 = vadd.f32 %v4955, %v5980
        %v5989 = vadd.f32 %v4956, %v5983
        %5990 = vst [vmem:[%s217] sm:$0xff] %v5544
        %5991 = vst [vmem:[%s217 + $0x8] sm:$0xff] %v5545
        %5992 = vst [vmem:[%s217 + $0x10] sm:$0xff] %v5546
        %5993 = vst [vmem:[%s217 + $0x18] sm:$0xff] %v5547
        %s5994 = scalar_lea.vmem %s217, 32 [#allocation2]
        %5995 = vst [vmem:[%s5994] sm:$0xff] %v5765
        %5996 = vst [vmem:[%s5994 + $0x8] sm:$0xff] %v5766
        %5997 = vst [vmem:[%s5994 + $0x10] sm:$0xff] %v5767
        %5998 = vst [vmem:[%s5994 + $0x18] sm:$0xff] %v5768
        %s5999 = scalar_lea.vmem %s217, 64 [#allocation2]
        %6000 = vst [vmem:[%s5999] sm:$0xff] %v5986
        %6001 = vst [vmem:[%s5999 + $0x8] sm:$0xff] %v5987
        %6002 = vst [vmem:[%s5999 + $0x10] sm:$0xff] %v5988
        %6003 = vst [vmem:[%s5999 + $0x18] sm:$0xff] %v5989
        %s6004 = sand.u32 %s137, 1
        %s6005 = scalar_lea.sflag [#allocation3], %s6004
        %s6006 = sand.u32 %s137, 1
        %s6007 = smul.addr %s6006, 96
        %s6008 = scalar_lea.vmem [#allocation2], %s6007
        // Predicated region
        $region41: #{tpu_custom_call.1} parent=39 // pred_check
          %p6009 = pneg %p147
        $region42: #{tpu_custom_call.1} parent=39 // pred_check_branch
          %6011 = sbr.rel (%p6009) target = $region44
        $region43: #{tpu_custom_call.1} parent=39 // pred_region
          %s6013 = ssub.s32 1536, 1536
          %6014 = vsyncadd %s6005, %s6013
          %s6015 = smul.addr %s19, 12
          %s6016 = smul.addr %s6015, 128
          %s6017 = scalar_lea.hbm %s5, %s6016
          %s6018 = sshll.u32 %s6008, 4
          %s6019 = int_to_ptr.vmem [resolvable:$true] %s6018
          %6024 = dma.vmem_to_hbm [thread:$0]  %s6019, 1536, %s6017, %s6005, 128, 128, 8
        $region44: #{tpu_custom_call.1} parent=39 // pred_fallthru
          _
      $region40: #{tpu_custom_call.1} parent=5 // pred_fallthru
        _
      %p6025 = scmp.le.s32.totalorder 2, %s14
      // Predicated region
      $region45: #{tpu_custom_call.1} parent=5 // pred_check
        %p6026 = pneg %p6025
      $region46: #{tpu_custom_call.1} parent=5 // pred_check_branch
        %6028 = sbr.rel (%p6026) target = $region48
      $region47: #{tpu_custom_call.1} parent=5 // pred_region
        %s6029 = ssub.s32 %s14, 2
        // Predicated region
        $region49: #{tpu_custom_call.1} parent=47 // pred_check
          %p6030 = pneg %p153
        $region50: #{tpu_custom_call.1} parent=47 // pred_check_branch
          %6032 = sbr.rel (%p6030) target = $region52
        $region51: #{tpu_custom_call.1} parent=47 // pred_region
          %s6033 = sand.u32 %s138, 1
          %s6034 = scalar_lea.sflag [#allocation3], %s6033
          %s6035 = sand.u32 %s138, 1
          %s6036 = smul.addr %s6035, 96
          %s6037 = scalar_lea.vmem [#allocation2], %s6036
          %6038 = dma.done %s6034, 1536
        $region52: #{tpu_custom_call.1} parent=47 // pred_fallthru
          _
      $region48: #{tpu_custom_call.1} parent=5 // pred_fallthru
        _
    $region6: #{tpu_custom_call.1} parent=1 // loop_footer
      %s18 = sadd.s32 1, %s14
    $region7: #{tpu_custom_call.1} parent=1 // loop_footer_branch
      %13 = sbr.rel target = $region3
    $region8: #{tpu_custom_call.1} parent=1 // loop_exit
      _
    %6039 = vsyncpa [#allocation3], 1
    %s6040 = scalar_lea.sflag [#allocation3], 1
    %6041 = vsyncpa %s6040, 1

</llo_original>
